<compile_context>
chip_gen: v5e
topology: v5e:2x2
jax: 0.10.0
libtpu: 0.0.40
codegen_flags: <defaults>
</compile_context>

<pallas_src>
import functools

import jax
import jax.numpy as jnp
from jax.experimental import pallas as pl
from jax.experimental.pallas import tpu as pltpu


def _round_up(v, m):
    return ((v + m - 1) // m) * m


def _layernorm(h, gamma, beta, eps=1e-5):
    mean = jnp.mean(h, axis=-1, keepdims=True)
    var = jnp.mean(jnp.square(h - mean), axis=-1, keepdims=True)
    return (h - mean) * jax.lax.rsqrt(var + eps) * gamma + beta


def _decoder_kernel(x_ref,
                    w_l1_ref, b_l1_ref, ln_g_ref, ln_b_ref,
                    pw_ref, pb_ref,
                    n1_g_ref, n1_b_ref,
                    s1_ref, s2_ref,
                    out_ref,
                    *, d_out, d_w1, d_w2, off_w2, off_b, compute_dtype):
    f32 = jnp.float32
    x = x_ref[...].astype(f32)                                   # (TN, d_in)
    xc = x.astype(compute_dtype)

    # ---- MLPEND layer1 + layernorm + relu ----
    h = jnp.dot(xc, w_l1_ref[...], preferred_element_type=f32) + b_l1_ref[...]
    h = _layernorm(h, ln_g_ref[...], ln_b_ref[...])
    h = jnp.maximum(h, 0.0)

    # ---- layer2 fused into the wide dynamic projection (single K = 2*d_in matmul) ----
    hx = jnp.concatenate([h.astype(compute_dtype), xc], axis=-1)   # (TN, 2*d_in)
    proj = (jnp.dot(hx, pw_ref[...], preferred_element_type=f32)
            + pb_ref[...])                                         # (TN, P), f32

    w1_flat = proj[:, :d_w1]                                       # (TN, d_out*d_in)
    w2_flat = proj[:, off_w2:off_w2 + d_w2]                        # (TN, d_out*d_out)
    b1 = proj[:, off_b:off_b + d_out]                              # (TN, d_out)
    b2 = proj[:, off_b + d_out:off_b + 2 * d_out]                  # (TN, d_out)

    # ---- bmm(W_1, x): out1[n,o] = sum_i W1_flat[n, o*d_in + i] * x[n, i] ----
    x_tiled = jnp.tile(x, (1, d_out))                              # lane copy, no MXU
    out1 = jnp.dot((w1_flat * x_tiled).astype(compute_dtype), s1_ref[...],
                   preferred_element_type=f32) + b1
    out1 = _layernorm(out1, n1_g_ref[...], n1_b_ref[...])
    out1 = jnp.maximum(out1, 0.0)

    # ---- bmm(W_2, out1) ----
    h_tiled = jnp.tile(out1, (1, d_out))
    out2 = jnp.dot((w2_flat * h_tiled).astype(compute_dtype), s2_ref[...],
                   preferred_element_type=f32) + b2

    out_ref[...] = out2.astype(out_ref.dtype)


def init_params(key, d_in, d_out, dtype=jnp.float32):
    """Deterministic synthetic parameters (torch Linear convention: W is (out, in))."""
    ks = jax.random.split(key, 6)

    def lin(k, i, o, scale=0.1):
        kw, kb = jax.random.split(k)
        return (scale * jax.random.normal(kw, (o, i), dtype),
                scale * jax.random.normal(kb, (o,), dtype))

    p = {}
    p['mlp_l1_w'], p['mlp_l1_b'] = lin(ks[0], d_in, d_in)
    p['mlp_ln_g'] = jnp.ones((d_in,), dtype)
    p['mlp_ln_b'] = jnp.zeros((d_in,), dtype)
    p['mlp_l2_w'], p['mlp_l2_b'] = lin(ks[1], 2 * d_in, d_in)     # residual=True
    p['wl1_w'], p['wl1_b'] = lin(ks[2], d_in, d_in * d_out)       # weight_layer1
    p['b1_w'], p['b1_b'] = lin(ks[3], d_in, d_out)                # bias1
    p['wl2_w'], p['wl2_b'] = lin(ks[4], d_in, d_out * d_out)      # weight_layer2
    p['b2_w'], p['b2_b'] = lin(ks[5], d_in, d_out)                # bias2
    p['n1_g'] = jnp.ones((d_out,), dtype)
    p['n1_b'] = jnp.zeros((d_out,), dtype)
    return p


def dynamic_trajectory_decoder(x, params, *, block_n=None,
                               compute_dtype=jnp.bfloat16, interpret=False):
    N, d_in = x.shape
    d_out = params['n1_g'].shape[0]
    out_dtype = x.dtype
    f32 = jnp.float32
    cdt = compute_dtype

    # Row tile: multiple of 8 (satisfies the (8,128) BlockSpec rule).  Default 1024 to
    # amortize per-step weight reloads, but always capped so the grid has >= 2 steps
    # (megacore sharding on v7x).  Per-tile f32 temporaries are ~10 KB/row, so 1024
    # rows stay under the default scoped VMEM on v5e/v6e/v7x.
    if block_n is None:
        block_n = 1024
    if N <= 8:
        block_n = N
    else:
        cap = max(8, (((N + 1) // 2) // 8) * 8)        # ~N/2 rounded down to 8
        block_n = min(block_n, cap)
        block_n = max(8, (block_n // 8) * 8)

    def row(v):
        return v.reshape(1, -1).astype(f32)

    # nn.Linear weights transposed to (in, out) so the kernel computes x @ W.
    w_l1 = params['mlp_l1_w'].T.astype(cdt)                        # (d_in, d_in)

    # ---- pack the four dynamic projections into one wide (d_in, P) weight ----
    # Layout (every segment start 128-aligned):
    #   [0 : d_w1]                  W1 flat   (d_out*d_in)
    #   [off_w2 : off_w2+d_w2]      W2 flat   (d_out*d_out)
    #   [off_b  : off_b+d_out]      b1
    #   [off_b+d_out : off_b+2*d_out]  b2      (b1/b2 share one 128-lane segment)
    d_w1 = d_in * d_out
    d_w2 = d_out * d_out
    off_w2 = _round_up(d_w1, 128)
    off_b = off_w2 + _round_up(d_w2, 128)
    P = off_b + _round_up(2 * d_out, 128)

    proj_w_base = jnp.zeros((d_in, P), f32)
    proj_w_base = proj_w_base.at[:, :d_w1].set(params['wl1_w'].T.astype(f32))
    proj_w_base = proj_w_base.at[:, off_w2:off_w2 + d_w2].set(params['wl2_w'].T.astype(f32))
    proj_w_base = proj_w_base.at[:, off_b:off_b + d_out].set(params['b1_w'].T.astype(f32))
    proj_w_base = proj_w_base.at[:, off_b + d_out:off_b + 2 * d_out].set(
        params['b2_w'].T.astype(f32))

    proj_b_base = jnp.zeros((1, P), f32)
    proj_b_base = proj_b_base.at[0, :d_w1].set(params['wl1_b'].astype(f32))
    proj_b_base = proj_b_base.at[0, off_w2:off_w2 + d_w2].set(params['wl2_b'].astype(f32))
    proj_b_base = proj_b_base.at[0, off_b:off_b + d_out].set(params['b1_b'].astype(f32))
    proj_b_base = proj_b_base.at[0, off_b + d_out:off_b + 2 * d_out].set(
        params['b2_b'].astype(f32))

    # ---- fuse MLPEND.layer2 into the projection (done in f32 on the host) ----
    # w_source = [h, x] @ W_l2^T + b_l2  and  proj = w_source @ proj_w_base + proj_b_base
    #   =>  proj = [h, x] @ (W_l2^T @ proj_w_base) + (b_l2 @ proj_w_base + proj_b_base)
    w_l2_T = params['mlp_l2_w'].T.astype(f32)                      # (2*d_in, d_in)
    pw = (w_l2_T @ proj_w_base).astype(cdt)                        # (2*d_in, P)
    pb = (params['mlp_l2_b'].astype(f32)[None, :] @ proj_w_base
          + proj_b_base)                                           # (1, P), f32

    # Constant 0/1 group-sum matrices:  S1[o*d_in + i, o] = 1,  S2[o*d_out + j, o] = 1.
    k1 = jnp.arange(d_w1)
    s1 = (k1[:, None] // d_in == jnp.arange(d_out)[None, :]).astype(cdt)
    k2 = jnp.arange(d_w2)
    s2 = (k2[:, None] // d_out == jnp.arange(d_out)[None, :]).astype(cdt)

    param_list = [
        w_l1, row(params['mlp_l1_b']), row(params['mlp_ln_g']), row(params['mlp_ln_b']),
        pw, pb,
        row(params['n1_g']), row(params['n1_b']),
        s1, s2,
    ]

    kernel = functools.partial(
        _decoder_kernel,
        d_out=d_out, d_w1=d_w1, d_w2=d_w2,
        off_w2=off_w2, off_b=off_b,
        compute_dtype=cdt)

    grid = (pl.cdiv(N, block_n),)
    in_specs = [pl.BlockSpec((block_n, d_in), lambda i: (i, 0))]
    in_specs += [pl.BlockSpec(p.shape, lambda i: (0, 0)) for p in param_list]
    out_spec = pl.BlockSpec((block_n, d_out), lambda i: (i, 0))

    return pl.pallas_call(
        kernel,
        out_shape=jax.ShapeDtypeStruct((N, d_out), out_dtype),
        grid=grid,
        in_specs=in_specs,
        out_specs=out_spec,
        compiler_params=pltpu.CompilerParams(dimension_semantics=("parallel",)),
        interpret=interpret,
    )(x, *param_list)


def reference(x, p):
    """Pure-JAX replica of the PyTorch forward pass (for verification)."""
    d_out = p['n1_g'].shape[0]
    d_in = x.shape[1]
    h = x @ p['mlp_l1_w'].T + p['mlp_l1_b']
    m = h.mean(-1, keepdims=True)
    v = ((h - m) ** 2).mean(-1, keepdims=True)
    h = (h - m) / jnp.sqrt(v + 1e-5) * p['mlp_ln_g'] + p['mlp_ln_b']
    h = jax.nn.relu(h)
    ws = jnp.concatenate([h, x], -1) @ p['mlp_l2_w'].T + p['mlp_l2_b']
    W1 = (ws @ p['wl1_w'].T + p['wl1_b']).reshape(-1, d_out, d_in)
    b1 = ws @ p['b1_w'].T + p['b1_b']
    W2 = (ws @ p['wl2_w'].T + p['wl2_b']).reshape(-1, d_out, d_out)
    b2 = ws @ p['b2_w'].T + p['b2_b']
    out = jnp.einsum('noi,ni->no', W1, x) + b1
    m = out.mean(-1, keepdims=True)
    v = ((out - m) ** 2).mean(-1, keepdims=True)
    out = (out - m) / jnp.sqrt(v + 1e-5) * p['n1_g'] + p['n1_b']
    out = jax.nn.relu(out)
    out = jnp.einsum('noj,nj->no', W2, out) + b2
    return out


if __name__ == "__main__":
    key = jax.random.PRNGKey(0)
    kx, kp = jax.random.split(key)
    N, D_in, D_out = 512, 32, 16
    x = jax.random.normal(kx, (N, D_in), jnp.float32)
    params = init_params(kp, D_in, D_out)
    ref = reference(x, params)

    # Exact path (f32 MXU operands) — tight check, multi-step grid (block_n=128 -> 4 steps).
    out_f32 = jax.block_until_ready(
        dynamic_trajectory_decoder(x, params, block_n=128, compute_dtype=jnp.float32))
    assert out_f32.shape == (N, D_out)
    err32 = float(jnp.max(jnp.abs(out_f32 - ref)))
    assert err32 < 5e-3, f"f32 max abs err {err32}"

    # Default fast path (bf16 MXU operands, f32 accumulation) — auto block_n (capped to
    # N/2 = 256 so the grid has 2 steps); looser numeric check.
    out_bf16 = jax.block_until_ready(dynamic_trajectory_decoder(x, params))
    assert out_bf16.shape == (N, D_out)
    assert bool(jnp.all(jnp.isfinite(out_bf16)))
    errbf = float(jnp.max(jnp.abs(out_bf16 - ref)))
    assert errbf < 1.5e-1, f"bf16 max abs err {errbf}"

    print("KERNEL_OK")
</pallas_src>

<mosaic_0001>
module attributes {stable_mosaic.version = 11 : i64} {
  func.func @_decoder_kernel(%arg0: i32, %arg1: memref<128x32xf32, #tpu.memory_space<vmem>>, %arg2: memref<32x32xf32, #tpu.memory_space<vmem>>, %arg3: memref<1x32xf32, #tpu.memory_space<vmem>>, %arg4: memref<1x32xf32, #tpu.memory_space<vmem>>, %arg5: memref<1x32xf32, #tpu.memory_space<vmem>>, %arg6: memref<64x896xf32, #tpu.memory_space<vmem>>, %arg7: memref<1x896xf32, #tpu.memory_space<vmem>>, %arg8: memref<1x16xf32, #tpu.memory_space<vmem>>, %arg9: memref<1x16xf32, #tpu.memory_space<vmem>>, %arg10: memref<512x16xf32, #tpu.memory_space<vmem>>, %arg11: memref<256x16xf32, #tpu.memory_space<vmem>>, %arg12: memref<128x16xf32, #tpu.memory_space<vmem>>) attributes {dimension_semantics = [#tpu.dimension_semantics<parallel>], iteration_bounds = array<i64: 4>, scalar_prefetch = 0 : i64, scratch_operands = 0 : i64, tpu.core_type = #tpu.core_type<tc>, window_params = [{transform_indices = @transform_0, window_bounds = array<i64: 128, 32>}, {pipeline_mode = #tpu.pipeline_mode<synchronous>, transform_indices = @transform_1, window_bounds = array<i64: 32, 32>}, {pipeline_mode = #tpu.pipeline_mode<synchronous>, transform_indices = @transform_2, window_bounds = array<i64: 1, 32>}, {pipeline_mode = #tpu.pipeline_mode<synchronous>, transform_indices = @transform_3, window_bounds = array<i64: 1, 32>}, {pipeline_mode = #tpu.pipeline_mode<synchronous>, transform_indices = @transform_4, window_bounds = array<i64: 1, 32>}, {pipeline_mode = #tpu.pipeline_mode<synchronous>, transform_indices = @transform_5, window_bounds = array<i64: 64, 896>}, {pipeline_mode = #tpu.pipeline_mode<synchronous>, transform_indices = @transform_6, window_bounds = array<i64: 1, 896>}, {pipeline_mode = #tpu.pipeline_mode<synchronous>, transform_indices = @transform_7, window_bounds = array<i64: 1, 16>}, {pipeline_mode = #tpu.pipeline_mode<synchronous>, transform_indices = @transform_8, window_bounds = array<i64: 1, 16>}, {pipeline_mode = #tpu.pipeline_mode<synchronous>, transform_indices = @transform_9, window_bounds = array<i64: 512, 16>}, {pipeline_mode = #tpu.pipeline_mode<synchronous>, transform_indices = @transform_10, window_bounds = array<i64: 256, 16>}, {transform_indices = @transform_11, window_bounds = array<i64: 128, 16>}]} {
    %c0 = arith.constant 0 : index
    %c0_0 = arith.constant 0 : index
    %0 = vector.load %arg1[%c0, %c0_0] : memref<128x32xf32, #tpu.memory_space<vmem>>, vector<128x32xf32>
    %c0_1 = arith.constant 0 : index
    %c0_2 = arith.constant 0 : index
    %1 = vector.load %arg2[%c0_1, %c0_2] : memref<32x32xf32, #tpu.memory_space<vmem>>, vector<32x32xf32>
    %cst = arith.constant dense<0.000000e+00> : vector<128x32xf32>
    %2 = tpu.matmul %0, %1, %cst {dimension_numbers = #tpu.dot_dimension_numbers<[1], [0], [0], [1], [0, 0, 1, 1], [], []>} : vector<128x32xf32>, vector<32x32xf32>, vector<128x32xf32> -> vector<128x32xf32>
    %c0_3 = arith.constant 0 : index
    %c0_4 = arith.constant 0 : index
    %3 = vector.load %arg3[%c0_3, %c0_4] : memref<1x32xf32, #tpu.memory_space<vmem>>, vector<1x32xf32>
    %4 = vector.broadcast %3 : vector<1x32xf32> to vector<128x32xf32>
    %5 = arith.addf %2, %4 : vector<128x32xf32>
    %c0_5 = arith.constant 0 : index
    %c0_6 = arith.constant 0 : index
    %6 = vector.load %arg4[%c0_5, %c0_6] : memref<1x32xf32, #tpu.memory_space<vmem>>, vector<1x32xf32>
    %c0_7 = arith.constant 0 : index
    %c0_8 = arith.constant 0 : index
    %7 = vector.load %arg5[%c0_7, %c0_8] : memref<1x32xf32, #tpu.memory_space<vmem>>, vector<1x32xf32>
    %cst_9 = arith.constant dense<0.000000e+00> : vector<128xf32>
    %8 = vector.multi_reduction <add>, %5, %cst_9 [1] : vector<128x32xf32> to vector<128xf32>
    %9 = vector.shape_cast %8 : vector<128xf32> to vector<128x1xf32>
    %cst_10 = arith.constant 3.200000e+01 : f32
    %10 = vector.broadcast %cst_10 : f32 to vector<128x1xf32>
    %11 = arith.divf %9, %10 : vector<128x1xf32>
    %12 = vector.broadcast %11 : vector<128x1xf32> to vector<128x32xf32>
    %13 = arith.subf %5, %12 : vector<128x32xf32>
    %14 = arith.mulf %13, %13 : vector<128x32xf32>
    %cst_11 = arith.constant dense<0.000000e+00> : vector<128xf32>
    %15 = vector.multi_reduction <add>, %14, %cst_11 [1] : vector<128x32xf32> to vector<128xf32>
    %16 = vector.shape_cast %15 : vector<128xf32> to vector<128x1xf32>
    %cst_12 = arith.constant 3.200000e+01 : f32
    %17 = vector.broadcast %cst_12 : f32 to vector<128x1xf32>
    %18 = arith.divf %16, %17 : vector<128x1xf32>
    %19 = vector.broadcast %11 : vector<128x1xf32> to vector<128x32xf32>
    %20 = arith.subf %5, %19 : vector<128x32xf32>
    %cst_13 = arith.constant 9.99999974E-6 : f32
    %21 = vector.broadcast %cst_13 : f32 to vector<128x1xf32>
    %22 = arith.addf %18, %21 : vector<128x1xf32>
    %23 = math.rsqrt %22 : vector<128x1xf32>
    %24 = vector.broadcast %23 : vector<128x1xf32> to vector<128x32xf32>
    %25 = arith.mulf %20, %24 : vector<128x32xf32>
    %26 = vector.broadcast %6 : vector<1x32xf32> to vector<128x32xf32>
    %27 = arith.mulf %25, %26 : vector<128x32xf32>
    %28 = vector.broadcast %7 : vector<1x32xf32> to vector<128x32xf32>
    %29 = arith.addf %27, %28 : vector<128x32xf32>
    %cst_14 = arith.constant 0.000000e+00 : f32
    %30 = vector.broadcast %cst_14 : f32 to vector<128x32xf32>
    %31 = arith.maximumf %29, %30 : vector<128x32xf32>
    %32 = tpu.concatenate %31, %0 in 1 : vector<128x32xf32>, vector<128x32xf32> -> vector<128x64xf32>
    %c0_15 = arith.constant 0 : index
    %c0_16 = arith.constant 0 : index
    %33 = vector.load %arg6[%c0_15, %c0_16] : memref<64x896xf32, #tpu.memory_space<vmem>>, vector<64x896xf32>
    %cst_17 = arith.constant dense<0.000000e+00> : vector<128x896xf32>
    %34 = tpu.matmul %32, %33, %cst_17 {dimension_numbers = #tpu.dot_dimension_numbers<[1], [0], [0], [1], [0, 0, 1, 1], [], []>} : vector<128x64xf32>, vector<64x896xf32>, vector<128x896xf32> -> vector<128x896xf32>
    %c0_18 = arith.constant 0 : index
    %c0_19 = arith.constant 0 : index
    %35 = vector.load %arg7[%c0_18, %c0_19] : memref<1x896xf32, #tpu.memory_space<vmem>>, vector<1x896xf32>
    %36 = vector.broadcast %35 : vector<1x896xf32> to vector<128x896xf32>
    %37 = arith.addf %34, %36 : vector<128x896xf32>
    %38 = vector.extract_strided_slice %37 {offsets = [0, 0], sizes = [128, 512], strides = [1, 1]} : vector<128x896xf32> to vector<128x512xf32>
    %39 = vector.extract_strided_slice %37 {offsets = [0, 512], sizes = [128, 256], strides = [1, 1]} : vector<128x896xf32> to vector<128x256xf32>
    %40 = vector.extract_strided_slice %37 {offsets = [0, 768], sizes = [128, 16], strides = [1, 1]} : vector<128x896xf32> to vector<128x16xf32>
    %41 = vector.extract_strided_slice %37 {offsets = [0, 784], sizes = [128, 16], strides = [1, 1]} : vector<128x896xf32> to vector<128x16xf32>
    %42 = tpu.concatenate %0, %0, %0, %0, %0, %0, %0, %0, %0, %0, %0, %0, %0, %0, %0, %0 in 1 : vector<128x32xf32>, vector<128x32xf32>, vector<128x32xf32>, vector<128x32xf32>, vector<128x32xf32>, vector<128x32xf32>, vector<128x32xf32>, vector<128x32xf32>, vector<128x32xf32>, vector<128x32xf32>, vector<128x32xf32>, vector<128x32xf32>, vector<128x32xf32>, vector<128x32xf32>, vector<128x32xf32>, vector<128x32xf32> -> vector<128x512xf32>
    %43 = arith.mulf %38, %42 : vector<128x512xf32>
    %c0_20 = arith.constant 0 : index
    %c0_21 = arith.constant 0 : index
    %44 = vector.load %arg10[%c0_20, %c0_21] : memref<512x16xf32, #tpu.memory_space<vmem>>, vector<512x16xf32>
    %cst_22 = arith.constant dense<0.000000e+00> : vector<128x16xf32>
    %45 = tpu.matmul %43, %44, %cst_22 {dimension_numbers = #tpu.dot_dimension_numbers<[1], [0], [0], [1], [0, 0, 1, 1], [], []>} : vector<128x512xf32>, vector<512x16xf32>, vector<128x16xf32> -> vector<128x16xf32>
    %46 = arith.addf %45, %40 : vector<128x16xf32>
    %c0_23 = arith.constant 0 : index
    %c0_24 = arith.constant 0 : index
    %47 = vector.load %arg8[%c0_23, %c0_24] : memref<1x16xf32, #tpu.memory_space<vmem>>, vector<1x16xf32>
    %c0_25 = arith.constant 0 : index
    %c0_26 = arith.constant 0 : index
    %48 = vector.load %arg9[%c0_25, %c0_26] : memref<1x16xf32, #tpu.memory_space<vmem>>, vector<1x16xf32>
    %cst_27 = arith.constant dense<0.000000e+00> : vector<128xf32>
    %49 = vector.multi_reduction <add>, %46, %cst_27 [1] : vector<128x16xf32> to vector<128xf32>
    %50 = vector.shape_cast %49 : vector<128xf32> to vector<128x1xf32>
    %cst_28 = arith.constant 1.600000e+01 : f32
    %51 = vector.broadcast %cst_28 : f32 to vector<128x1xf32>
    %52 = arith.divf %50, %51 : vector<128x1xf32>
    %53 = vector.broadcast %52 : vector<128x1xf32> to vector<128x16xf32>
    %54 = arith.subf %46, %53 : vector<128x16xf32>
    %55 = arith.mulf %54, %54 : vector<128x16xf32>
    %cst_29 = arith.constant dense<0.000000e+00> : vector<128xf32>
    %56 = vector.multi_reduction <add>, %55, %cst_29 [1] : vector<128x16xf32> to vector<128xf32>
    %57 = vector.shape_cast %56 : vector<128xf32> to vector<128x1xf32>
    %cst_30 = arith.constant 1.600000e+01 : f32
    %58 = vector.broadcast %cst_30 : f32 to vector<128x1xf32>
    %59 = arith.divf %57, %58 : vector<128x1xf32>
    %60 = vector.broadcast %52 : vector<128x1xf32> to vector<128x16xf32>
    %61 = arith.subf %46, %60 : vector<128x16xf32>
    %cst_31 = arith.constant 9.99999974E-6 : f32
    %62 = vector.broadcast %cst_31 : f32 to vector<128x1xf32>
    %63 = arith.addf %59, %62 : vector<128x1xf32>
    %64 = math.rsqrt %63 : vector<128x1xf32>
    %65 = vector.broadcast %64 : vector<128x1xf32> to vector<128x16xf32>
    %66 = arith.mulf %61, %65 : vector<128x16xf32>
    %67 = vector.broadcast %47 : vector<1x16xf32> to vector<128x16xf32>
    %68 = arith.mulf %66, %67 : vector<128x16xf32>
    %69 = vector.broadcast %48 : vector<1x16xf32> to vector<128x16xf32>
    %70 = arith.addf %68, %69 : vector<128x16xf32>
    %cst_32 = arith.constant 0.000000e+00 : f32
    %71 = vector.broadcast %cst_32 : f32 to vector<128x16xf32>
    %72 = arith.maximumf %70, %71 : vector<128x16xf32>
    %73 = tpu.concatenate %72, %72, %72, %72, %72, %72, %72, %72, %72, %72, %72, %72, %72, %72, %72, %72 in 1 : vector<128x16xf32>, vector<128x16xf32>, vector<128x16xf32>, vector<128x16xf32>, vector<128x16xf32>, vector<128x16xf32>, vector<128x16xf32>, vector<128x16xf32>, vector<128x16xf32>, vector<128x16xf32>, vector<128x16xf32>, vector<128x16xf32>, vector<128x16xf32>, vector<128x16xf32>, vector<128x16xf32>, vector<128x16xf32> -> vector<128x256xf32>
    %74 = arith.mulf %39, %73 : vector<128x256xf32>
    %c0_33 = arith.constant 0 : index
    %c0_34 = arith.constant 0 : index
    %75 = vector.load %arg11[%c0_33, %c0_34] : memref<256x16xf32, #tpu.memory_space<vmem>>, vector<256x16xf32>
    %cst_35 = arith.constant dense<0.000000e+00> : vector<128x16xf32>
    %76 = tpu.matmul %74, %75, %cst_35 {dimension_numbers = #tpu.dot_dimension_numbers<[1], [0], [0], [1], [0, 0, 1, 1], [], []>} : vector<128x256xf32>, vector<256x16xf32>, vector<128x16xf32> -> vector<128x16xf32>
    %77 = arith.addf %76, %41 : vector<128x16xf32>
    %c0_36 = arith.constant 0 : index
    %c0_37 = arith.constant 0 : index
    %78 = vector.load %arg12[%c0_36, %c0_37] : memref<128x16xf32, #tpu.memory_space<vmem>>, vector<128x16xf32>
    tpu.vector_store %arg12[%c0_36, %c0_37], %77 {strides = array<i32>} : memref<128x16xf32, #tpu.memory_space<vmem>>, vector<128x16xf32>,
    return
  }
  func.func @transform_0(%arg0: i32) -> (i32, i32) {
    %c0_i32 = arith.constant 0 : i32
    %c0_i32_0 = arith.constant 0 : i32
    return %arg0, %c0_i32 : i32, i32
  }
  func.func @transform_1(%arg0: i32) -> (i32, i32) {
    %c0_i32 = arith.constant 0 : i32
    %c0_i32_0 = arith.constant 0 : i32
    %c0_i32_1 = arith.constant 0 : i32
    return %c0_i32, %c0_i32_0 : i32, i32
  }
  func.func @transform_2(%arg0: i32) -> (i32, i32) {
    %c0_i32 = arith.constant 0 : i32
    %c0_i32_0 = arith.constant 0 : i32
    %c0_i32_1 = arith.constant 0 : i32
    return %c0_i32, %c0_i32_0 : i32, i32
  }
  func.func @transform_3(%arg0: i32) -> (i32, i32) {
    %c0_i32 = arith.constant 0 : i32
    %c0_i32_0 = arith.constant 0 : i32
    %c0_i32_1 = arith.constant 0 : i32
    return %c0_i32, %c0_i32_0 : i32, i32
  }
  func.func @transform_4(%arg0: i32) -> (i32, i32) {
    %c0_i32 = arith.constant 0 : i32
    %c0_i32_0 = arith.constant 0 : i32
    %c0_i32_1 = arith.constant 0 : i32
    return %c0_i32, %c0_i32_0 : i32, i32
  }
  func.func @transform_5(%arg0: i32) -> (i32, i32) {
    %c0_i32 = arith.constant 0 : i32
    %c0_i32_0 = arith.constant 0 : i32
    %c0_i32_1 = arith.constant 0 : i32
    return %c0_i32, %c0_i32_0 : i32, i32
  }
  func.func @transform_6(%arg0: i32) -> (i32, i32) {
    %c0_i32 = arith.constant 0 : i32
    %c0_i32_0 = arith.constant 0 : i32
    %c0_i32_1 = arith.constant 0 : i32
    return %c0_i32, %c0_i32_0 : i32, i32
  }
  func.func @transform_7(%arg0: i32) -> (i32, i32) {
    %c0_i32 = arith.constant 0 : i32
    %c0_i32_0 = arith.constant 0 : i32
    %c0_i32_1 = arith.constant 0 : i32
    return %c0_i32, %c0_i32_0 : i32, i32
  }
  func.func @transform_8(%arg0: i32) -> (i32, i32) {
    %c0_i32 = arith.constant 0 : i32
    %c0_i32_0 = arith.constant 0 : i32
    %c0_i32_1 = arith.constant 0 : i32
    return %c0_i32, %c0_i32_0 : i32, i32
  }
  func.func @transform_9(%arg0: i32) -> (i32, i32) {
    %c0_i32 = arith.constant 0 : i32
    %c0_i32_0 = arith.constant 0 : i32
    %c0_i32_1 = arith.constant 0 : i32
    return %c0_i32, %c0_i32_0 : i32, i32
  }
  func.func @transform_10(%arg0: i32) -> (i32, i32) {
    %c0_i32 = arith.constant 0 : i32
    %c0_i32_0 = arith.constant 0 : i32
    %c0_i32_1 = arith.constant 0 : i32
    return %c0_i32, %c0_i32_0 : i32, i32
  }
  func.func @transform_11(%arg0: i32) -> (i32, i32) {
    %c0_i32 = arith.constant 0 : i32
    %c0_i32_0 = arith.constant 0 : i32
    return %arg0, %c0_i32 : i32, i32
  }
}

</mosaic_0001>

<llo_original>
// kernel: tpu_custom_call.1
$region0: #{tpu_custom_call.1}
  #allocation0 [shape = 'u32[]', space=smem, size = 0x4, offset = 0x4, fixed_abs, tag = 'smem constant byte address 0x4 - core index']
  #allocation1 [shape = 'u32[72,128]{1,0:T(1,128)}', space=vmem, size = 0x9000, scoped, tag = 'internal scratch']
  %s0 = inlined_call_operand.vmem [shape: f32[512,32], index: 0, kind: input, shape index: {}]
  %s1 = inlined_call_operand.vmem [shape: f32[32,32], index: 1, kind: input, shape index: {}]
  %s2 = inlined_call_operand.vmem [shape: f32[1,32], index: 2, kind: input, shape index: {}]
  %s3 = inlined_call_operand.vmem [shape: f32[1,32], index: 3, kind: input, shape index: {}]
  %s4 = inlined_call_operand.vmem [shape: f32[1,32], index: 4, kind: input, shape index: {}]
  %s5 = inlined_call_operand.vmem [shape: f32[64,896], index: 5, kind: input, shape index: {}]
  %s6 = inlined_call_operand.vmem [shape: f32[1,896], index: 6, kind: input, shape index: {}]
  %s7 = inlined_call_operand.vmem [shape: f32[1,16], index: 7, kind: input, shape index: {}]
  %s8 = inlined_call_operand.vmem [shape: f32[1,16], index: 8, kind: input, shape index: {}]
  %s9 = inlined_call_operand.vmem [shape: f32[512,16], index: 9, kind: input, shape index: {}]
  %s10 = inlined_call_operand.vmem [shape: f32[256,16], index: 10, kind: input, shape index: {}]
  %s11 = inlined_call_operand.vmem [shape: f32[512,16], index: 11, kind: output, shape index: {}]
  %s12 = sld [smem:[#allocation0]]
  $region77: #{tpu_custom_call.1} parent=0
    _
  %s14 = ssub.s32 1, %s12
  %s15 = scalar_select 0, %s14, %s12
  loop: start=0, step=1, limit=6
  $region2: #{tpu_custom_call.1} parent=0 // loop_pre_header
    _
  $region3: #{tpu_custom_call.1} parent=0 // loop_header
    %s17 = sphi 0, %s21
    %p18 = scmp.ge.s32.totalorder %s17, 6
    %s27 = sphi 0, %s29
    %s30 = sphi 0, %s27
    %s31 = sphi 0, %s30
    %s47 = sphi 0, %s31
    %s51 = sphi 0, %s51
    %s53 = sphi 0, %s51
    %s54 = sphi 0, %s53
    %s68 = sphi 0, %s54
    %s72 = sphi 0, %s72
    %s74 = sphi 0, %s72
    %s75 = sphi 0, %s74
    %s89 = sphi 0, %s75
    %s93 = sphi 0, %s93
    %s95 = sphi 0, %s93
    %s96 = sphi 0, %s95
    %s110 = sphi 0, %s96
    %s114 = sphi 0, %s114
    %s116 = sphi 0, %s114
    %s117 = sphi 0, %s116
    %s131 = sphi 0, %s117
    %s135 = sphi 0, %s135
    %s137 = sphi 0, %s135
    %s138 = sphi 0, %s137
    %s152 = sphi 0, %s138
    %s156 = sphi 0, %s156
    %s158 = sphi 0, %s156
    %s159 = sphi 0, %s158
    %s173 = sphi 0, %s159
    %s177 = sphi 0, %s177
    %s179 = sphi 0, %s177
    %s180 = sphi 0, %s179
    %s194 = sphi 0, %s180
    %s198 = sphi 0, %s198
    %s200 = sphi 0, %s198
    %s201 = sphi 0, %s200
    %s215 = sphi 0, %s201
    %s219 = sphi 0, %s219
    %s221 = sphi 0, %s219
    %s222 = sphi 0, %s221
    %s236 = sphi 0, %s222
    %s240 = sphi 0, %s240
    %s242 = sphi 0, %s240
    %s243 = sphi 0, %s242
    %s257 = sphi 0, %s243
    %s263 = sphi 0, %s265
    %s266 = sphi 0, %s263
    %s267 = sphi 0, %s266
    %s283 = sphi 0, %s267
  $region4: #{tpu_custom_call.1} parent=0 // loop_header_branch
    %20 = sbr.rel (%p18) target = $region8
  $region5: #{tpu_custom_call.1} parent=0 // loop_body
    %s22 = ssub.s32 %s17, 1
    %s23 = ssub.s32 %s17, 2
    %s24 = sadd.s32 %s17, 1
    %s25 = ssub.s32 %s17, %s24
    %p26 = scmp.eq.s32.totalorder %s25, 0
    %s28 = sadd.s32 %s27, 1
    %s29 = scalar_select %p26, %s27, %s28
    %p32 = pneg %p26
    %p33 = scmp.eq.s32.totalorder %s17, 3
    %p34 = por %p32, %p33
    %p35 = scmp.ne.s32.totalorder %s27, %s30
    %p36 = scmp.eq.s32.totalorder %s17, 0
    %p37 = por %p35, %p36
    %p38 = scmp.ne.s32.totalorder %s27, %s30
    %p39 = scmp.eq.s32.totalorder %s22, 3
    %p40 = por %p38, %p39
    %p41 = scmp.ne.s32.totalorder %s30, %s31
    %p42 = scmp.eq.s32.totalorder %s22, 0
    %p43 = por %p41, %p42
    %p44 = scmp.ne.s32.totalorder %s30, %s31
    %p45 = scmp.eq.s32.totalorder %s23, 3
    %p46 = por %p44, %p45
    %p48 = scmp.ne.s32.totalorder %s31, %s47
    %p49 = scmp.eq.s32.totalorder %s23, 0
    %p50 = por %p48, %p49
    %s52 = sadd.s32 %s51, 1
    %p55 = scmp.eq.s32.totalorder %s17, 3
    %p56 = scmp.ne.s32.totalorder %s51, %s53
    %p57 = scmp.eq.s32.totalorder %s17, 0
    %p58 = por %p56, %p57
    %p59 = scmp.ne.s32.totalorder %s51, %s53
    %p60 = scmp.eq.s32.totalorder %s22, 3
    %p61 = por %p59, %p60
    %p62 = scmp.ne.s32.totalorder %s53, %s54
    %p63 = scmp.eq.s32.totalorder %s22, 0
    %p64 = por %p62, %p63
    %p65 = scmp.ne.s32.totalorder %s53, %s54
    %p66 = scmp.eq.s32.totalorder %s23, 3
    %p67 = por %p65, %p66
    %p69 = scmp.ne.s32.totalorder %s54, %s68
    %p70 = scmp.eq.s32.totalorder %s23, 0
    %p71 = por %p69, %p70
    %s73 = sadd.s32 %s72, 1
    %p76 = scmp.eq.s32.totalorder %s17, 3
    %p77 = scmp.ne.s32.totalorder %s72, %s74
    %p78 = scmp.eq.s32.totalorder %s17, 0
    %p79 = por %p77, %p78
    %p80 = scmp.ne.s32.totalorder %s72, %s74
    %p81 = scmp.eq.s32.totalorder %s22, 3
    %p82 = por %p80, %p81
    %p83 = scmp.ne.s32.totalorder %s74, %s75
    %p84 = scmp.eq.s32.totalorder %s22, 0
    %p85 = por %p83, %p84
    %p86 = scmp.ne.s32.totalorder %s74, %s75
    %p87 = scmp.eq.s32.totalorder %s23, 3
    %p88 = por %p86, %p87
    %p90 = scmp.ne.s32.totalorder %s75, %s89
    %p91 = scmp.eq.s32.totalorder %s23, 0
    %p92 = por %p90, %p91
    %s94 = sadd.s32 %s93, 1
    %p97 = scmp.eq.s32.totalorder %s17, 3
    %p98 = scmp.ne.s32.totalorder %s93, %s95
    %p99 = scmp.eq.s32.totalorder %s17, 0
    %p100 = por %p98, %p99
    %p101 = scmp.ne.s32.totalorder %s93, %s95
    %p102 = scmp.eq.s32.totalorder %s22, 3
    %p103 = por %p101, %p102
    %p104 = scmp.ne.s32.totalorder %s95, %s96
    %p105 = scmp.eq.s32.totalorder %s22, 0
    %p106 = por %p104, %p105
    %p107 = scmp.ne.s32.totalorder %s95, %s96
    %p108 = scmp.eq.s32.totalorder %s23, 3
    %p109 = por %p107, %p108
    %p111 = scmp.ne.s32.totalorder %s96, %s110
    %p112 = scmp.eq.s32.totalorder %s23, 0
    %p113 = por %p111, %p112
    %s115 = sadd.s32 %s114, 1
    %p118 = scmp.eq.s32.totalorder %s17, 3
    %p119 = scmp.ne.s32.totalorder %s114, %s116
    %p120 = scmp.eq.s32.totalorder %s17, 0
    %p121 = por %p119, %p120
    %p122 = scmp.ne.s32.totalorder %s114, %s116
    %p123 = scmp.eq.s32.totalorder %s22, 3
    %p124 = por %p122, %p123
    %p125 = scmp.ne.s32.totalorder %s116, %s117
    %p126 = scmp.eq.s32.totalorder %s22, 0
    %p127 = por %p125, %p126
    %p128 = scmp.ne.s32.totalorder %s116, %s117
    %p129 = scmp.eq.s32.totalorder %s23, 3
    %p130 = por %p128, %p129
    %p132 = scmp.ne.s32.totalorder %s117, %s131
    %p133 = scmp.eq.s32.totalorder %s23, 0
    %p134 = por %p132, %p133
    %s136 = sadd.s32 %s135, 1
    %p139 = scmp.eq.s32.totalorder %s17, 3
    %p140 = scmp.ne.s32.totalorder %s135, %s137
    %p141 = scmp.eq.s32.totalorder %s17, 0
    %p142 = por %p140, %p141
    %p143 = scmp.ne.s32.totalorder %s135, %s137
    %p144 = scmp.eq.s32.totalorder %s22, 3
    %p145 = por %p143, %p144
    %p146 = scmp.ne.s32.totalorder %s137, %s138
    %p147 = scmp.eq.s32.totalorder %s22, 0
    %p148 = por %p146, %p147
    %p149 = scmp.ne.s32.totalorder %s137, %s138
    %p150 = scmp.eq.s32.totalorder %s23, 3
    %p151 = por %p149, %p150
    %p153 = scmp.ne.s32.totalorder %s138, %s152
    %p154 = scmp.eq.s32.totalorder %s23, 0
    %p155 = por %p153, %p154
    %s157 = sadd.s32 %s156, 1
    %p160 = scmp.eq.s32.totalorder %s17, 3
    %p161 = scmp.ne.s32.totalorder %s156, %s158
    %p162 = scmp.eq.s32.totalorder %s17, 0
    %p163 = por %p161, %p162
    %p164 = scmp.ne.s32.totalorder %s156, %s158
    %p165 = scmp.eq.s32.totalorder %s22, 3
    %p166 = por %p164, %p165
    %p167 = scmp.ne.s32.totalorder %s158, %s159
    %p168 = scmp.eq.s32.totalorder %s22, 0
    %p169 = por %p167, %p168
    %p170 = scmp.ne.s32.totalorder %s158, %s159
    %p171 = scmp.eq.s32.totalorder %s23, 3
    %p172 = por %p170, %p171
    %p174 = scmp.ne.s32.totalorder %s159, %s173
    %p175 = scmp.eq.s32.totalorder %s23, 0
    %p176 = por %p174, %p175
    %s178 = sadd.s32 %s177, 1
    %p181 = scmp.eq.s32.totalorder %s17, 3
    %p182 = scmp.ne.s32.totalorder %s177, %s179
    %p183 = scmp.eq.s32.totalorder %s17, 0
    %p184 = por %p182, %p183
    %p185 = scmp.ne.s32.totalorder %s177, %s179
    %p186 = scmp.eq.s32.totalorder %s22, 3
    %p187 = por %p185, %p186
    %p188 = scmp.ne.s32.totalorder %s179, %s180
    %p189 = scmp.eq.s32.totalorder %s22, 0
    %p190 = por %p188, %p189
    %p191 = scmp.ne.s32.totalorder %s179, %s180
    %p192 = scmp.eq.s32.totalorder %s23, 3
    %p193 = por %p191, %p192
    %p195 = scmp.ne.s32.totalorder %s180, %s194
    %p196 = scmp.eq.s32.totalorder %s23, 0
    %p197 = por %p195, %p196
    %s199 = sadd.s32 %s198, 1
    %p202 = scmp.eq.s32.totalorder %s17, 3
    %p203 = scmp.ne.s32.totalorder %s198, %s200
    %p204 = scmp.eq.s32.totalorder %s17, 0
    %p205 = por %p203, %p204
    %p206 = scmp.ne.s32.totalorder %s198, %s200
    %p207 = scmp.eq.s32.totalorder %s22, 3
    %p208 = por %p206, %p207
    %p209 = scmp.ne.s32.totalorder %s200, %s201
    %p210 = scmp.eq.s32.totalorder %s22, 0
    %p211 = por %p209, %p210
    %p212 = scmp.ne.s32.totalorder %s200, %s201
    %p213 = scmp.eq.s32.totalorder %s23, 3
    %p214 = por %p212, %p213
    %p216 = scmp.ne.s32.totalorder %s201, %s215
    %p217 = scmp.eq.s32.totalorder %s23, 0
    %p218 = por %p216, %p217
    %s220 = sadd.s32 %s219, 1
    %p223 = scmp.eq.s32.totalorder %s17, 3
    %p224 = scmp.ne.s32.totalorder %s219, %s221
    %p225 = scmp.eq.s32.totalorder %s17, 0
    %p226 = por %p224, %p225
    %p227 = scmp.ne.s32.totalorder %s219, %s221
    %p228 = scmp.eq.s32.totalorder %s22, 3
    %p229 = por %p227, %p228
    %p230 = scmp.ne.s32.totalorder %s221, %s222
    %p231 = scmp.eq.s32.totalorder %s22, 0
    %p232 = por %p230, %p231
    %p233 = scmp.ne.s32.totalorder %s221, %s222
    %p234 = scmp.eq.s32.totalorder %s23, 3
    %p235 = por %p233, %p234
    %p237 = scmp.ne.s32.totalorder %s222, %s236
    %p238 = scmp.eq.s32.totalorder %s23, 0
    %p239 = por %p237, %p238
    %s241 = sadd.s32 %s240, 1
    %p244 = scmp.eq.s32.totalorder %s17, 3
    %p245 = scmp.ne.s32.totalorder %s240, %s242
    %p246 = scmp.eq.s32.totalorder %s17, 0
    %p247 = por %p245, %p246
    %p248 = scmp.ne.s32.totalorder %s240, %s242
    %p249 = scmp.eq.s32.totalorder %s22, 3
    %p250 = por %p248, %p249
    %p251 = scmp.ne.s32.totalorder %s242, %s243
    %p252 = scmp.eq.s32.totalorder %s22, 0
    %p253 = por %p251, %p252
    %p254 = scmp.ne.s32.totalorder %s242, %s243
    %p255 = scmp.eq.s32.totalorder %s23, 3
    %p256 = por %p254, %p255
    %p258 = scmp.ne.s32.totalorder %s243, %s257
    %p259 = scmp.eq.s32.totalorder %s23, 0
    %p260 = por %p258, %p259
    %s261 = ssub.s32 %s17, %s24
    %p262 = scmp.eq.s32.totalorder %s261, 0
    %s264 = sadd.s32 %s263, 1
    %s265 = scalar_select %p262, %s263, %s264
    %p268 = pneg %p262
    %p269 = scmp.eq.s32.totalorder %s17, 3
    %p270 = por %p268, %p269
    %p271 = scmp.ne.s32.totalorder %s263, %s266
    %p272 = scmp.eq.s32.totalorder %s17, 0
    %p273 = por %p271, %p272
    %p274 = scmp.ne.s32.totalorder %s263, %s266
    %p275 = scmp.eq.s32.totalorder %s22, 3
    %p276 = por %p274, %p275
    %p277 = scmp.ne.s32.totalorder %s266, %s267
    %p278 = scmp.eq.s32.totalorder %s22, 0
    %p279 = por %p277, %p278
    %p280 = scmp.ne.s32.totalorder %s266, %s267
    %p281 = scmp.eq.s32.totalorder %s23, 3
    %p282 = por %p280, %p281
    %p284 = scmp.ne.s32.totalorder %s267, %s283
    %p285 = scmp.eq.s32.totalorder %s23, 0
    %p286 = por %p284, %p285
    %p287 = scmp.le.s32.totalorder 1, %s17
    %p288 = scmp.lt.s32.totalorder %s17, 5
    %p289 = pnand %p287, %p288
    %p290 = pneg %p289
    // Predicated region
    $region9: #{tpu_custom_call.1} parent=5 // pred_check
      _
    $region10: #{tpu_custom_call.1} parent=5 // pred_check_branch
      %292 = sbr.rel (%p289) target = $region12
    $region11: #{tpu_custom_call.1} parent=5 // pred_region
      %s293 = ssub.s32 %s17, 1
      // Predicated region
      $region13: #{tpu_custom_call.1} parent=11 // pred_check
        %p294 = pneg %p64
      $region14: #{tpu_custom_call.1} parent=11 // pred_check_branch
        %296 = sbr.rel (%p294) target = $region16
      $region15: #{tpu_custom_call.1} parent=11 // pred_region
        _
      $region16: #{tpu_custom_call.1} parent=11 // pred_fallthru
        _
      // Predicated region
      $region17: #{tpu_custom_call.1} parent=11 // pred_check
        %p297 = pneg %p85
      $region18: #{tpu_custom_call.1} parent=11 // pred_check_branch
        %299 = sbr.rel (%p297) target = $region20
      $region19: #{tpu_custom_call.1} parent=11 // pred_region
        _
      $region20: #{tpu_custom_call.1} parent=11 // pred_fallthru
        _
      // Predicated region
      $region21: #{tpu_custom_call.1} parent=11 // pred_check
        %p300 = pneg %p106
      $region22: #{tpu_custom_call.1} parent=11 // pred_check_branch
        %302 = sbr.rel (%p300) target = $region24
      $region23: #{tpu_custom_call.1} parent=11 // pred_region
        _
      $region24: #{tpu_custom_call.1} parent=11 // pred_fallthru
        _
      // Predicated region
      $region25: #{tpu_custom_call.1} parent=11 // pred_check
        %p303 = pneg %p127
      $region26: #{tpu_custom_call.1} parent=11 // pred_check_branch
        %305 = sbr.rel (%p303) target = $region28
      $region27: #{tpu_custom_call.1} parent=11 // pred_region
        _
      $region28: #{tpu_custom_call.1} parent=11 // pred_fallthru
        _
      // Predicated region
      $region29: #{tpu_custom_call.1} parent=11 // pred_check
        %p306 = pneg %p148
      $region30: #{tpu_custom_call.1} parent=11 // pred_check_branch
        %308 = sbr.rel (%p306) target = $region32
      $region31: #{tpu_custom_call.1} parent=11 // pred_region
        _
      $region32: #{tpu_custom_call.1} parent=11 // pred_fallthru
        _
      // Predicated region
      $region33: #{tpu_custom_call.1} parent=11 // pred_check
        %p309 = pneg %p169
      $region34: #{tpu_custom_call.1} parent=11 // pred_check_branch
        %311 = sbr.rel (%p309) target = $region36
      $region35: #{tpu_custom_call.1} parent=11 // pred_region
        _
      $region36: #{tpu_custom_call.1} parent=11 // pred_fallthru
        _
      // Predicated region
      $region37: #{tpu_custom_call.1} parent=11 // pred_check
        %p312 = pneg %p190
      $region38: #{tpu_custom_call.1} parent=11 // pred_check_branch
        %314 = sbr.rel (%p312) target = $region40
      $region39: #{tpu_custom_call.1} parent=11 // pred_region
        _
      $region40: #{tpu_custom_call.1} parent=11 // pred_fallthru
        _
      // Predicated region
      $region41: #{tpu_custom_call.1} parent=11 // pred_check
        %p315 = pneg %p211
      $region42: #{tpu_custom_call.1} parent=11 // pred_check_branch
        %317 = sbr.rel (%p315) target = $region44
      $region43: #{tpu_custom_call.1} parent=11 // pred_region
        _
      $region44: #{tpu_custom_call.1} parent=11 // pred_fallthru
        _
      // Predicated region
      $region45: #{tpu_custom_call.1} parent=11 // pred_check
        %p318 = pneg %p232
      $region46: #{tpu_custom_call.1} parent=11 // pred_check_branch
        %320 = sbr.rel (%p318) target = $region48
      $region47: #{tpu_custom_call.1} parent=11 // pred_region
        _
      $region48: #{tpu_custom_call.1} parent=11 // pred_fallthru
        _
      // Predicated region
      $region49: #{tpu_custom_call.1} parent=11 // pred_check
        %p321 = pneg %p253
      $region50: #{tpu_custom_call.1} parent=11 // pred_check_branch
        %323 = sbr.rel (%p321) target = $region52
      $region51: #{tpu_custom_call.1} parent=11 // pred_region
        _
      $region52: #{tpu_custom_call.1} parent=11 // pred_fallthru
        _
    $region12: #{tpu_custom_call.1} parent=5 // pred_fallthru
      _
    %p324 = scmp.lt.s32.totalorder %s17, 4
    // Predicated region
    $region53: #{tpu_custom_call.1} parent=5 // pred_check
      %p325 = pneg %p324
    $region54: #{tpu_custom_call.1} parent=5 // pred_check_branch
      %327 = sbr.rel (%p325) target = $region56
    $region55: #{tpu_custom_call.1} parent=5 // pred_region
      // Predicated region
      $region57: #{tpu_custom_call.1} parent=55 // pred_check
        %p328 = pneg %p37
      $region58: #{tpu_custom_call.1} parent=55 // pred_check_branch
        %330 = sbr.rel (%p328) target = $region60
      $region59: #{tpu_custom_call.1} parent=55 // pred_region
        %s331 = smul.u32 16, %s17
        %p332 = scmp.lt.s32.totalorder %s331, 63
        %s333 = scalar_select %p332, %s331, 63
        %s334 = smul.addr %s333, 8
        %s335 = scalar_lea.vmem %s0, %s334
        %s336 = smul.u32 16, %s17
      $region60: #{tpu_custom_call.1} parent=55 // pred_fallthru
        _
    $region56: #{tpu_custom_call.1} parent=5 // pred_fallthru
      _
    %p337 = scmp.le.s32.totalorder 1, %s17
    %p338 = scmp.lt.s32.totalorder %s17, 5
    %p339 = pnand %p337, %p338
    %p340 = pneg %p339
    // Predicated region
    $region61: #{tpu_custom_call.1} parent=5 // pred_check
      _
    $region62: #{tpu_custom_call.1} parent=5 // pred_check_branch
      %342 = sbr.rel (%p339) target = $region64
    $region63: #{tpu_custom_call.1} parent=5 // pred_region
      %s343 = ssub.s32 %s17, 1
      %s344 = smul.u32 16, %s22
      %p345 = scmp.lt.s32.totalorder %s344, 63
      %s346 = scalar_select %p345, %s344, 63
      %s347 = smul.addr %s346, 8
      %s348 = scalar_lea.vmem %s0, %s347
      %p349 = pneg %p43
      %p350 = pneg %p40
      %p351 = pneg %p64
      %p352 = pneg %p61
      %p353 = pneg %p85
      %p354 = pneg %p82
      %p355 = pneg %p106
      %p356 = pneg %p103
      %p357 = pneg %p127
      %p358 = pneg %p124
      %p359 = pneg %p148
      %p360 = pneg %p145
      %p361 = pneg %p169
      %p362 = pneg %p166
      %p363 = pneg %p190
      %p364 = pneg %p187
      %p365 = pneg %p211
      %p366 = pneg %p208
      %p367 = pneg %p232
      %p368 = pneg %p229
      %p369 = pneg %p253
      %p370 = pneg %p250
      %p371 = pneg %p279
      %p372 = pneg %p276
      %s373 = smul.u32 16, %s22
      %p374 = scmp.lt.s32.totalorder %s373, 63
      %s375 = scalar_select %p374, %s373, 63
      %s376 = smul.addr %s375, 8
      %s377 = scalar_lea.vmem %s11, %s376
      %s378 = smul.u32 16, %s22
      %p379 = scmp.lt.s32.totalorder %s378, 63
      %s380 = scalar_select %p379, %s378, 63
      %s381 = smul.addr %s380, 8
      %s382 = scalar_lea.vmem %s0, %s381
      %s383 = smul.u32 16, %s22
      %s384 = smul.u32 16, %s22
      %p385 = scmp.lt.s32.totalorder %s384, 63
      %s386 = scalar_select %p385, %s384, 63
      %s387 = smul.addr %s386, 8
      %s388 = scalar_lea.vmem %s11, %s387
      %s389 = smul.u32 16, %s22
      %v390 = vld [vmem:[%s382] sm:$0xff]
      %v391 = vld [vmem:[%s382 + $0x8] sm:$0xff]
      %v392 = vld [vmem:[%s382 + $0x10] sm:$0xff]
      %v393 = vld [vmem:[%s382 + $0x18] sm:$0xff]
      %v394 = vld [vmem:[%s382 + $0x20] sm:$0xff]
      %v395 = vld [vmem:[%s382 + $0x28] sm:$0xff]
      %v396 = vld [vmem:[%s382 + $0x30] sm:$0xff]
      %v397 = vld [vmem:[%s382 + $0x38] sm:$0xff]
      %v398 = vld [vmem:[%s382 + $0x40] sm:$0xff]
      %v399 = vld [vmem:[%s382 + $0x48] sm:$0xff]
      %v400 = vld [vmem:[%s382 + $0x50] sm:$0xff]
      %v401 = vld [vmem:[%s382 + $0x58] sm:$0xff]
      %v402 = vld [vmem:[%s382 + $0x60] sm:$0xff]
      %v403 = vld [vmem:[%s382 + $0x68] sm:$0xff]
      %v404 = vld [vmem:[%s382 + $0x70] sm:$0xff]
      %v405 = vld [vmem:[%s382 + $0x78] sm:$0xff]
      %v406 = vld [vmem:[%s1] sm:$0xff]
      %v407 = vld [vmem:[%s1 + $0x8] sm:$0xff]
      %v408 = vld [vmem:[%s1 + $0x10] sm:$0xff]
      %v409 = vld [vmem:[%s1 + $0x18] sm:$0xff]
      %v410 = vld [vmem:[%s2] sm:$0x1]
      %v412 = vperm.slane %v410, 0
      %vm414 = vcmask 261120
      %v416 = vsel %vm414, %v390, 0
      %v419 = vsel %vm414, %v391, 0
      %v422 = vsel %vm414, %v392, 0
      %v425 = vsel %vm414, %v393, 0
      %v428 = vsel %vm414, %v394, 0
      %v431 = vsel %vm414, %v395, 0
      %v434 = vsel %vm414, %v396, 0
      %v437 = vsel %vm414, %v397, 0
      %v440 = vsel %vm414, %v398, 0
      %v443 = vsel %vm414, %v399, 0
      %v446 = vsel %vm414, %v400, 0
      %v449 = vsel %vm414, %v401, 0
      %v452 = vsel %vm414, %v402, 0
      %v455 = vsel %vm414, %v403, 0
      %v458 = vsel %vm414, %v404, 0
      %v461 = vsel %vm414, %v405, 0
      %463 = vmatpush.msra.mxu0 0.0
      %464 = vmatpush.msra.mxu0 0.0
      %465 = vmatpush.msra.mxu0 0.0
      %466 = vmatpush.msra.mxu0 0.0
      %467 = vmatpush.msra.mxu0 0.0
      %468 = vmatpush.msra.mxu0 0.0
      %469 = vmatpush.msra.mxu0 0.0
      %470 = vmatpush.msra.mxu0 0.0
      %471 = vmatpush.msra.mxu0 0.0
      %472 = vmatpush.msra.mxu0 0.0
      %473 = vmatpush.msra.mxu0 0.0
      %474 = vmatpush.msra.mxu0 0.0
      %475 = vmatpush.msra.mxu0 %v409
      %476 = vmatpush.msra.mxu0 %v408
      %477 = vmatpush.msra.mxu0 %v407
      %478 = vmatpush.msra.mxu0 %v406
      %479 = vmatmul.f32.gmra.mxu0 %v416
      %v480 = vpop.f32.mrf.mxu0
      %v481 = vadd.f32 %v412, %v480
      %482 = vmatmul.f32.gmra.mxu0 %v419
      %v483 = vpop.f32.mrf.mxu0
      %v484 = vadd.f32 %v412, %v483
      %485 = vmatmul.f32.gmra.mxu0 %v422
      %v486 = vpop.f32.mrf.mxu0
      %v487 = vadd.f32 %v412, %v486
      %488 = vmatmul.f32.gmra.mxu0 %v425
      %v489 = vpop.f32.mrf.mxu0
      %v490 = vadd.f32 %v412, %v489
      %491 = vmatmul.f32.gmra.mxu0 %v428
      %v492 = vpop.f32.mrf.mxu0
      %v493 = vadd.f32 %v412, %v492
      %494 = vmatmul.f32.gmra.mxu0 %v431
      %v495 = vpop.f32.mrf.mxu0
      %v496 = vadd.f32 %v412, %v495
      %497 = vmatmul.f32.gmra.mxu0 %v434
      %v498 = vpop.f32.mrf.mxu0
      %v499 = vadd.f32 %v412, %v498
      %500 = vmatmul.f32.gmra.mxu0 %v437
      %v501 = vpop.f32.mrf.mxu0
      %v502 = vadd.f32 %v412, %v501
      %503 = vmatmul.f32.gmra.mxu0 %v440
      %v504 = vpop.f32.mrf.mxu0
      %v505 = vadd.f32 %v412, %v504
      %506 = vmatmul.f32.gmra.mxu0 %v443
      %v507 = vpop.f32.mrf.mxu0
      %v508 = vadd.f32 %v412, %v507
      %509 = vmatmul.f32.gmra.mxu0 %v446
      %v510 = vpop.f32.mrf.mxu0
      %v511 = vadd.f32 %v412, %v510
      %512 = vmatmul.f32.gmra.mxu0 %v449
      %v513 = vpop.f32.mrf.mxu0
      %v514 = vadd.f32 %v412, %v513
      %515 = vmatmul.f32.gmra.mxu0 %v452
      %v516 = vpop.f32.mrf.mxu0
      %v517 = vadd.f32 %v412, %v516
      %518 = vmatmul.f32.gmra.mxu0 %v455
      %v519 = vpop.f32.mrf.mxu0
      %v520 = vadd.f32 %v412, %v519
      %521 = vmatmul.f32.gmra.mxu0 %v458
      %v522 = vpop.f32.mrf.mxu0
      %v523 = vadd.f32 %v412, %v522
      %524 = vmatmul.f32.gmra.mxu0 %v461
      %v525 = vpop.f32.mrf.mxu0
      %v526 = vadd.f32 %v412, %v525
      %527 = vdwg.mxu0
      %v528 = vld [vmem:[%s3] sm:$0x1]
      %v529 = vld [vmem:[%s4] sm:$0x1]
      %v530 = vsel %vm414, %v481, 0.0
      %531 = vadd.xlane.f32.xlu0 %v530
      %v532 = vpop.xlane.xlu0 %531
      %v533 = vsel %vm414, %v484, 0.0
      %534 = vadd.xlane.f32.xlu0 %v533
      %v535 = vpop.xlane.xlu0 %534
      %v536 = vsel %vm414, %v487, 0.0
      %537 = vadd.xlane.f32.xlu0 %v536
      %v538 = vpop.xlane.xlu0 %537
      %v539 = vsel %vm414, %v490, 0.0
      %540 = vadd.xlane.f32.xlu0 %v539
      %v541 = vpop.xlane.xlu0 %540
      %v542 = vsel %vm414, %v493, 0.0
      %543 = vadd.xlane.f32.xlu0 %v542
      %v544 = vpop.xlane.xlu0 %543
      %v545 = vsel %vm414, %v496, 0.0
      %546 = vadd.xlane.f32.xlu0 %v545
      %v547 = vpop.xlane.xlu0 %546
      %v548 = vsel %vm414, %v499, 0.0
      %549 = vadd.xlane.f32.xlu0 %v548
      %v550 = vpop.xlane.xlu0 %549
      %v551 = vsel %vm414, %v502, 0.0
      %552 = vadd.xlane.f32.xlu0 %v551
      %v553 = vpop.xlane.xlu0 %552
      %v554 = vsel %vm414, %v505, 0.0
      %555 = vadd.xlane.f32.xlu0 %v554
      %v556 = vpop.xlane.xlu0 %555
      %v557 = vsel %vm414, %v508, 0.0
      %558 = vadd.xlane.f32.xlu0 %v557
      %v559 = vpop.xlane.xlu0 %558
      %v560 = vsel %vm414, %v511, 0.0
      %561 = vadd.xlane.f32.xlu0 %v560
      %v562 = vpop.xlane.xlu0 %561
      %v563 = vsel %vm414, %v514, 0.0
      %564 = vadd.xlane.f32.xlu0 %v563
      %v565 = vpop.xlane.xlu0 %564
      %v566 = vsel %vm414, %v517, 0.0
      %567 = vadd.xlane.f32.xlu0 %v566
      %v568 = vpop.xlane.xlu0 %567
      %v569 = vsel %vm414, %v520, 0.0
      %570 = vadd.xlane.f32.xlu0 %v569
      %v571 = vpop.xlane.xlu0 %570
      %v572 = vsel %vm414, %v523, 0.0
      %573 = vadd.xlane.f32.xlu0 %v572
      %v574 = vpop.xlane.xlu0 %573
      %v575 = vsel %vm414, %v526, 0.0
      %576 = vadd.xlane.f32.xlu0 %v575
      %v577 = vpop.xlane.xlu0 %576
      %v578 = vrcp.pop 32.0
      %v579 = vmul.f32 32.0, %v578
      %v580 = vsub.f32 1.0, %v579
      %v581 = vmul.f32 %v578, %v580
      %v582 = vadd.f32 %v578, %v581
      %vm583 = vweird.f32 %v578
      %v584 = vsel %vm583, %v578, %v582
      %v585 = vmul.f32 %v532, %v584
      %v586 = vmul.f32 %v535, %v584
      %v587 = vmul.f32 %v538, %v584
      %v588 = vmul.f32 %v541, %v584
      %v589 = vmul.f32 %v544, %v584
      %v590 = vmul.f32 %v547, %v584
      %v591 = vmul.f32 %v550, %v584
      %v592 = vmul.f32 %v553, %v584
      %v593 = vmul.f32 %v556, %v584
      %v594 = vmul.f32 %v559, %v584
      %v595 = vmul.f32 %v562, %v584
      %v596 = vmul.f32 %v565, %v584
      %v597 = vmul.f32 %v568, %v584
      %v598 = vmul.f32 %v571, %v584
      %v599 = vmul.f32 %v574, %v584
      %v600 = vmul.f32 %v577, %v584
      %v601 = vsub.f32 %v481, %v585
      %v602 = vsub.f32 %v484, %v586
      %v603 = vsub.f32 %v487, %v587
      %v604 = vsub.f32 %v490, %v588
      %v605 = vsub.f32 %v493, %v589
      %v606 = vsub.f32 %v496, %v590
      %v607 = vsub.f32 %v499, %v591
      %v608 = vsub.f32 %v502, %v592
      %v609 = vsub.f32 %v505, %v593
      %v610 = vsub.f32 %v508, %v594
      %v611 = vsub.f32 %v511, %v595
      %v612 = vsub.f32 %v514, %v596
      %v613 = vsub.f32 %v517, %v597
      %v614 = vsub.f32 %v520, %v598
      %v615 = vsub.f32 %v523, %v599
      %v616 = vsub.f32 %v526, %v600
      %v617 = vmul.f32 %v601, %v601
      %v618 = vmul.f32 %v602, %v602
      %v619 = vmul.f32 %v603, %v603
      %v620 = vmul.f32 %v604, %v604
      %v621 = vmul.f32 %v605, %v605
      %v622 = vmul.f32 %v606, %v606
      %v623 = vmul.f32 %v607, %v607
      %v624 = vmul.f32 %v608, %v608
      %v625 = vmul.f32 %v609, %v609
      %v626 = vmul.f32 %v610, %v610
      %v627 = vmul.f32 %v611, %v611
      %v628 = vmul.f32 %v612, %v612
      %v629 = vmul.f32 %v613, %v613
      %v630 = vmul.f32 %v614, %v614
      %v631 = vmul.f32 %v615, %v615
      %v632 = vmul.f32 %v616, %v616
      %v633 = vsel %vm414, %v617, 0.0
      %634 = vadd.xlane.f32.xlu0 %v633
      %v635 = vpop.xlane.xlu0 %634
      %v636 = vsel %vm414, %v618, 0.0
      %637 = vadd.xlane.f32.xlu0 %v636
      %v638 = vpop.xlane.xlu0 %637
      %v639 = vsel %vm414, %v619, 0.0
      %640 = vadd.xlane.f32.xlu0 %v639
      %v641 = vpop.xlane.xlu0 %640
      %v642 = vsel %vm414, %v620, 0.0
      %643 = vadd.xlane.f32.xlu0 %v642
      %v644 = vpop.xlane.xlu0 %643
      %v645 = vsel %vm414, %v621, 0.0
      %646 = vadd.xlane.f32.xlu0 %v645
      %v647 = vpop.xlane.xlu0 %646
      %v648 = vsel %vm414, %v622, 0.0
      %649 = vadd.xlane.f32.xlu0 %v648
      %v650 = vpop.xlane.xlu0 %649
      %v651 = vsel %vm414, %v623, 0.0
      %652 = vadd.xlane.f32.xlu0 %v651
      %v653 = vpop.xlane.xlu0 %652
      %v654 = vsel %vm414, %v624, 0.0
      %655 = vadd.xlane.f32.xlu0 %v654
      %v656 = vpop.xlane.xlu0 %655
      %v657 = vsel %vm414, %v625, 0.0
      %658 = vadd.xlane.f32.xlu0 %v657
      %v659 = vpop.xlane.xlu0 %658
      %v660 = vsel %vm414, %v626, 0.0
      %661 = vadd.xlane.f32.xlu0 %v660
      %v662 = vpop.xlane.xlu0 %661
      %v663 = vsel %vm414, %v627, 0.0
      %664 = vadd.xlane.f32.xlu0 %v663
      %v665 = vpop.xlane.xlu0 %664
      %v666 = vsel %vm414, %v628, 0.0
      %667 = vadd.xlane.f32.xlu0 %v666
      %v668 = vpop.xlane.xlu0 %667
      %v669 = vsel %vm414, %v629, 0.0
      %670 = vadd.xlane.f32.xlu0 %v669
      %v671 = vpop.xlane.xlu0 %670
      %v672 = vsel %vm414, %v630, 0.0
      %673 = vadd.xlane.f32.xlu0 %v672
      %v674 = vpop.xlane.xlu0 %673
      %v675 = vsel %vm414, %v631, 0.0
      %676 = vadd.xlane.f32.xlu0 %v675
      %v677 = vpop.xlane.xlu0 %676
      %v678 = vsel %vm414, %v632, 0.0
      %679 = vadd.xlane.f32.xlu0 %v678
      %v680 = vpop.xlane.xlu0 %679
      %v681 = vmul.f32 %v635, %v584
      %v682 = vmul.f32 %v638, %v584
      %v683 = vmul.f32 %v641, %v584
      %v684 = vmul.f32 %v644, %v584
      %v685 = vmul.f32 %v647, %v584
      %v686 = vmul.f32 %v650, %v584
      %v687 = vmul.f32 %v653, %v584
      %v688 = vmul.f32 %v656, %v584
      %v689 = vmul.f32 %v659, %v584
      %v690 = vmul.f32 %v662, %v584
      %v691 = vmul.f32 %v665, %v584
      %v692 = vmul.f32 %v668, %v584
      %v693 = vmul.f32 %v671, %v584
      %v694 = vmul.f32 %v674, %v584
      %v695 = vmul.f32 %v677, %v584
      %v696 = vmul.f32 %v680, %v584
      %v697 = vadd.f32 %v681, 1e-05
      %v698 = vadd.f32 %v682, 1e-05
      %v699 = vadd.f32 %v683, 1e-05
      %v700 = vadd.f32 %v684, 1e-05
      %v701 = vadd.f32 %v685, 1e-05
      %v702 = vadd.f32 %v686, 1e-05
      %v703 = vadd.f32 %v687, 1e-05
      %v704 = vadd.f32 %v688, 1e-05
      %v705 = vadd.f32 %v689, 1e-05
      %v706 = vadd.f32 %v690, 1e-05
      %v707 = vadd.f32 %v691, 1e-05
      %v708 = vadd.f32 %v692, 1e-05
      %v709 = vadd.f32 %v693, 1e-05
      %v710 = vadd.f32 %v694, 1e-05
      %v711 = vadd.f32 %v695, 1e-05
      %v712 = vadd.f32 %v696, 1e-05
      %v713 = vrsqrt.pop %v697
      %v714 = vmul.f32 %v713, %v697
      %v715 = vmul.f32 %v714, %v713
      %v716 = vmul.f32 0.5, %v715
      %v717 = vsub.f32 1.5, %v716
      %v718 = vmul.f32 %v713, %v717
      %vm719 = vweird.f32 %v697
      %vm720 = vweird.f32 %v713
      %vm721 = vmor %vm719, %vm720
      %v722 = vsel %vm721, %v713, %v718
      %v723 = vrsqrt.pop %v698
      %v724 = vmul.f32 %v723, %v698
      %v725 = vmul.f32 %v724, %v723
      %v726 = vmul.f32 0.5, %v725
      %v727 = vsub.f32 1.5, %v726
      %v728 = vmul.f32 %v723, %v727
      %vm729 = vweird.f32 %v698
      %vm730 = vweird.f32 %v723
      %vm731 = vmor %vm729, %vm730
      %v732 = vsel %vm731, %v723, %v728
      %v733 = vrsqrt.pop %v699
      %v734 = vmul.f32 %v733, %v699
      %v735 = vmul.f32 %v734, %v733
      %v736 = vmul.f32 0.5, %v735
      %v737 = vsub.f32 1.5, %v736
      %v738 = vmul.f32 %v733, %v737
      %vm739 = vweird.f32 %v699
      %vm740 = vweird.f32 %v733
      %vm741 = vmor %vm739, %vm740
      %v742 = vsel %vm741, %v733, %v738
      %v743 = vrsqrt.pop %v700
      %v744 = vmul.f32 %v743, %v700
      %v745 = vmul.f32 %v744, %v743
      %v746 = vmul.f32 0.5, %v745
      %v747 = vsub.f32 1.5, %v746
      %v748 = vmul.f32 %v743, %v747
      %vm749 = vweird.f32 %v700
      %vm750 = vweird.f32 %v743
      %vm751 = vmor %vm749, %vm750
      %v752 = vsel %vm751, %v743, %v748
      %v753 = vrsqrt.pop %v701
      %v754 = vmul.f32 %v753, %v701
      %v755 = vmul.f32 %v754, %v753
      %v756 = vmul.f32 0.5, %v755
      %v757 = vsub.f32 1.5, %v756
      %v758 = vmul.f32 %v753, %v757
      %vm759 = vweird.f32 %v701
      %vm760 = vweird.f32 %v753
      %vm761 = vmor %vm759, %vm760
      %v762 = vsel %vm761, %v753, %v758
      %v763 = vrsqrt.pop %v702
      %v764 = vmul.f32 %v763, %v702
      %v765 = vmul.f32 %v764, %v763
      %v766 = vmul.f32 0.5, %v765
      %v767 = vsub.f32 1.5, %v766
      %v768 = vmul.f32 %v763, %v767
      %vm769 = vweird.f32 %v702
      %vm770 = vweird.f32 %v763
      %vm771 = vmor %vm769, %vm770
      %v772 = vsel %vm771, %v763, %v768
      %v773 = vrsqrt.pop %v703
      %v774 = vmul.f32 %v773, %v703
      %v775 = vmul.f32 %v774, %v773
      %v776 = vmul.f32 0.5, %v775
      %v777 = vsub.f32 1.5, %v776
      %v778 = vmul.f32 %v773, %v777
      %vm779 = vweird.f32 %v703
      %vm780 = vweird.f32 %v773
      %vm781 = vmor %vm779, %vm780
      %v782 = vsel %vm781, %v773, %v778
      %v783 = vrsqrt.pop %v704
      %v784 = vmul.f32 %v783, %v704
      %v785 = vmul.f32 %v784, %v783
      %v786 = vmul.f32 0.5, %v785
      %v787 = vsub.f32 1.5, %v786
      %v788 = vmul.f32 %v783, %v787
      %vm789 = vweird.f32 %v704
      %vm790 = vweird.f32 %v783
      %vm791 = vmor %vm789, %vm790
      %v792 = vsel %vm791, %v783, %v788
      %v793 = vrsqrt.pop %v705
      %v794 = vmul.f32 %v793, %v705
      %v795 = vmul.f32 %v794, %v793
      %v796 = vmul.f32 0.5, %v795
      %v797 = vsub.f32 1.5, %v796
      %v798 = vmul.f32 %v793, %v797
      %vm799 = vweird.f32 %v705
      %vm800 = vweird.f32 %v793
      %vm801 = vmor %vm799, %vm800
      %v802 = vsel %vm801, %v793, %v798
      %v803 = vrsqrt.pop %v706
      %v804 = vmul.f32 %v803, %v706
      %v805 = vmul.f32 %v804, %v803
      %v806 = vmul.f32 0.5, %v805
      %v807 = vsub.f32 1.5, %v806
      %v808 = vmul.f32 %v803, %v807
      %vm809 = vweird.f32 %v706
      %vm810 = vweird.f32 %v803
      %vm811 = vmor %vm809, %vm810
      %v812 = vsel %vm811, %v803, %v808
      %v813 = vrsqrt.pop %v707
      %v814 = vmul.f32 %v813, %v707
      %v815 = vmul.f32 %v814, %v813
      %v816 = vmul.f32 0.5, %v815
      %v817 = vsub.f32 1.5, %v816
      %v818 = vmul.f32 %v813, %v817
      %vm819 = vweird.f32 %v707
      %vm820 = vweird.f32 %v813
      %vm821 = vmor %vm819, %vm820
      %v822 = vsel %vm821, %v813, %v818
      %v823 = vrsqrt.pop %v708
      %v824 = vmul.f32 %v823, %v708
      %v825 = vmul.f32 %v824, %v823
      %v826 = vmul.f32 0.5, %v825
      %v827 = vsub.f32 1.5, %v826
      %v828 = vmul.f32 %v823, %v827
      %vm829 = vweird.f32 %v708
      %vm830 = vweird.f32 %v823
      %vm831 = vmor %vm829, %vm830
      %v832 = vsel %vm831, %v823, %v828
      %v833 = vrsqrt.pop %v709
      %v834 = vmul.f32 %v833, %v709
      %v835 = vmul.f32 %v834, %v833
      %v836 = vmul.f32 0.5, %v835
      %v837 = vsub.f32 1.5, %v836
      %v838 = vmul.f32 %v833, %v837
      %vm839 = vweird.f32 %v709
      %vm840 = vweird.f32 %v833
      %vm841 = vmor %vm839, %vm840
      %v842 = vsel %vm841, %v833, %v838
      %v843 = vrsqrt.pop %v710
      %v844 = vmul.f32 %v843, %v710
      %v845 = vmul.f32 %v844, %v843
      %v846 = vmul.f32 0.5, %v845
      %v847 = vsub.f32 1.5, %v846
      %v848 = vmul.f32 %v843, %v847
      %vm849 = vweird.f32 %v710
      %vm850 = vweird.f32 %v843
      %vm851 = vmor %vm849, %vm850
      %v852 = vsel %vm851, %v843, %v848
      %v853 = vrsqrt.pop %v711
      %v854 = vmul.f32 %v853, %v711
      %v855 = vmul.f32 %v854, %v853
      %v856 = vmul.f32 0.5, %v855
      %v857 = vsub.f32 1.5, %v856
      %v858 = vmul.f32 %v853, %v857
      %vm859 = vweird.f32 %v711
      %vm860 = vweird.f32 %v853
      %vm861 = vmor %vm859, %vm860
      %v862 = vsel %vm861, %v853, %v858
      %v863 = vrsqrt.pop %v712
      %v864 = vmul.f32 %v863, %v712
      %v865 = vmul.f32 %v864, %v863
      %v866 = vmul.f32 0.5, %v865
      %v867 = vsub.f32 1.5, %v866
      %v868 = vmul.f32 %v863, %v867
      %vm869 = vweird.f32 %v712
      %vm870 = vweird.f32 %v863
      %vm871 = vmor %vm869, %vm870
      %v872 = vsel %vm871, %v863, %v868
      %v873 = vmul.f32 %v601, %v722
      %v874 = vmul.f32 %v602, %v732
      %v875 = vmul.f32 %v603, %v742
      %v876 = vmul.f32 %v604, %v752
      %v877 = vmul.f32 %v605, %v762
      %v878 = vmul.f32 %v606, %v772
      %v879 = vmul.f32 %v607, %v782
      %v880 = vmul.f32 %v608, %v792
      %v881 = vmul.f32 %v609, %v802
      %v882 = vmul.f32 %v610, %v812
      %v883 = vmul.f32 %v611, %v822
      %v884 = vmul.f32 %v612, %v832
      %v885 = vmul.f32 %v613, %v842
      %v886 = vmul.f32 %v614, %v852
      %v887 = vmul.f32 %v615, %v862
      %v888 = vmul.f32 %v616, %v872
      %v890 = vperm.slane %v528, 0
      %v892 = vmul.f32 %v873, %v890
      %v893 = vmul.f32 %v874, %v890
      %v894 = vmul.f32 %v875, %v890
      %v895 = vmul.f32 %v876, %v890
      %v896 = vmul.f32 %v877, %v890
      %v897 = vmul.f32 %v878, %v890
      %v898 = vmul.f32 %v879, %v890
      %v899 = vmul.f32 %v880, %v890
      %v900 = vmul.f32 %v881, %v890
      %v901 = vmul.f32 %v882, %v890
      %v902 = vmul.f32 %v883, %v890
      %v903 = vmul.f32 %v884, %v890
      %v904 = vmul.f32 %v885, %v890
      %v905 = vmul.f32 %v886, %v890
      %v906 = vmul.f32 %v887, %v890
      %v907 = vmul.f32 %v888, %v890
      %v909 = vperm.slane %v529, 0
      %v911 = vadd.f32 %v892, %v909
      %v912 = vadd.f32 %v893, %v909
      %v913 = vadd.f32 %v894, %v909
      %v914 = vadd.f32 %v895, %v909
      %v915 = vadd.f32 %v896, %v909
      %v916 = vadd.f32 %v897, %v909
      %v917 = vadd.f32 %v898, %v909
      %v918 = vadd.f32 %v899, %v909
      %v919 = vadd.f32 %v900, %v909
      %v920 = vadd.f32 %v901, %v909
      %v921 = vadd.f32 %v902, %v909
      %v922 = vadd.f32 %v903, %v909
      %v923 = vadd.f32 %v904, %v909
      %v924 = vadd.f32 %v905, %v909
      %v925 = vadd.f32 %v906, %v909
      %v926 = vadd.f32 %v907, %v909
      %v927 = vmax.f32 %v911, 0.0
      %v928 = vmax.f32 %v912, 0.0
      %v929 = vmax.f32 %v913, 0.0
      %v930 = vmax.f32 %v914, 0.0
      %v931 = vmax.f32 %v915, 0.0
      %v932 = vmax.f32 %v916, 0.0
      %v933 = vmax.f32 %v917, 0.0
      %v934 = vmax.f32 %v918, 0.0
      %v935 = vmax.f32 %v919, 0.0
      %v936 = vmax.f32 %v920, 0.0
      %v937 = vmax.f32 %v921, 0.0
      %v938 = vmax.f32 %v922, 0.0
      %v939 = vmax.f32 %v923, 0.0
      %v940 = vmax.f32 %v924, 0.0
      %v941 = vmax.f32 %v925, 0.0
      %v942 = vmax.f32 %v926, 0.0
      %943 = vrot.lane.b32.xlu0 %v390, 32
      %v944 = vpop.permute.xlu0 %943
      %945 = vrot.lane.b32.xlu0 %v391, 32
      %v946 = vpop.permute.xlu0 %945
      %947 = vrot.lane.b32.xlu0 %v392, 32
      %v948 = vpop.permute.xlu0 %947
      %949 = vrot.lane.b32.xlu0 %v393, 32
      %v950 = vpop.permute.xlu0 %949
      %951 = vrot.lane.b32.xlu0 %v394, 32
      %v952 = vpop.permute.xlu0 %951
      %953 = vrot.lane.b32.xlu0 %v395, 32
      %v954 = vpop.permute.xlu0 %953
      %955 = vrot.lane.b32.xlu0 %v396, 32
      %v956 = vpop.permute.xlu0 %955
      %957 = vrot.lane.b32.xlu0 %v397, 32
      %v958 = vpop.permute.xlu0 %957
      %959 = vrot.lane.b32.xlu0 %v398, 32
      %v960 = vpop.permute.xlu0 %959
      %961 = vrot.lane.b32.xlu0 %v399, 32
      %v962 = vpop.permute.xlu0 %961
      %963 = vrot.lane.b32.xlu0 %v400, 32
      %v964 = vpop.permute.xlu0 %963
      %965 = vrot.lane.b32.xlu0 %v401, 32
      %v966 = vpop.permute.xlu0 %965
      %967 = vrot.lane.b32.xlu0 %v402, 32
      %v968 = vpop.permute.xlu0 %967
      %969 = vrot.lane.b32.xlu0 %v403, 32
      %v970 = vpop.permute.xlu0 %969
      %971 = vrot.lane.b32.xlu0 %v404, 32
      %v972 = vpop.permute.xlu0 %971
      %973 = vrot.lane.b32.xlu0 %v405, 32
      %v974 = vpop.permute.xlu0 %973
      %v991 = vsel %vm414, %v927, %v944
      %v992 = vsel %vm414, %v928, %v946
      %v993 = vsel %vm414, %v929, %v948
      %v994 = vsel %vm414, %v930, %v950
      %v995 = vsel %vm414, %v931, %v952
      %v996 = vsel %vm414, %v932, %v954
      %v997 = vsel %vm414, %v933, %v956
      %v998 = vsel %vm414, %v934, %v958
      %v999 = vsel %vm414, %v935, %v960
      %v1000 = vsel %vm414, %v936, %v962
      %v1001 = vsel %vm414, %v937, %v964
      %v1002 = vsel %vm414, %v938, %v966
      %v1003 = vsel %vm414, %v939, %v968
      %v1004 = vsel %vm414, %v940, %v970
      %v1005 = vsel %vm414, %v941, %v972
      %v1006 = vsel %vm414, %v942, %v974
      %v1007 = vld [vmem:[%s5] sm:$0xff]
      %v1008 = vld [vmem:[%s5 + $0x8] sm:$0xff]
      %v1009 = vld [vmem:[%s5 + $0x10] sm:$0xff]
      %v1010 = vld [vmem:[%s5 + $0x18] sm:$0xff]
      %v1011 = vld [vmem:[%s5 + $0x20] sm:$0xff]
      %v1012 = vld [vmem:[%s5 + $0x28] sm:$0xff]
      %v1013 = vld [vmem:[%s5 + $0x30] sm:$0xff]
      %v1014 = vld [vmem:[%s5 + $0x38] sm:$0xff]
      %v1015 = vld [vmem:[%s5 + $0x40] sm:$0xff]
      %v1016 = vld [vmem:[%s5 + $0x48] sm:$0xff]
      %v1017 = vld [vmem:[%s5 + $0x50] sm:$0xff]
      %v1018 = vld [vmem:[%s5 + $0x58] sm:$0xff]
      %v1019 = vld [vmem:[%s5 + $0x60] sm:$0xff]
      %v1020 = vld [vmem:[%s5 + $0x68] sm:$0xff]
      %v1021 = vld [vmem:[%s5 + $0x70] sm:$0xff]
      %v1022 = vld [vmem:[%s5 + $0x78] sm:$0xff]
      %v1023 = vld [vmem:[%s5 + $0x80] sm:$0xff]
      %v1024 = vld [vmem:[%s5 + $0x88] sm:$0xff]
      %v1025 = vld [vmem:[%s5 + $0x90] sm:$0xff]
      %v1026 = vld [vmem:[%s5 + $0x98] sm:$0xff]
      %v1027 = vld [vmem:[%s5 + $0xa0] sm:$0xff]
      %v1028 = vld [vmem:[%s5 + $0xa8] sm:$0xff]
      %v1029 = vld [vmem:[%s5 + $0xb0] sm:$0xff]
      %v1030 = vld [vmem:[%s5 + $0xb8] sm:$0xff]
      %v1031 = vld [vmem:[%s5 + $0xc0] sm:$0xff]
      %v1032 = vld [vmem:[%s5 + $0xc8] sm:$0xff]
      %v1033 = vld [vmem:[%s5 + $0xd0] sm:$0xff]
      %v1034 = vld [vmem:[%s5 + $0xd8] sm:$0xff]
      %v1035 = vld [vmem:[%s5 + $0xe0] sm:$0xff]
      %v1036 = vld [vmem:[%s5 + $0xe8] sm:$0xff]
      %v1037 = vld [vmem:[%s5 + $0xf0] sm:$0xff]
      %v1038 = vld [vmem:[%s5 + $0xf8] sm:$0xff]
      %v1039 = vld [vmem:[%s5 + $0x100] sm:$0xff]
      %v1040 = vld [vmem:[%s5 + $0x108] sm:$0xff]
      %v1041 = vld [vmem:[%s5 + $0x110] sm:$0xff]
      %v1042 = vld [vmem:[%s5 + $0x118] sm:$0xff]
      %v1043 = vld [vmem:[%s5 + $0x120] sm:$0xff]
      %v1044 = vld [vmem:[%s5 + $0x128] sm:$0xff]
      %v1045 = vld [vmem:[%s5 + $0x130] sm:$0xff]
      %v1046 = vld [vmem:[%s5 + $0x138] sm:$0xff]
      %v1047 = vld [vmem:[%s5 + $0x140] sm:$0xff]
      %v1048 = vld [vmem:[%s5 + $0x148] sm:$0xff]
      %v1049 = vld [vmem:[%s5 + $0x150] sm:$0xff]
      %v1050 = vld [vmem:[%s5 + $0x158] sm:$0xff]
      %v1051 = vld [vmem:[%s5 + $0x160] sm:$0xff]
      %v1052 = vld [vmem:[%s5 + $0x168] sm:$0xff]
      %v1053 = vld [vmem:[%s5 + $0x170] sm:$0xff]
      %v1054 = vld [vmem:[%s5 + $0x178] sm:$0xff]
      %v1055 = vld [vmem:[%s5 + $0x180] sm:$0xff]
      %v1056 = vld [vmem:[%s5 + $0x188] sm:$0xff]
      %v1057 = vld [vmem:[%s5 + $0x190] sm:$0xff]
      %v1058 = vld [vmem:[%s5 + $0x198] sm:$0xff]
      %v1059 = vld [vmem:[%s5 + $0x1a0] sm:$0xff]
      %v1060 = vld [vmem:[%s5 + $0x1a8] sm:$0xff]
      %v1061 = vld [vmem:[%s5 + $0x1b0] sm:$0xff]
      %v1062 = vld [vmem:[%s5 + $0x1b8] sm:$0xff]
      %v1063 = vld [vmem:[%s6] sm:$0xff]
      %v1065 = vperm.slane %v1063, 0
      %v1066 = vperm.slane %v1063, 1
      %v1067 = vperm.slane %v1063, 2
      %v1068 = vperm.slane %v1063, 3
      %v1069 = vperm.slane %v1063, 4
      %v1070 = vperm.slane %v1063, 5
      %v1071 = vperm.slane %v1063, 6
      %vm1079 = vcmask 523264
      %v1081 = vsel %vm1079, %v991, 0
      %v1084 = vsel %vm1079, %v992, 0
      %v1087 = vsel %vm1079, %v993, 0
      %v1090 = vsel %vm1079, %v994, 0
      %v1093 = vsel %vm1079, %v995, 0
      %v1096 = vsel %vm1079, %v996, 0
      %v1099 = vsel %vm1079, %v997, 0
      %v1102 = vsel %vm1079, %v998, 0
      %v1105 = vsel %vm1079, %v999, 0
      %v1108 = vsel %vm1079, %v1000, 0
      %v1111 = vsel %vm1079, %v1001, 0
      %v1114 = vsel %vm1079, %v1002, 0
      %v1117 = vsel %vm1079, %v1003, 0
      %v1120 = vsel %vm1079, %v1004, 0
      %v1123 = vsel %vm1079, %v1005, 0
      %v1126 = vsel %vm1079, %v1006, 0
      %1128 = vmatpush.msra.mxu0 0.0
      %1129 = vmatpush.msra.mxu0 0.0
      %1130 = vmatpush.msra.mxu0 0.0
      %1131 = vmatpush.msra.mxu0 0.0
      %1132 = vmatpush.msra.mxu0 0.0
      %1133 = vmatpush.msra.mxu0 0.0
      %1134 = vmatpush.msra.mxu0 0.0
      %1135 = vmatpush.msra.mxu0 0.0
      %1136 = vmatpush.msra.mxu0 %v1056
      %1137 = vmatpush.msra.mxu0 %v1049
      %1138 = vmatpush.msra.mxu0 %v1042
      %1139 = vmatpush.msra.mxu0 %v1035
      %1140 = vmatpush.msra.mxu0 %v1028
      %1141 = vmatpush.msra.mxu0 %v1021
      %1142 = vmatpush.msra.mxu0 %v1014
      %1143 = vmatpush.msra.mxu0 %v1007
      %1144 = vmatmul.f32.gmra.mxu0 %v1081
      %v1145 = vpop.f32.mrf.mxu0
      %v1146 = vadd.f32 %v1065, %v1145
      %1147 = vmatmul.f32.gmra.mxu0 %v1084
      %v1148 = vpop.f32.mrf.mxu0
      %v1149 = vadd.f32 %v1065, %v1148
      %1150 = vmatmul.f32.gmra.mxu0 %v1087
      %v1151 = vpop.f32.mrf.mxu0
      %v1152 = vadd.f32 %v1065, %v1151
      %1153 = vmatmul.f32.gmra.mxu0 %v1090
      %v1154 = vpop.f32.mrf.mxu0
      %v1155 = vadd.f32 %v1065, %v1154
      %1156 = vmatmul.f32.gmra.mxu0 %v1093
      %v1157 = vpop.f32.mrf.mxu0
      %v1158 = vadd.f32 %v1065, %v1157
      %1159 = vmatmul.f32.gmra.mxu0 %v1096
      %v1160 = vpop.f32.mrf.mxu0
      %v1161 = vadd.f32 %v1065, %v1160
      %1162 = vmatmul.f32.gmra.mxu0 %v1099
      %v1163 = vpop.f32.mrf.mxu0
      %v1164 = vadd.f32 %v1065, %v1163
      %1165 = vmatmul.f32.gmra.mxu0 %v1102
      %v1166 = vpop.f32.mrf.mxu0
      %v1167 = vadd.f32 %v1065, %v1166
      %1168 = vmatmul.f32.gmra.mxu0 %v1105
      %v1169 = vpop.f32.mrf.mxu0
      %v1170 = vadd.f32 %v1065, %v1169
      %1171 = vmatmul.f32.gmra.mxu0 %v1108
      %v1172 = vpop.f32.mrf.mxu0
      %v1173 = vadd.f32 %v1065, %v1172
      %1174 = vmatmul.f32.gmra.mxu0 %v1111
      %v1175 = vpop.f32.mrf.mxu0
      %v1176 = vadd.f32 %v1065, %v1175
      %1177 = vmatmul.f32.gmra.mxu0 %v1114
      %v1178 = vpop.f32.mrf.mxu0
      %v1179 = vadd.f32 %v1065, %v1178
      %1180 = vmatmul.f32.gmra.mxu0 %v1117
      %v1181 = vpop.f32.mrf.mxu0
      %v1182 = vadd.f32 %v1065, %v1181
      %1183 = vmatmul.f32.gmra.mxu0 %v1120
      %v1184 = vpop.f32.mrf.mxu0
      %v1185 = vadd.f32 %v1065, %v1184
      %1186 = vmatmul.f32.gmra.mxu0 %v1123
      %v1187 = vpop.f32.mrf.mxu0
      %v1188 = vadd.f32 %v1065, %v1187
      %1189 = vmatmul.f32.gmra.mxu0 %v1126
      %v1190 = vpop.f32.mrf.mxu0
      %v1191 = vadd.f32 %v1065, %v1190
      %1192 = vdwg.mxu0
      %1193 = vmatpush.msra.mxu0 0.0
      %1194 = vmatpush.msra.mxu0 0.0
      %1195 = vmatpush.msra.mxu0 0.0
      %1196 = vmatpush.msra.mxu0 0.0
      %1197 = vmatpush.msra.mxu0 0.0
      %1198 = vmatpush.msra.mxu0 0.0
      %1199 = vmatpush.msra.mxu0 0.0
      %1200 = vmatpush.msra.mxu0 0.0
      %1201 = vmatpush.msra.mxu0 %v1057
      %1202 = vmatpush.msra.mxu0 %v1050
      %1203 = vmatpush.msra.mxu0 %v1043
      %1204 = vmatpush.msra.mxu0 %v1036
      %1205 = vmatpush.msra.mxu0 %v1029
      %1206 = vmatpush.msra.mxu0 %v1022
      %1207 = vmatpush.msra.mxu0 %v1015
      %1208 = vmatpush.msra.mxu0 %v1008
      %1209 = vmatmul.f32.gmra.mxu0 %v1081
      %v1210 = vpop.f32.mrf.mxu0
      %v1211 = vadd.f32 %v1066, %v1210
      %1212 = vmatmul.f32.gmra.mxu0 %v1084
      %v1213 = vpop.f32.mrf.mxu0
      %v1214 = vadd.f32 %v1066, %v1213
      %1215 = vmatmul.f32.gmra.mxu0 %v1087
      %v1216 = vpop.f32.mrf.mxu0
      %v1217 = vadd.f32 %v1066, %v1216
      %1218 = vmatmul.f32.gmra.mxu0 %v1090
      %v1219 = vpop.f32.mrf.mxu0
      %v1220 = vadd.f32 %v1066, %v1219
      %1221 = vmatmul.f32.gmra.mxu0 %v1093
      %v1222 = vpop.f32.mrf.mxu0
      %v1223 = vadd.f32 %v1066, %v1222
      %1224 = vmatmul.f32.gmra.mxu0 %v1096
      %v1225 = vpop.f32.mrf.mxu0
      %v1226 = vadd.f32 %v1066, %v1225
      %1227 = vmatmul.f32.gmra.mxu0 %v1099
      %v1228 = vpop.f32.mrf.mxu0
      %v1229 = vadd.f32 %v1066, %v1228
      %1230 = vmatmul.f32.gmra.mxu0 %v1102
      %v1231 = vpop.f32.mrf.mxu0
      %v1232 = vadd.f32 %v1066, %v1231
      %1233 = vmatmul.f32.gmra.mxu0 %v1105
      %v1234 = vpop.f32.mrf.mxu0
      %v1235 = vadd.f32 %v1066, %v1234
      %1236 = vmatmul.f32.gmra.mxu0 %v1108
      %v1237 = vpop.f32.mrf.mxu0
      %v1238 = vadd.f32 %v1066, %v1237
      %1239 = vmatmul.f32.gmra.mxu0 %v1111
      %v1240 = vpop.f32.mrf.mxu0
      %v1241 = vadd.f32 %v1066, %v1240
      %1242 = vmatmul.f32.gmra.mxu0 %v1114
      %v1243 = vpop.f32.mrf.mxu0
      %v1244 = vadd.f32 %v1066, %v1243
      %1245 = vmatmul.f32.gmra.mxu0 %v1117
      %v1246 = vpop.f32.mrf.mxu0
      %v1247 = vadd.f32 %v1066, %v1246
      %1248 = vmatmul.f32.gmra.mxu0 %v1120
      %v1249 = vpop.f32.mrf.mxu0
      %v1250 = vadd.f32 %v1066, %v1249
      %1251 = vmatmul.f32.gmra.mxu0 %v1123
      %v1252 = vpop.f32.mrf.mxu0
      %v1253 = vadd.f32 %v1066, %v1252
      %1254 = vmatmul.f32.gmra.mxu0 %v1126
      %v1255 = vpop.f32.mrf.mxu0
      %v1256 = vadd.f32 %v1066, %v1255
      %1257 = vdwg.mxu0
      %1258 = vmatpush.msra.mxu0 0.0
      %1259 = vmatpush.msra.mxu0 0.0
      %1260 = vmatpush.msra.mxu0 0.0
      %1261 = vmatpush.msra.mxu0 0.0
      %1262 = vmatpush.msra.mxu0 0.0
      %1263 = vmatpush.msra.mxu0 0.0
      %1264 = vmatpush.msra.mxu0 0.0
      %1265 = vmatpush.msra.mxu0 0.0
      %1266 = vmatpush.msra.mxu0 %v1058
      %1267 = vmatpush.msra.mxu0 %v1051
      %1268 = vmatpush.msra.mxu0 %v1044
      %1269 = vmatpush.msra.mxu0 %v1037
      %1270 = vmatpush.msra.mxu0 %v1030
      %1271 = vmatpush.msra.mxu0 %v1023
      %1272 = vmatpush.msra.mxu0 %v1016
      %1273 = vmatpush.msra.mxu0 %v1009
      %1274 = vmatmul.f32.gmra.mxu0 %v1081
      %v1275 = vpop.f32.mrf.mxu0
      %v1276 = vadd.f32 %v1067, %v1275
      %1277 = vmatmul.f32.gmra.mxu0 %v1084
      %v1278 = vpop.f32.mrf.mxu0
      %v1279 = vadd.f32 %v1067, %v1278
      %1280 = vmatmul.f32.gmra.mxu0 %v1087
      %v1281 = vpop.f32.mrf.mxu0
      %v1282 = vadd.f32 %v1067, %v1281
      %1283 = vmatmul.f32.gmra.mxu0 %v1090
      %v1284 = vpop.f32.mrf.mxu0
      %v1285 = vadd.f32 %v1067, %v1284
      %1286 = vmatmul.f32.gmra.mxu0 %v1093
      %v1287 = vpop.f32.mrf.mxu0
      %v1288 = vadd.f32 %v1067, %v1287
      %1289 = vmatmul.f32.gmra.mxu0 %v1096
      %v1290 = vpop.f32.mrf.mxu0
      %v1291 = vadd.f32 %v1067, %v1290
      %1292 = vmatmul.f32.gmra.mxu0 %v1099
      %v1293 = vpop.f32.mrf.mxu0
      %v1294 = vadd.f32 %v1067, %v1293
      %1295 = vmatmul.f32.gmra.mxu0 %v1102
      %v1296 = vpop.f32.mrf.mxu0
      %v1297 = vadd.f32 %v1067, %v1296
      %1298 = vmatmul.f32.gmra.mxu0 %v1105
      %v1299 = vpop.f32.mrf.mxu0
      %v1300 = vadd.f32 %v1067, %v1299
      %1301 = vmatmul.f32.gmra.mxu0 %v1108
      %v1302 = vpop.f32.mrf.mxu0
      %v1303 = vadd.f32 %v1067, %v1302
      %1304 = vmatmul.f32.gmra.mxu0 %v1111
      %v1305 = vpop.f32.mrf.mxu0
      %v1306 = vadd.f32 %v1067, %v1305
      %1307 = vmatmul.f32.gmra.mxu0 %v1114
      %v1308 = vpop.f32.mrf.mxu0
      %v1309 = vadd.f32 %v1067, %v1308
      %1310 = vmatmul.f32.gmra.mxu0 %v1117
      %v1311 = vpop.f32.mrf.mxu0
      %v1312 = vadd.f32 %v1067, %v1311
      %1313 = vmatmul.f32.gmra.mxu0 %v1120
      %v1314 = vpop.f32.mrf.mxu0
      %v1315 = vadd.f32 %v1067, %v1314
      %1316 = vmatmul.f32.gmra.mxu0 %v1123
      %v1317 = vpop.f32.mrf.mxu0
      %v1318 = vadd.f32 %v1067, %v1317
      %1319 = vmatmul.f32.gmra.mxu0 %v1126
      %v1320 = vpop.f32.mrf.mxu0
      %v1321 = vadd.f32 %v1067, %v1320
      %1322 = vdwg.mxu0
      %1323 = vmatpush.msra.mxu0 0.0
      %1324 = vmatpush.msra.mxu0 0.0
      %1325 = vmatpush.msra.mxu0 0.0
      %1326 = vmatpush.msra.mxu0 0.0
      %1327 = vmatpush.msra.mxu0 0.0
      %1328 = vmatpush.msra.mxu0 0.0
      %1329 = vmatpush.msra.mxu0 0.0
      %1330 = vmatpush.msra.mxu0 0.0
      %1331 = vmatpush.msra.mxu0 %v1059
      %1332 = vmatpush.msra.mxu0 %v1052
      %1333 = vmatpush.msra.mxu0 %v1045
      %1334 = vmatpush.msra.mxu0 %v1038
      %1335 = vmatpush.msra.mxu0 %v1031
      %1336 = vmatpush.msra.mxu0 %v1024
      %1337 = vmatpush.msra.mxu0 %v1017
      %1338 = vmatpush.msra.mxu0 %v1010
      %1339 = vmatmul.f32.gmra.mxu0 %v1081
      %v1340 = vpop.f32.mrf.mxu0
      %v1341 = vadd.f32 %v1068, %v1340
      %1342 = vmatmul.f32.gmra.mxu0 %v1084
      %v1343 = vpop.f32.mrf.mxu0
      %v1344 = vadd.f32 %v1068, %v1343
      %1345 = vmatmul.f32.gmra.mxu0 %v1087
      %v1346 = vpop.f32.mrf.mxu0
      %v1347 = vadd.f32 %v1068, %v1346
      %1348 = vmatmul.f32.gmra.mxu0 %v1090
      %v1349 = vpop.f32.mrf.mxu0
      %v1350 = vadd.f32 %v1068, %v1349
      %1351 = vmatmul.f32.gmra.mxu0 %v1093
      %v1352 = vpop.f32.mrf.mxu0
      %v1353 = vadd.f32 %v1068, %v1352
      %1354 = vmatmul.f32.gmra.mxu0 %v1096
      %v1355 = vpop.f32.mrf.mxu0
      %v1356 = vadd.f32 %v1068, %v1355
      %1357 = vmatmul.f32.gmra.mxu0 %v1099
      %v1358 = vpop.f32.mrf.mxu0
      %v1359 = vadd.f32 %v1068, %v1358
      %1360 = vmatmul.f32.gmra.mxu0 %v1102
      %v1361 = vpop.f32.mrf.mxu0
      %v1362 = vadd.f32 %v1068, %v1361
      %1363 = vmatmul.f32.gmra.mxu0 %v1105
      %v1364 = vpop.f32.mrf.mxu0
      %v1365 = vadd.f32 %v1068, %v1364
      %1366 = vmatmul.f32.gmra.mxu0 %v1108
      %v1367 = vpop.f32.mrf.mxu0
      %v1368 = vadd.f32 %v1068, %v1367
      %1369 = vmatmul.f32.gmra.mxu0 %v1111
      %v1370 = vpop.f32.mrf.mxu0
      %v1371 = vadd.f32 %v1068, %v1370
      %1372 = vmatmul.f32.gmra.mxu0 %v1114
      %v1373 = vpop.f32.mrf.mxu0
      %v1374 = vadd.f32 %v1068, %v1373
      %1375 = vmatmul.f32.gmra.mxu0 %v1117
      %v1376 = vpop.f32.mrf.mxu0
      %v1377 = vadd.f32 %v1068, %v1376
      %1378 = vmatmul.f32.gmra.mxu0 %v1120
      %v1379 = vpop.f32.mrf.mxu0
      %v1380 = vadd.f32 %v1068, %v1379
      %1381 = vmatmul.f32.gmra.mxu0 %v1123
      %v1382 = vpop.f32.mrf.mxu0
      %v1383 = vadd.f32 %v1068, %v1382
      %1384 = vmatmul.f32.gmra.mxu0 %v1126
      %v1385 = vpop.f32.mrf.mxu0
      %v1386 = vadd.f32 %v1068, %v1385
      %1387 = vdwg.mxu0
      %1388 = vmatpush.msra.mxu0 0.0
      %1389 = vmatpush.msra.mxu0 0.0
      %1390 = vmatpush.msra.mxu0 0.0
      %1391 = vmatpush.msra.mxu0 0.0
      %1392 = vmatpush.msra.mxu0 0.0
      %1393 = vmatpush.msra.mxu0 0.0
      %1394 = vmatpush.msra.mxu0 0.0
      %1395 = vmatpush.msra.mxu0 0.0
      %1396 = vmatpush.msra.mxu0 %v1060
      %1397 = vmatpush.msra.mxu0 %v1053
      %1398 = vmatpush.msra.mxu0 %v1046
      %1399 = vmatpush.msra.mxu0 %v1039
      %1400 = vmatpush.msra.mxu0 %v1032
      %1401 = vmatpush.msra.mxu0 %v1025
      %1402 = vmatpush.msra.mxu0 %v1018
      %1403 = vmatpush.msra.mxu0 %v1011
      %1404 = vmatmul.f32.gmra.mxu0 %v1081
      %v1405 = vpop.f32.mrf.mxu0
      %v1406 = vadd.f32 %v1069, %v1405
      %1407 = vmatmul.f32.gmra.mxu0 %v1084
      %v1408 = vpop.f32.mrf.mxu0
      %v1409 = vadd.f32 %v1069, %v1408
      %1410 = vmatmul.f32.gmra.mxu0 %v1087
      %v1411 = vpop.f32.mrf.mxu0
      %v1412 = vadd.f32 %v1069, %v1411
      %1413 = vmatmul.f32.gmra.mxu0 %v1090
      %v1414 = vpop.f32.mrf.mxu0
      %v1415 = vadd.f32 %v1069, %v1414
      %1416 = vmatmul.f32.gmra.mxu0 %v1093
      %v1417 = vpop.f32.mrf.mxu0
      %v1418 = vadd.f32 %v1069, %v1417
      %1419 = vmatmul.f32.gmra.mxu0 %v1096
      %v1420 = vpop.f32.mrf.mxu0
      %v1421 = vadd.f32 %v1069, %v1420
      %1422 = vmatmul.f32.gmra.mxu0 %v1099
      %v1423 = vpop.f32.mrf.mxu0
      %v1424 = vadd.f32 %v1069, %v1423
      %1425 = vmatmul.f32.gmra.mxu0 %v1102
      %v1426 = vpop.f32.mrf.mxu0
      %v1427 = vadd.f32 %v1069, %v1426
      %1428 = vmatmul.f32.gmra.mxu0 %v1105
      %v1429 = vpop.f32.mrf.mxu0
      %v1430 = vadd.f32 %v1069, %v1429
      %1431 = vmatmul.f32.gmra.mxu0 %v1108
      %v1432 = vpop.f32.mrf.mxu0
      %v1433 = vadd.f32 %v1069, %v1432
      %1434 = vmatmul.f32.gmra.mxu0 %v1111
      %v1435 = vpop.f32.mrf.mxu0
      %v1436 = vadd.f32 %v1069, %v1435
      %1437 = vmatmul.f32.gmra.mxu0 %v1114
      %v1438 = vpop.f32.mrf.mxu0
      %v1439 = vadd.f32 %v1069, %v1438
      %1440 = vmatmul.f32.gmra.mxu0 %v1117
      %v1441 = vpop.f32.mrf.mxu0
      %v1442 = vadd.f32 %v1069, %v1441
      %1443 = vmatmul.f32.gmra.mxu0 %v1120
      %v1444 = vpop.f32.mrf.mxu0
      %v1445 = vadd.f32 %v1069, %v1444
      %1446 = vmatmul.f32.gmra.mxu0 %v1123
      %v1447 = vpop.f32.mrf.mxu0
      %v1448 = vadd.f32 %v1069, %v1447
      %1449 = vmatmul.f32.gmra.mxu0 %v1126
      %v1450 = vpop.f32.mrf.mxu0
      %v1451 = vadd.f32 %v1069, %v1450
      %1452 = vdwg.mxu0
      %1453 = vmatpush.msra.mxu0 0.0
      %1454 = vmatpush.msra.mxu0 0.0
      %1455 = vmatpush.msra.mxu0 0.0
      %1456 = vmatpush.msra.mxu0 0.0
      %1457 = vmatpush.msra.mxu0 0.0
      %1458 = vmatpush.msra.mxu0 0.0
      %1459 = vmatpush.msra.mxu0 0.0
      %1460 = vmatpush.msra.mxu0 0.0
      %1461 = vmatpush.msra.mxu0 %v1061
      %1462 = vmatpush.msra.mxu0 %v1054
      %1463 = vmatpush.msra.mxu0 %v1047
      %1464 = vmatpush.msra.mxu0 %v1040
      %1465 = vmatpush.msra.mxu0 %v1033
      %1466 = vmatpush.msra.mxu0 %v1026
      %1467 = vmatpush.msra.mxu0 %v1019
      %1468 = vmatpush.msra.mxu0 %v1012
      %1469 = vmatmul.f32.gmra.mxu0 %v1081
      %v1470 = vpop.f32.mrf.mxu0
      %v1471 = vadd.f32 %v1070, %v1470
      %1472 = vmatmul.f32.gmra.mxu0 %v1084
      %v1473 = vpop.f32.mrf.mxu0
      %v1474 = vadd.f32 %v1070, %v1473
      %1475 = vmatmul.f32.gmra.mxu0 %v1087
      %v1476 = vpop.f32.mrf.mxu0
      %v1477 = vadd.f32 %v1070, %v1476
      %1478 = vmatmul.f32.gmra.mxu0 %v1090
      %v1479 = vpop.f32.mrf.mxu0
      %v1480 = vadd.f32 %v1070, %v1479
      %1481 = vmatmul.f32.gmra.mxu0 %v1093
      %v1482 = vpop.f32.mrf.mxu0
      %v1483 = vadd.f32 %v1070, %v1482
      %1484 = vmatmul.f32.gmra.mxu0 %v1096
      %v1485 = vpop.f32.mrf.mxu0
      %v1486 = vadd.f32 %v1070, %v1485
      %1487 = vmatmul.f32.gmra.mxu0 %v1099
      %v1488 = vpop.f32.mrf.mxu0
      %v1489 = vadd.f32 %v1070, %v1488
      %1490 = vmatmul.f32.gmra.mxu0 %v1102
      %v1491 = vpop.f32.mrf.mxu0
      %v1492 = vadd.f32 %v1070, %v1491
      %1493 = vmatmul.f32.gmra.mxu0 %v1105
      %v1494 = vpop.f32.mrf.mxu0
      %v1495 = vadd.f32 %v1070, %v1494
      %1496 = vmatmul.f32.gmra.mxu0 %v1108
      %v1497 = vpop.f32.mrf.mxu0
      %v1498 = vadd.f32 %v1070, %v1497
      %1499 = vmatmul.f32.gmra.mxu0 %v1111
      %v1500 = vpop.f32.mrf.mxu0
      %v1501 = vadd.f32 %v1070, %v1500
      %1502 = vmatmul.f32.gmra.mxu0 %v1114
      %v1503 = vpop.f32.mrf.mxu0
      %v1504 = vadd.f32 %v1070, %v1503
      %1505 = vmatmul.f32.gmra.mxu0 %v1117
      %v1506 = vpop.f32.mrf.mxu0
      %v1507 = vadd.f32 %v1070, %v1506
      %1508 = vmatmul.f32.gmra.mxu0 %v1120
      %v1509 = vpop.f32.mrf.mxu0
      %v1510 = vadd.f32 %v1070, %v1509
      %1511 = vmatmul.f32.gmra.mxu0 %v1123
      %v1512 = vpop.f32.mrf.mxu0
      %v1513 = vadd.f32 %v1070, %v1512
      %1514 = vmatmul.f32.gmra.mxu0 %v1126
      %v1515 = vpop.f32.mrf.mxu0
      %v1516 = vadd.f32 %v1070, %v1515
      %1517 = vdwg.mxu0
      %1518 = vmatpush.msra.mxu0 0.0
      %1519 = vmatpush.msra.mxu0 0.0
      %1520 = vmatpush.msra.mxu0 0.0
      %1521 = vmatpush.msra.mxu0 0.0
      %1522 = vmatpush.msra.mxu0 0.0
      %1523 = vmatpush.msra.mxu0 0.0
      %1524 = vmatpush.msra.mxu0 0.0
      %1525 = vmatpush.msra.mxu0 0.0
      %1526 = vmatpush.msra.mxu0 %v1062
      %1527 = vmatpush.msra.mxu0 %v1055
      %1528 = vmatpush.msra.mxu0 %v1048
      %1529 = vmatpush.msra.mxu0 %v1041
      %1530 = vmatpush.msra.mxu0 %v1034
      %1531 = vmatpush.msra.mxu0 %v1027
      %1532 = vmatpush.msra.mxu0 %v1020
      %1533 = vmatpush.msra.mxu0 %v1013
      %1534 = vmatmul.f32.gmra.mxu0 %v1081
      %v1535 = vpop.f32.mrf.mxu0
      %v1536 = vadd.f32 %v1071, %v1535
      %1537 = vmatmul.f32.gmra.mxu0 %v1084
      %v1538 = vpop.f32.mrf.mxu0
      %v1539 = vadd.f32 %v1071, %v1538
      %1540 = vmatmul.f32.gmra.mxu0 %v1087
      %v1541 = vpop.f32.mrf.mxu0
      %v1542 = vadd.f32 %v1071, %v1541
      %1543 = vmatmul.f32.gmra.mxu0 %v1090
      %v1544 = vpop.f32.mrf.mxu0
      %v1545 = vadd.f32 %v1071, %v1544
      %1546 = vmatmul.f32.gmra.mxu0 %v1093
      %v1547 = vpop.f32.mrf.mxu0
      %v1548 = vadd.f32 %v1071, %v1547
      %1549 = vmatmul.f32.gmra.mxu0 %v1096
      %v1550 = vpop.f32.mrf.mxu0
      %v1551 = vadd.f32 %v1071, %v1550
      %1552 = vmatmul.f32.gmra.mxu0 %v1099
      %v1553 = vpop.f32.mrf.mxu0
      %v1554 = vadd.f32 %v1071, %v1553
      %1555 = vmatmul.f32.gmra.mxu0 %v1102
      %v1556 = vpop.f32.mrf.mxu0
      %v1557 = vadd.f32 %v1071, %v1556
      %1558 = vmatmul.f32.gmra.mxu0 %v1105
      %v1559 = vpop.f32.mrf.mxu0
      %v1560 = vadd.f32 %v1071, %v1559
      %1561 = vmatmul.f32.gmra.mxu0 %v1108
      %v1562 = vpop.f32.mrf.mxu0
      %v1563 = vadd.f32 %v1071, %v1562
      %1564 = vmatmul.f32.gmra.mxu0 %v1111
      %v1565 = vpop.f32.mrf.mxu0
      %v1566 = vadd.f32 %v1071, %v1565
      %1567 = vmatmul.f32.gmra.mxu0 %v1114
      %v1568 = vpop.f32.mrf.mxu0
      %v1569 = vadd.f32 %v1071, %v1568
      %1570 = vmatmul.f32.gmra.mxu0 %v1117
      %v1571 = vpop.f32.mrf.mxu0
      %v1572 = vadd.f32 %v1071, %v1571
      %1573 = vmatmul.f32.gmra.mxu0 %v1120
      %v1574 = vpop.f32.mrf.mxu0
      %v1575 = vadd.f32 %v1071, %v1574
      %1576 = vmatmul.f32.gmra.mxu0 %v1123
      %v1577 = vpop.f32.mrf.mxu0
      %v1578 = vadd.f32 %v1071, %v1577
      %1579 = vmatmul.f32.gmra.mxu0 %v1126
      %v1580 = vpop.f32.mrf.mxu0
      %v1581 = vadd.f32 %v1071, %v1580
      %1582 = vdwg.mxu0
      %1583 = vrot.lane.b32.xlu0 %v390, 64
      %v1584 = vpop.permute.xlu0 %1583
      %1585 = vrot.lane.b32.xlu0 %v391, 64
      %v1586 = vpop.permute.xlu0 %1585
      %1587 = vrot.lane.b32.xlu0 %v392, 64
      %v1588 = vpop.permute.xlu0 %1587
      %1589 = vrot.lane.b32.xlu0 %v393, 64
      %v1590 = vpop.permute.xlu0 %1589
      %1591 = vrot.lane.b32.xlu0 %v394, 64
      %v1592 = vpop.permute.xlu0 %1591
      %1593 = vrot.lane.b32.xlu0 %v395, 64
      %v1594 = vpop.permute.xlu0 %1593
      %1595 = vrot.lane.b32.xlu0 %v396, 64
      %v1596 = vpop.permute.xlu0 %1595
      %1597 = vrot.lane.b32.xlu0 %v397, 64
      %v1598 = vpop.permute.xlu0 %1597
      %1599 = vrot.lane.b32.xlu0 %v398, 64
      %v1600 = vpop.permute.xlu0 %1599
      %1601 = vrot.lane.b32.xlu0 %v399, 64
      %v1602 = vpop.permute.xlu0 %1601
      %1603 = vrot.lane.b32.xlu0 %v400, 64
      %v1604 = vpop.permute.xlu0 %1603
      %1605 = vrot.lane.b32.xlu0 %v401, 64
      %v1606 = vpop.permute.xlu0 %1605
      %1607 = vrot.lane.b32.xlu0 %v402, 64
      %v1608 = vpop.permute.xlu0 %1607
      %1609 = vrot.lane.b32.xlu0 %v403, 64
      %v1610 = vpop.permute.xlu0 %1609
      %1611 = vrot.lane.b32.xlu0 %v404, 64
      %v1612 = vpop.permute.xlu0 %1611
      %1613 = vrot.lane.b32.xlu0 %v405, 64
      %v1614 = vpop.permute.xlu0 %1613
      %1631 = vrot.lane.b32.xlu0 %v390, 96
      %v1632 = vpop.permute.xlu0 %1631
      %1633 = vrot.lane.b32.xlu0 %v391, 96
      %v1634 = vpop.permute.xlu0 %1633
      %1635 = vrot.lane.b32.xlu0 %v392, 96
      %v1636 = vpop.permute.xlu0 %1635
      %1637 = vrot.lane.b32.xlu0 %v393, 96
      %v1638 = vpop.permute.xlu0 %1637
      %1639 = vrot.lane.b32.xlu0 %v394, 96
      %v1640 = vpop.permute.xlu0 %1639
      %1641 = vrot.lane.b32.xlu0 %v395, 96
      %v1642 = vpop.permute.xlu0 %1641
      %1643 = vrot.lane.b32.xlu0 %v396, 96
      %v1644 = vpop.permute.xlu0 %1643
      %1645 = vrot.lane.b32.xlu0 %v397, 96
      %v1646 = vpop.permute.xlu0 %1645
      %1647 = vrot.lane.b32.xlu0 %v398, 96
      %v1648 = vpop.permute.xlu0 %1647
      %1649 = vrot.lane.b32.xlu0 %v399, 96
      %v1650 = vpop.permute.xlu0 %1649
      %1651 = vrot.lane.b32.xlu0 %v400, 96
      %v1652 = vpop.permute.xlu0 %1651
      %1653 = vrot.lane.b32.xlu0 %v401, 96
      %v1654 = vpop.permute.xlu0 %1653
      %1655 = vrot.lane.b32.xlu0 %v402, 96
      %v1656 = vpop.permute.xlu0 %1655
      %1657 = vrot.lane.b32.xlu0 %v403, 96
      %v1658 = vpop.permute.xlu0 %1657
      %1659 = vrot.lane.b32.xlu0 %v404, 96
      %v1660 = vpop.permute.xlu0 %1659
      %1661 = vrot.lane.b32.xlu0 %v405, 96
      %v1662 = vpop.permute.xlu0 %1661
      %v1679 = vsel %vm414, %v390, %v944
      %v1680 = vsel %vm414, %v391, %v946
      %v1681 = vsel %vm414, %v392, %v948
      %v1682 = vsel %vm414, %v393, %v950
      %v1683 = vsel %vm414, %v394, %v952
      %v1684 = vsel %vm414, %v395, %v954
      %v1685 = vsel %vm414, %v396, %v956
      %v1686 = vsel %vm414, %v397, %v958
      %v1687 = vsel %vm414, %v398, %v960
      %v1688 = vsel %vm414, %v399, %v962
      %v1689 = vsel %vm414, %v400, %v964
      %v1690 = vsel %vm414, %v401, %v966
      %v1691 = vsel %vm414, %v402, %v968
      %v1692 = vsel %vm414, %v403, %v970
      %v1693 = vsel %vm414, %v404, %v972
      %v1694 = vsel %vm414, %v405, %v974
      %v1695 = vsel %vm1079, %v1679, %v1584
      %v1696 = vsel %vm1079, %v1680, %v1586
      %v1697 = vsel %vm1079, %v1681, %v1588
      %v1698 = vsel %vm1079, %v1682, %v1590
      %v1699 = vsel %vm1079, %v1683, %v1592
      %v1700 = vsel %vm1079, %v1684, %v1594
      %v1701 = vsel %vm1079, %v1685, %v1596
      %v1702 = vsel %vm1079, %v1686, %v1598
      %v1703 = vsel %vm1079, %v1687, %v1600
      %v1704 = vsel %vm1079, %v1688, %v1602
      %v1705 = vsel %vm1079, %v1689, %v1604
      %v1706 = vsel %vm1079, %v1690, %v1606
      %v1707 = vsel %vm1079, %v1691, %v1608
      %v1708 = vsel %vm1079, %v1692, %v1610
      %v1709 = vsel %vm1079, %v1693, %v1612
      %v1710 = vsel %vm1079, %v1694, %v1614
      %vm1711 = vcmask 785408
      %v1712 = vsel %vm1711, %v1695, %v1632
      %v1713 = vsel %vm1711, %v1696, %v1634
      %v1714 = vsel %vm1711, %v1697, %v1636
      %v1715 = vsel %vm1711, %v1698, %v1638
      %v1716 = vsel %vm1711, %v1699, %v1640
      %v1717 = vsel %vm1711, %v1700, %v1642
      %v1718 = vsel %vm1711, %v1701, %v1644
      %v1719 = vsel %vm1711, %v1702, %v1646
      %v1720 = vsel %vm1711, %v1703, %v1648
      %v1721 = vsel %vm1711, %v1704, %v1650
      %v1722 = vsel %vm1711, %v1705, %v1652
      %v1723 = vsel %vm1711, %v1706, %v1654
      %v1724 = vsel %vm1711, %v1707, %v1656
      %v1725 = vsel %vm1711, %v1708, %v1658
      %v1726 = vsel %vm1711, %v1709, %v1660
      %v1727 = vsel %vm1711, %v1710, %v1662
      %v1728 = vmul.f32 %v1146, %v1712
      %v1729 = vmul.f32 %v1211, %v1712
      %v1730 = vmul.f32 %v1276, %v1712
      %v1731 = vmul.f32 %v1341, %v1712
      %v1732 = vmul.f32 %v1149, %v1713
      %v1733 = vmul.f32 %v1214, %v1713
      %v1734 = vmul.f32 %v1279, %v1713
      %v1735 = vmul.f32 %v1344, %v1713
      %v1736 = vmul.f32 %v1152, %v1714
      %v1737 = vmul.f32 %v1217, %v1714
      %v1738 = vmul.f32 %v1282, %v1714
      %v1739 = vmul.f32 %v1347, %v1714
      %v1740 = vmul.f32 %v1155, %v1715
      %v1741 = vmul.f32 %v1220, %v1715
      %v1742 = vmul.f32 %v1285, %v1715
      %v1743 = vmul.f32 %v1350, %v1715
      %v1744 = vmul.f32 %v1158, %v1716
      %v1745 = vmul.f32 %v1223, %v1716
      %v1746 = vmul.f32 %v1288, %v1716
      %v1747 = vmul.f32 %v1353, %v1716
      %v1748 = vmul.f32 %v1161, %v1717
      %v1749 = vmul.f32 %v1226, %v1717
      %v1750 = vmul.f32 %v1291, %v1717
      %v1751 = vmul.f32 %v1356, %v1717
      %v1752 = vmul.f32 %v1164, %v1718
      %v1753 = vmul.f32 %v1229, %v1718
      %v1754 = vmul.f32 %v1294, %v1718
      %v1755 = vmul.f32 %v1359, %v1718
      %v1756 = vmul.f32 %v1167, %v1719
      %v1757 = vmul.f32 %v1232, %v1719
      %v1758 = vmul.f32 %v1297, %v1719
      %v1759 = vmul.f32 %v1362, %v1719
      %v1760 = vmul.f32 %v1170, %v1720
      %v1761 = vmul.f32 %v1235, %v1720
      %v1762 = vmul.f32 %v1300, %v1720
      %v1763 = vmul.f32 %v1365, %v1720
      %v1764 = vmul.f32 %v1173, %v1721
      %v1765 = vmul.f32 %v1238, %v1721
      %v1766 = vmul.f32 %v1303, %v1721
      %v1767 = vmul.f32 %v1368, %v1721
      %v1768 = vmul.f32 %v1176, %v1722
      %v1769 = vmul.f32 %v1241, %v1722
      %v1770 = vmul.f32 %v1306, %v1722
      %v1771 = vmul.f32 %v1371, %v1722
      %v1772 = vmul.f32 %v1179, %v1723
      %v1773 = vmul.f32 %v1244, %v1723
      %v1774 = vmul.f32 %v1309, %v1723
      %v1775 = vmul.f32 %v1374, %v1723
      %v1776 = vmul.f32 %v1182, %v1724
      %v1777 = vmul.f32 %v1247, %v1724
      %v1778 = vmul.f32 %v1312, %v1724
      %v1779 = vmul.f32 %v1377, %v1724
      %v1780 = vmul.f32 %v1185, %v1725
      %v1781 = vmul.f32 %v1250, %v1725
      %v1782 = vmul.f32 %v1315, %v1725
      %v1783 = vmul.f32 %v1380, %v1725
      %v1784 = vmul.f32 %v1188, %v1726
      %v1785 = vmul.f32 %v1253, %v1726
      %v1786 = vmul.f32 %v1318, %v1726
      %v1787 = vmul.f32 %v1383, %v1726
      %v1788 = vmul.f32 %v1191, %v1727
      %v1789 = vmul.f32 %v1256, %v1727
      %v1790 = vmul.f32 %v1321, %v1727
      %v1791 = vmul.f32 %v1386, %v1727
      %v1792 = vld [vmem:[%s9] sm:$0xff]
      %v1793 = vld [vmem:[%s9 + $0x8] sm:$0xff]
      %v1794 = vld [vmem:[%s9 + $0x10] sm:$0xff]
      %v1795 = vld [vmem:[%s9 + $0x18] sm:$0xff]
      %v1796 = vld [vmem:[%s9 + $0x20] sm:$0xff]
      %v1797 = vld [vmem:[%s9 + $0x28] sm:$0xff]
      %v1798 = vld [vmem:[%s9 + $0x30] sm:$0xff]
      %v1799 = vld [vmem:[%s9 + $0x38] sm:$0xff]
      %v1800 = vld [vmem:[%s9 + $0x40] sm:$0xff]
      %v1801 = vld [vmem:[%s9 + $0x48] sm:$0xff]
      %v1802 = vld [vmem:[%s9 + $0x50] sm:$0xff]
      %v1803 = vld [vmem:[%s9 + $0x58] sm:$0xff]
      %v1804 = vld [vmem:[%s9 + $0x60] sm:$0xff]
      %v1805 = vld [vmem:[%s9 + $0x68] sm:$0xff]
      %v1806 = vld [vmem:[%s9 + $0x70] sm:$0xff]
      %v1807 = vld [vmem:[%s9 + $0x78] sm:$0xff]
      %v1808 = vld [vmem:[%s9 + $0x80] sm:$0xff]
      %v1809 = vld [vmem:[%s9 + $0x88] sm:$0xff]
      %v1810 = vld [vmem:[%s9 + $0x90] sm:$0xff]
      %v1811 = vld [vmem:[%s9 + $0x98] sm:$0xff]
      %v1812 = vld [vmem:[%s9 + $0xa0] sm:$0xff]
      %v1813 = vld [vmem:[%s9 + $0xa8] sm:$0xff]
      %v1814 = vld [vmem:[%s9 + $0xb0] sm:$0xff]
      %v1815 = vld [vmem:[%s9 + $0xb8] sm:$0xff]
      %v1816 = vld [vmem:[%s9 + $0xc0] sm:$0xff]
      %v1817 = vld [vmem:[%s9 + $0xc8] sm:$0xff]
      %v1818 = vld [vmem:[%s9 + $0xd0] sm:$0xff]
      %v1819 = vld [vmem:[%s9 + $0xd8] sm:$0xff]
      %v1820 = vld [vmem:[%s9 + $0xe0] sm:$0xff]
      %v1821 = vld [vmem:[%s9 + $0xe8] sm:$0xff]
      %v1822 = vld [vmem:[%s9 + $0xf0] sm:$0xff]
      %v1823 = vld [vmem:[%s9 + $0xf8] sm:$0xff]
      %v1824 = vld [vmem:[%s9 + $0x100] sm:$0xff]
      %v1825 = vld [vmem:[%s9 + $0x108] sm:$0xff]
      %v1826 = vld [vmem:[%s9 + $0x110] sm:$0xff]
      %v1827 = vld [vmem:[%s9 + $0x118] sm:$0xff]
      %v1828 = vld [vmem:[%s9 + $0x120] sm:$0xff]
      %v1829 = vld [vmem:[%s9 + $0x128] sm:$0xff]
      %v1830 = vld [vmem:[%s9 + $0x130] sm:$0xff]
      %v1831 = vld [vmem:[%s9 + $0x138] sm:$0xff]
      %v1832 = vld [vmem:[%s9 + $0x140] sm:$0xff]
      %v1833 = vld [vmem:[%s9 + $0x148] sm:$0xff]
      %v1834 = vld [vmem:[%s9 + $0x150] sm:$0xff]
      %v1835 = vld [vmem:[%s9 + $0x158] sm:$0xff]
      %v1836 = vld [vmem:[%s9 + $0x160] sm:$0xff]
      %v1837 = vld [vmem:[%s9 + $0x168] sm:$0xff]
      %v1838 = vld [vmem:[%s9 + $0x170] sm:$0xff]
      %v1839 = vld [vmem:[%s9 + $0x178] sm:$0xff]
      %v1840 = vld [vmem:[%s9 + $0x180] sm:$0xff]
      %v1841 = vld [vmem:[%s9 + $0x188] sm:$0xff]
      %v1842 = vld [vmem:[%s9 + $0x190] sm:$0xff]
      %v1843 = vld [vmem:[%s9 + $0x198] sm:$0xff]
      %v1844 = vld [vmem:[%s9 + $0x1a0] sm:$0xff]
      %v1845 = vld [vmem:[%s9 + $0x1a8] sm:$0xff]
      %v1846 = vld [vmem:[%s9 + $0x1b0] sm:$0xff]
      %v1847 = vld [vmem:[%s9 + $0x1b8] sm:$0xff]
      %v1848 = vld [vmem:[%s9 + $0x1c0] sm:$0xff]
      %v1849 = vld [vmem:[%s9 + $0x1c8] sm:$0xff]
      %v1850 = vld [vmem:[%s9 + $0x1d0] sm:$0xff]
      %v1851 = vld [vmem:[%s9 + $0x1d8] sm:$0xff]
      %v1852 = vld [vmem:[%s9 + $0x1e0] sm:$0xff]
      %v1853 = vld [vmem:[%s9 + $0x1e8] sm:$0xff]
      %v1854 = vld [vmem:[%s9 + $0x1f0] sm:$0xff]
      %v1855 = vld [vmem:[%s9 + $0x1f8] sm:$0xff]
      %1856 = vmatpush.msra.mxu0 %v1807
      %1857 = vmatpush.msra.mxu0 %v1806
      %1858 = vmatpush.msra.mxu0 %v1805
      %1859 = vmatpush.msra.mxu0 %v1804
      %1860 = vmatpush.msra.mxu0 %v1803
      %1861 = vmatpush.msra.mxu0 %v1802
      %1862 = vmatpush.msra.mxu0 %v1801
      %1863 = vmatpush.msra.mxu0 %v1800
      %1864 = vmatpush.msra.mxu0 %v1799
      %1865 = vmatpush.msra.mxu0 %v1798
      %1866 = vmatpush.msra.mxu0 %v1797
      %1867 = vmatpush.msra.mxu0 %v1796
      %1868 = vmatpush.msra.mxu0 %v1795
      %1869 = vmatpush.msra.mxu0 %v1794
      %1870 = vmatpush.msra.mxu0 %v1793
      %1871 = vmatpush.msra.mxu0 %v1792
      %1872 = vmatmul.f32.gmra.mxu0 %v1728
      %v1873 = vpop.f32.mrf.mxu0
      %v1874 = vadd.f32 %v1536, %v1873
      %1875 = vmatmul.f32.gmra.mxu0 %v1732
      %v1876 = vpop.f32.mrf.mxu0
      %v1877 = vadd.f32 %v1539, %v1876
      %1878 = vmatmul.f32.gmra.mxu0 %v1736
      %v1879 = vpop.f32.mrf.mxu0
      %v1880 = vadd.f32 %v1542, %v1879
      %1881 = vmatmul.f32.gmra.mxu0 %v1740
      %v1882 = vpop.f32.mrf.mxu0
      %v1883 = vadd.f32 %v1545, %v1882
      %1884 = vmatmul.f32.gmra.mxu0 %v1744
      %v1885 = vpop.f32.mrf.mxu0
      %v1886 = vadd.f32 %v1548, %v1885
      %1887 = vmatmul.f32.gmra.mxu0 %v1748
      %v1888 = vpop.f32.mrf.mxu0
      %v1889 = vadd.f32 %v1551, %v1888
      %1890 = vmatmul.f32.gmra.mxu0 %v1752
      %v1891 = vpop.f32.mrf.mxu0
      %v1892 = vadd.f32 %v1554, %v1891
      %1893 = vmatmul.f32.gmra.mxu0 %v1756
      %v1894 = vpop.f32.mrf.mxu0
      %v1895 = vadd.f32 %v1557, %v1894
      %1896 = vmatmul.f32.gmra.mxu0 %v1760
      %v1897 = vpop.f32.mrf.mxu0
      %v1898 = vadd.f32 %v1560, %v1897
      %1899 = vmatmul.f32.gmra.mxu0 %v1764
      %v1900 = vpop.f32.mrf.mxu0
      %v1901 = vadd.f32 %v1563, %v1900
      %1902 = vmatmul.f32.gmra.mxu0 %v1768
      %v1903 = vpop.f32.mrf.mxu0
      %v1904 = vadd.f32 %v1566, %v1903
      %1905 = vmatmul.f32.gmra.mxu0 %v1772
      %v1906 = vpop.f32.mrf.mxu0
      %v1907 = vadd.f32 %v1569, %v1906
      %1908 = vmatmul.f32.gmra.mxu0 %v1776
      %v1909 = vpop.f32.mrf.mxu0
      %v1910 = vadd.f32 %v1572, %v1909
      %1911 = vmatmul.f32.gmra.mxu0 %v1780
      %v1912 = vpop.f32.mrf.mxu0
      %v1913 = vadd.f32 %v1575, %v1912
      %1914 = vmatmul.f32.gmra.mxu0 %v1784
      %v1915 = vpop.f32.mrf.mxu0
      %v1916 = vadd.f32 %v1578, %v1915
      %1917 = vmatmul.f32.gmra.mxu0 %v1788
      %v1918 = vpop.f32.mrf.mxu0
      %v1919 = vadd.f32 %v1581, %v1918
      %1920 = vdwg.mxu0
      %1921 = vmatpush.msra.mxu0 %v1823
      %1922 = vmatpush.msra.mxu0 %v1822
      %1923 = vmatpush.msra.mxu0 %v1821
      %1924 = vmatpush.msra.mxu0 %v1820
      %1925 = vmatpush.msra.mxu0 %v1819
      %1926 = vmatpush.msra.mxu0 %v1818
      %1927 = vmatpush.msra.mxu0 %v1817
      %1928 = vmatpush.msra.mxu0 %v1816
      %1929 = vmatpush.msra.mxu0 %v1815
      %1930 = vmatpush.msra.mxu0 %v1814
      %1931 = vmatpush.msra.mxu0 %v1813
      %1932 = vmatpush.msra.mxu0 %v1812
      %1933 = vmatpush.msra.mxu0 %v1811
      %1934 = vmatpush.msra.mxu0 %v1810
      %1935 = vmatpush.msra.mxu0 %v1809
      %1936 = vmatpush.msra.mxu0 %v1808
      %1937 = vmatmul.f32.gmra.mxu0 %v1729
      %v1938 = vpop.f32.mrf.mxu0
      %v1939 = vadd.f32 %v1874, %v1938
      %1940 = vmatmul.f32.gmra.mxu0 %v1733
      %v1941 = vpop.f32.mrf.mxu0
      %v1942 = vadd.f32 %v1877, %v1941
      %1943 = vmatmul.f32.gmra.mxu0 %v1737
      %v1944 = vpop.f32.mrf.mxu0
      %v1945 = vadd.f32 %v1880, %v1944
      %1946 = vmatmul.f32.gmra.mxu0 %v1741
      %v1947 = vpop.f32.mrf.mxu0
      %v1948 = vadd.f32 %v1883, %v1947
      %1949 = vmatmul.f32.gmra.mxu0 %v1745
      %v1950 = vpop.f32.mrf.mxu0
      %v1951 = vadd.f32 %v1886, %v1950
      %1952 = vmatmul.f32.gmra.mxu0 %v1749
      %v1953 = vpop.f32.mrf.mxu0
      %v1954 = vadd.f32 %v1889, %v1953
      %1955 = vmatmul.f32.gmra.mxu0 %v1753
      %v1956 = vpop.f32.mrf.mxu0
      %v1957 = vadd.f32 %v1892, %v1956
      %1958 = vmatmul.f32.gmra.mxu0 %v1757
      %v1959 = vpop.f32.mrf.mxu0
      %v1960 = vadd.f32 %v1895, %v1959
      %1961 = vmatmul.f32.gmra.mxu0 %v1761
      %v1962 = vpop.f32.mrf.mxu0
      %v1963 = vadd.f32 %v1898, %v1962
      %1964 = vmatmul.f32.gmra.mxu0 %v1765
      %v1965 = vpop.f32.mrf.mxu0
      %v1966 = vadd.f32 %v1901, %v1965
      %1967 = vmatmul.f32.gmra.mxu0 %v1769
      %v1968 = vpop.f32.mrf.mxu0
      %v1969 = vadd.f32 %v1904, %v1968
      %1970 = vmatmul.f32.gmra.mxu0 %v1773
      %v1971 = vpop.f32.mrf.mxu0
      %v1972 = vadd.f32 %v1907, %v1971
      %1973 = vmatmul.f32.gmra.mxu0 %v1777
      %v1974 = vpop.f32.mrf.mxu0
      %v1975 = vadd.f32 %v1910, %v1974
      %1976 = vmatmul.f32.gmra.mxu0 %v1781
      %v1977 = vpop.f32.mrf.mxu0
      %v1978 = vadd.f32 %v1913, %v1977
      %1979 = vmatmul.f32.gmra.mxu0 %v1785
      %v1980 = vpop.f32.mrf.mxu0
      %v1981 = vadd.f32 %v1916, %v1980
      %1982 = vmatmul.f32.gmra.mxu0 %v1789
      %v1983 = vpop.f32.mrf.mxu0
      %v1984 = vadd.f32 %v1919, %v1983
      %1985 = vdwg.mxu0
      %1986 = vmatpush.msra.mxu0 %v1839
      %1987 = vmatpush.msra.mxu0 %v1838
      %1988 = vmatpush.msra.mxu0 %v1837
      %1989 = vmatpush.msra.mxu0 %v1836
      %1990 = vmatpush.msra.mxu0 %v1835
      %1991 = vmatpush.msra.mxu0 %v1834
      %1992 = vmatpush.msra.mxu0 %v1833
      %1993 = vmatpush.msra.mxu0 %v1832
      %1994 = vmatpush.msra.mxu0 %v1831
      %1995 = vmatpush.msra.mxu0 %v1830
      %1996 = vmatpush.msra.mxu0 %v1829
      %1997 = vmatpush.msra.mxu0 %v1828
      %1998 = vmatpush.msra.mxu0 %v1827
      %1999 = vmatpush.msra.mxu0 %v1826
      %2000 = vmatpush.msra.mxu0 %v1825
      %2001 = vmatpush.msra.mxu0 %v1824
      %2002 = vmatmul.f32.gmra.mxu0 %v1730
      %v2003 = vpop.f32.mrf.mxu0
      %v2004 = vadd.f32 %v1939, %v2003
      %2005 = vmatmul.f32.gmra.mxu0 %v1734
      %v2006 = vpop.f32.mrf.mxu0
      %v2007 = vadd.f32 %v1942, %v2006
      %2008 = vmatmul.f32.gmra.mxu0 %v1738
      %v2009 = vpop.f32.mrf.mxu0
      %v2010 = vadd.f32 %v1945, %v2009
      %2011 = vmatmul.f32.gmra.mxu0 %v1742
      %v2012 = vpop.f32.mrf.mxu0
      %v2013 = vadd.f32 %v1948, %v2012
      %2014 = vmatmul.f32.gmra.mxu0 %v1746
      %v2015 = vpop.f32.mrf.mxu0
      %v2016 = vadd.f32 %v1951, %v2015
      %2017 = vmatmul.f32.gmra.mxu0 %v1750
      %v2018 = vpop.f32.mrf.mxu0
      %v2019 = vadd.f32 %v1954, %v2018
      %2020 = vmatmul.f32.gmra.mxu0 %v1754
      %v2021 = vpop.f32.mrf.mxu0
      %v2022 = vadd.f32 %v1957, %v2021
      %2023 = vmatmul.f32.gmra.mxu0 %v1758
      %v2024 = vpop.f32.mrf.mxu0
      %v2025 = vadd.f32 %v1960, %v2024
      %2026 = vmatmul.f32.gmra.mxu0 %v1762
      %v2027 = vpop.f32.mrf.mxu0
      %v2028 = vadd.f32 %v1963, %v2027
      %2029 = vmatmul.f32.gmra.mxu0 %v1766
      %v2030 = vpop.f32.mrf.mxu0
      %v2031 = vadd.f32 %v1966, %v2030
      %2032 = vmatmul.f32.gmra.mxu0 %v1770
      %v2033 = vpop.f32.mrf.mxu0
      %v2034 = vadd.f32 %v1969, %v2033
      %2035 = vmatmul.f32.gmra.mxu0 %v1774
      %v2036 = vpop.f32.mrf.mxu0
      %v2037 = vadd.f32 %v1972, %v2036
      %2038 = vmatmul.f32.gmra.mxu0 %v1778
      %v2039 = vpop.f32.mrf.mxu0
      %v2040 = vadd.f32 %v1975, %v2039
      %2041 = vmatmul.f32.gmra.mxu0 %v1782
      %v2042 = vpop.f32.mrf.mxu0
      %v2043 = vadd.f32 %v1978, %v2042
      %2044 = vmatmul.f32.gmra.mxu0 %v1786
      %v2045 = vpop.f32.mrf.mxu0
      %v2046 = vadd.f32 %v1981, %v2045
      %2047 = vmatmul.f32.gmra.mxu0 %v1790
      %v2048 = vpop.f32.mrf.mxu0
      %v2049 = vadd.f32 %v1984, %v2048
      %2050 = vdwg.mxu0
      %2051 = vmatpush.msra.mxu0 %v1855
      %2052 = vmatpush.msra.mxu0 %v1854
      %2053 = vmatpush.msra.mxu0 %v1853
      %2054 = vmatpush.msra.mxu0 %v1852
      %2055 = vmatpush.msra.mxu0 %v1851
      %2056 = vmatpush.msra.mxu0 %v1850
      %2057 = vmatpush.msra.mxu0 %v1849
      %2058 = vmatpush.msra.mxu0 %v1848
      %2059 = vmatpush.msra.mxu0 %v1847
      %2060 = vmatpush.msra.mxu0 %v1846
      %2061 = vmatpush.msra.mxu0 %v1845
      %2062 = vmatpush.msra.mxu0 %v1844
      %2063 = vmatpush.msra.mxu0 %v1843
      %2064 = vmatpush.msra.mxu0 %v1842
      %2065 = vmatpush.msra.mxu0 %v1841
      %2066 = vmatpush.msra.mxu0 %v1840
      %2067 = vmatmul.f32.gmra.mxu0 %v1731
      %v2068 = vpop.f32.mrf.mxu0
      %v2069 = vadd.f32 %v2004, %v2068
      %2070 = vmatmul.f32.gmra.mxu0 %v1735
      %v2071 = vpop.f32.mrf.mxu0
      %v2072 = vadd.f32 %v2007, %v2071
      %2073 = vmatmul.f32.gmra.mxu0 %v1739
      %v2074 = vpop.f32.mrf.mxu0
      %v2075 = vadd.f32 %v2010, %v2074
      %2076 = vmatmul.f32.gmra.mxu0 %v1743
      %v2077 = vpop.f32.mrf.mxu0
      %v2078 = vadd.f32 %v2013, %v2077
      %2079 = vmatmul.f32.gmra.mxu0 %v1747
      %v2080 = vpop.f32.mrf.mxu0
      %v2081 = vadd.f32 %v2016, %v2080
      %2082 = vmatmul.f32.gmra.mxu0 %v1751
      %v2083 = vpop.f32.mrf.mxu0
      %v2084 = vadd.f32 %v2019, %v2083
      %2085 = vmatmul.f32.gmra.mxu0 %v1755
      %v2086 = vpop.f32.mrf.mxu0
      %v2087 = vadd.f32 %v2022, %v2086
      %2088 = vmatmul.f32.gmra.mxu0 %v1759
      %v2089 = vpop.f32.mrf.mxu0
      %v2090 = vadd.f32 %v2025, %v2089
      %2091 = vmatmul.f32.gmra.mxu0 %v1763
      %v2092 = vpop.f32.mrf.mxu0
      %v2093 = vadd.f32 %v2028, %v2092
      %2094 = vmatmul.f32.gmra.mxu0 %v1767
      %v2095 = vpop.f32.mrf.mxu0
      %v2096 = vadd.f32 %v2031, %v2095
      %2097 = vmatmul.f32.gmra.mxu0 %v1771
      %v2098 = vpop.f32.mrf.mxu0
      %v2099 = vadd.f32 %v2034, %v2098
      %2100 = vmatmul.f32.gmra.mxu0 %v1775
      %v2101 = vpop.f32.mrf.mxu0
      %v2102 = vadd.f32 %v2037, %v2101
      %2103 = vmatmul.f32.gmra.mxu0 %v1779
      %v2104 = vpop.f32.mrf.mxu0
      %v2105 = vadd.f32 %v2040, %v2104
      %2106 = vmatmul.f32.gmra.mxu0 %v1783
      %v2107 = vpop.f32.mrf.mxu0
      %v2108 = vadd.f32 %v2043, %v2107
      %2109 = vmatmul.f32.gmra.mxu0 %v1787
      %v2110 = vpop.f32.mrf.mxu0
      %v2111 = vadd.f32 %v2046, %v2110
      %2112 = vmatmul.f32.gmra.mxu0 %v1791
      %v2113 = vpop.f32.mrf.mxu0
      %v2114 = vadd.f32 %v2049, %v2113
      %2115 = vdwg.mxu0
      %v2116 = vld [vmem:[%s7] sm:$0x1]
      %v2117 = vld [vmem:[%s8] sm:$0x1]
      %vm2118 = vcmask 130048
      %v2119 = vsel %vm2118, %v2069, 0.0
      %2120 = vadd.xlane.f32.xlu0 %v2119
      %v2121 = vpop.xlane.xlu0 %2120
      %v2122 = vsel %vm2118, %v2072, 0.0
      %2123 = vadd.xlane.f32.xlu0 %v2122
      %v2124 = vpop.xlane.xlu0 %2123
      %v2125 = vsel %vm2118, %v2075, 0.0
      %2126 = vadd.xlane.f32.xlu0 %v2125
      %v2127 = vpop.xlane.xlu0 %2126
      %v2128 = vsel %vm2118, %v2078, 0.0
      %2129 = vadd.xlane.f32.xlu0 %v2128
      %v2130 = vpop.xlane.xlu0 %2129
      %v2131 = vsel %vm2118, %v2081, 0.0
      %2132 = vadd.xlane.f32.xlu0 %v2131
      %v2133 = vpop.xlane.xlu0 %2132
      %v2134 = vsel %vm2118, %v2084, 0.0
      %2135 = vadd.xlane.f32.xlu0 %v2134
      %v2136 = vpop.xlane.xlu0 %2135
      %v2137 = vsel %vm2118, %v2087, 0.0
      %2138 = vadd.xlane.f32.xlu0 %v2137
      %v2139 = vpop.xlane.xlu0 %2138
      %v2140 = vsel %vm2118, %v2090, 0.0
      %2141 = vadd.xlane.f32.xlu0 %v2140
      %v2142 = vpop.xlane.xlu0 %2141
      %v2143 = vsel %vm2118, %v2093, 0.0
      %2144 = vadd.xlane.f32.xlu0 %v2143
      %v2145 = vpop.xlane.xlu0 %2144
      %v2146 = vsel %vm2118, %v2096, 0.0
      %2147 = vadd.xlane.f32.xlu0 %v2146
      %v2148 = vpop.xlane.xlu0 %2147
      %v2149 = vsel %vm2118, %v2099, 0.0
      %2150 = vadd.xlane.f32.xlu0 %v2149
      %v2151 = vpop.xlane.xlu0 %2150
      %v2152 = vsel %vm2118, %v2102, 0.0
      %2153 = vadd.xlane.f32.xlu0 %v2152
      %v2154 = vpop.xlane.xlu0 %2153
      %v2155 = vsel %vm2118, %v2105, 0.0
      %2156 = vadd.xlane.f32.xlu0 %v2155
      %v2157 = vpop.xlane.xlu0 %2156
      %v2158 = vsel %vm2118, %v2108, 0.0
      %2159 = vadd.xlane.f32.xlu0 %v2158
      %v2160 = vpop.xlane.xlu0 %2159
      %v2161 = vsel %vm2118, %v2111, 0.0
      %2162 = vadd.xlane.f32.xlu0 %v2161
      %v2163 = vpop.xlane.xlu0 %2162
      %v2164 = vsel %vm2118, %v2114, 0.0
      %2165 = vadd.xlane.f32.xlu0 %v2164
      %v2166 = vpop.xlane.xlu0 %2165
      %v2167 = vrcp.pop 16.0
      %v2168 = vmul.f32 16.0, %v2167
      %v2169 = vsub.f32 1.0, %v2168
      %v2170 = vmul.f32 %v2167, %v2169
      %v2171 = vadd.f32 %v2167, %v2170
      %vm2172 = vweird.f32 %v2167
      %v2173 = vsel %vm2172, %v2167, %v2171
      %v2174 = vmul.f32 %v2121, %v2173
      %v2175 = vmul.f32 %v2124, %v2173
      %v2176 = vmul.f32 %v2127, %v2173
      %v2177 = vmul.f32 %v2130, %v2173
      %v2178 = vmul.f32 %v2133, %v2173
      %v2179 = vmul.f32 %v2136, %v2173
      %v2180 = vmul.f32 %v2139, %v2173
      %v2181 = vmul.f32 %v2142, %v2173
      %v2182 = vmul.f32 %v2145, %v2173
      %v2183 = vmul.f32 %v2148, %v2173
      %v2184 = vmul.f32 %v2151, %v2173
      %v2185 = vmul.f32 %v2154, %v2173
      %v2186 = vmul.f32 %v2157, %v2173
      %v2187 = vmul.f32 %v2160, %v2173
      %v2188 = vmul.f32 %v2163, %v2173
      %v2189 = vmul.f32 %v2166, %v2173
      %v2190 = vsub.f32 %v2069, %v2174
      %v2191 = vsub.f32 %v2072, %v2175
      %v2192 = vsub.f32 %v2075, %v2176
      %v2193 = vsub.f32 %v2078, %v2177
      %v2194 = vsub.f32 %v2081, %v2178
      %v2195 = vsub.f32 %v2084, %v2179
      %v2196 = vsub.f32 %v2087, %v2180
      %v2197 = vsub.f32 %v2090, %v2181
      %v2198 = vsub.f32 %v2093, %v2182
      %v2199 = vsub.f32 %v2096, %v2183
      %v2200 = vsub.f32 %v2099, %v2184
      %v2201 = vsub.f32 %v2102, %v2185
      %v2202 = vsub.f32 %v2105, %v2186
      %v2203 = vsub.f32 %v2108, %v2187
      %v2204 = vsub.f32 %v2111, %v2188
      %v2205 = vsub.f32 %v2114, %v2189
      %v2206 = vmul.f32 %v2190, %v2190
      %v2207 = vmul.f32 %v2191, %v2191
      %v2208 = vmul.f32 %v2192, %v2192
      %v2209 = vmul.f32 %v2193, %v2193
      %v2210 = vmul.f32 %v2194, %v2194
      %v2211 = vmul.f32 %v2195, %v2195
      %v2212 = vmul.f32 %v2196, %v2196
      %v2213 = vmul.f32 %v2197, %v2197
      %v2214 = vmul.f32 %v2198, %v2198
      %v2215 = vmul.f32 %v2199, %v2199
      %v2216 = vmul.f32 %v2200, %v2200
      %v2217 = vmul.f32 %v2201, %v2201
      %v2218 = vmul.f32 %v2202, %v2202
      %v2219 = vmul.f32 %v2203, %v2203
      %v2220 = vmul.f32 %v2204, %v2204
      %v2221 = vmul.f32 %v2205, %v2205
      %v2222 = vsel %vm2118, %v2206, 0.0
      %2223 = vadd.xlane.f32.xlu0 %v2222
      %v2224 = vpop.xlane.xlu0 %2223
      %v2225 = vsel %vm2118, %v2207, 0.0
      %2226 = vadd.xlane.f32.xlu0 %v2225
      %v2227 = vpop.xlane.xlu0 %2226
      %v2228 = vsel %vm2118, %v2208, 0.0
      %2229 = vadd.xlane.f32.xlu0 %v2228
      %v2230 = vpop.xlane.xlu0 %2229
      %v2231 = vsel %vm2118, %v2209, 0.0
      %2232 = vadd.xlane.f32.xlu0 %v2231
      %v2233 = vpop.xlane.xlu0 %2232
      %v2234 = vsel %vm2118, %v2210, 0.0
      %2235 = vadd.xlane.f32.xlu0 %v2234
      %v2236 = vpop.xlane.xlu0 %2235
      %v2237 = vsel %vm2118, %v2211, 0.0
      %2238 = vadd.xlane.f32.xlu0 %v2237
      %v2239 = vpop.xlane.xlu0 %2238
      %v2240 = vsel %vm2118, %v2212, 0.0
      %2241 = vadd.xlane.f32.xlu0 %v2240
      %v2242 = vpop.xlane.xlu0 %2241
      %v2243 = vsel %vm2118, %v2213, 0.0
      %2244 = vadd.xlane.f32.xlu0 %v2243
      %v2245 = vpop.xlane.xlu0 %2244
      %v2246 = vsel %vm2118, %v2214, 0.0
      %2247 = vadd.xlane.f32.xlu0 %v2246
      %v2248 = vpop.xlane.xlu0 %2247
      %v2249 = vsel %vm2118, %v2215, 0.0
      %2250 = vadd.xlane.f32.xlu0 %v2249
      %v2251 = vpop.xlane.xlu0 %2250
      %v2252 = vsel %vm2118, %v2216, 0.0
      %2253 = vadd.xlane.f32.xlu0 %v2252
      %v2254 = vpop.xlane.xlu0 %2253
      %v2255 = vsel %vm2118, %v2217, 0.0
      %2256 = vadd.xlane.f32.xlu0 %v2255
      %v2257 = vpop.xlane.xlu0 %2256
      %v2258 = vsel %vm2118, %v2218, 0.0
      %2259 = vadd.xlane.f32.xlu0 %v2258
      %v2260 = vpop.xlane.xlu0 %2259
      %v2261 = vsel %vm2118, %v2219, 0.0
      %2262 = vadd.xlane.f32.xlu0 %v2261
      %v2263 = vpop.xlane.xlu0 %2262
      %v2264 = vsel %vm2118, %v2220, 0.0
      %2265 = vadd.xlane.f32.xlu0 %v2264
      %v2266 = vpop.xlane.xlu0 %2265
      %v2267 = vsel %vm2118, %v2221, 0.0
      %2268 = vadd.xlane.f32.xlu0 %v2267
      %v2269 = vpop.xlane.xlu0 %2268
      %v2270 = vmul.f32 %v2224, %v2173
      %v2271 = vmul.f32 %v2227, %v2173
      %v2272 = vmul.f32 %v2230, %v2173
      %v2273 = vmul.f32 %v2233, %v2173
      %v2274 = vmul.f32 %v2236, %v2173
      %v2275 = vmul.f32 %v2239, %v2173
      %v2276 = vmul.f32 %v2242, %v2173
      %v2277 = vmul.f32 %v2245, %v2173
      %v2278 = vmul.f32 %v2248, %v2173
      %v2279 = vmul.f32 %v2251, %v2173
      %v2280 = vmul.f32 %v2254, %v2173
      %v2281 = vmul.f32 %v2257, %v2173
      %v2282 = vmul.f32 %v2260, %v2173
      %v2283 = vmul.f32 %v2263, %v2173
      %v2284 = vmul.f32 %v2266, %v2173
      %v2285 = vmul.f32 %v2269, %v2173
      %v2286 = vadd.f32 %v2270, 1e-05
      %v2287 = vadd.f32 %v2271, 1e-05
      %v2288 = vadd.f32 %v2272, 1e-05
      %v2289 = vadd.f32 %v2273, 1e-05
      %v2290 = vadd.f32 %v2274, 1e-05
      %v2291 = vadd.f32 %v2275, 1e-05
      %v2292 = vadd.f32 %v2276, 1e-05
      %v2293 = vadd.f32 %v2277, 1e-05
      %v2294 = vadd.f32 %v2278, 1e-05
      %v2295 = vadd.f32 %v2279, 1e-05
      %v2296 = vadd.f32 %v2280, 1e-05
      %v2297 = vadd.f32 %v2281, 1e-05
      %v2298 = vadd.f32 %v2282, 1e-05
      %v2299 = vadd.f32 %v2283, 1e-05
      %v2300 = vadd.f32 %v2284, 1e-05
      %v2301 = vadd.f32 %v2285, 1e-05
      %v2302 = vrsqrt.pop %v2286
      %v2303 = vmul.f32 %v2302, %v2286
      %v2304 = vmul.f32 %v2303, %v2302
      %v2305 = vmul.f32 0.5, %v2304
      %v2306 = vsub.f32 1.5, %v2305
      %v2307 = vmul.f32 %v2302, %v2306
      %vm2308 = vweird.f32 %v2286
      %vm2309 = vweird.f32 %v2302
      %vm2310 = vmor %vm2308, %vm2309
      %v2311 = vsel %vm2310, %v2302, %v2307
      %v2312 = vrsqrt.pop %v2287
      %v2313 = vmul.f32 %v2312, %v2287
      %v2314 = vmul.f32 %v2313, %v2312
      %v2315 = vmul.f32 0.5, %v2314
      %v2316 = vsub.f32 1.5, %v2315
      %v2317 = vmul.f32 %v2312, %v2316
      %vm2318 = vweird.f32 %v2287
      %vm2319 = vweird.f32 %v2312
      %vm2320 = vmor %vm2318, %vm2319
      %v2321 = vsel %vm2320, %v2312, %v2317
      %v2322 = vrsqrt.pop %v2288
      %v2323 = vmul.f32 %v2322, %v2288
      %v2324 = vmul.f32 %v2323, %v2322
      %v2325 = vmul.f32 0.5, %v2324
      %v2326 = vsub.f32 1.5, %v2325
      %v2327 = vmul.f32 %v2322, %v2326
      %vm2328 = vweird.f32 %v2288
      %vm2329 = vweird.f32 %v2322
      %vm2330 = vmor %vm2328, %vm2329
      %v2331 = vsel %vm2330, %v2322, %v2327
      %v2332 = vrsqrt.pop %v2289
      %v2333 = vmul.f32 %v2332, %v2289
      %v2334 = vmul.f32 %v2333, %v2332
      %v2335 = vmul.f32 0.5, %v2334
      %v2336 = vsub.f32 1.5, %v2335
      %v2337 = vmul.f32 %v2332, %v2336
      %vm2338 = vweird.f32 %v2289
      %vm2339 = vweird.f32 %v2332
      %vm2340 = vmor %vm2338, %vm2339
      %v2341 = vsel %vm2340, %v2332, %v2337
      %v2342 = vrsqrt.pop %v2290
      %v2343 = vmul.f32 %v2342, %v2290
      %v2344 = vmul.f32 %v2343, %v2342
      %v2345 = vmul.f32 0.5, %v2344
      %v2346 = vsub.f32 1.5, %v2345
      %v2347 = vmul.f32 %v2342, %v2346
      %vm2348 = vweird.f32 %v2290
      %vm2349 = vweird.f32 %v2342
      %vm2350 = vmor %vm2348, %vm2349
      %v2351 = vsel %vm2350, %v2342, %v2347
      %v2352 = vrsqrt.pop %v2291
      %v2353 = vmul.f32 %v2352, %v2291
      %v2354 = vmul.f32 %v2353, %v2352
      %v2355 = vmul.f32 0.5, %v2354
      %v2356 = vsub.f32 1.5, %v2355
      %v2357 = vmul.f32 %v2352, %v2356
      %vm2358 = vweird.f32 %v2291
      %vm2359 = vweird.f32 %v2352
      %vm2360 = vmor %vm2358, %vm2359
      %v2361 = vsel %vm2360, %v2352, %v2357
      %v2362 = vrsqrt.pop %v2292
      %v2363 = vmul.f32 %v2362, %v2292
      %v2364 = vmul.f32 %v2363, %v2362
      %v2365 = vmul.f32 0.5, %v2364
      %v2366 = vsub.f32 1.5, %v2365
      %v2367 = vmul.f32 %v2362, %v2366
      %vm2368 = vweird.f32 %v2292
      %vm2369 = vweird.f32 %v2362
      %vm2370 = vmor %vm2368, %vm2369
      %v2371 = vsel %vm2370, %v2362, %v2367
      %v2372 = vrsqrt.pop %v2293
      %v2373 = vmul.f32 %v2372, %v2293
      %v2374 = vmul.f32 %v2373, %v2372
      %v2375 = vmul.f32 0.5, %v2374
      %v2376 = vsub.f32 1.5, %v2375
      %v2377 = vmul.f32 %v2372, %v2376
      %vm2378 = vweird.f32 %v2293
      %vm2379 = vweird.f32 %v2372
      %vm2380 = vmor %vm2378, %vm2379
      %v2381 = vsel %vm2380, %v2372, %v2377
      %v2382 = vrsqrt.pop %v2294
      %v2383 = vmul.f32 %v2382, %v2294
      %v2384 = vmul.f32 %v2383, %v2382
      %v2385 = vmul.f32 0.5, %v2384
      %v2386 = vsub.f32 1.5, %v2385
      %v2387 = vmul.f32 %v2382, %v2386
      %vm2388 = vweird.f32 %v2294
      %vm2389 = vweird.f32 %v2382
      %vm2390 = vmor %vm2388, %vm2389
      %v2391 = vsel %vm2390, %v2382, %v2387
      %v2392 = vrsqrt.pop %v2295
      %v2393 = vmul.f32 %v2392, %v2295
      %v2394 = vmul.f32 %v2393, %v2392
      %v2395 = vmul.f32 0.5, %v2394
      %v2396 = vsub.f32 1.5, %v2395
      %v2397 = vmul.f32 %v2392, %v2396
      %vm2398 = vweird.f32 %v2295
      %vm2399 = vweird.f32 %v2392
      %vm2400 = vmor %vm2398, %vm2399
      %v2401 = vsel %vm2400, %v2392, %v2397
      %v2402 = vrsqrt.pop %v2296
      %v2403 = vmul.f32 %v2402, %v2296
      %v2404 = vmul.f32 %v2403, %v2402
      %v2405 = vmul.f32 0.5, %v2404
      %v2406 = vsub.f32 1.5, %v2405
      %v2407 = vmul.f32 %v2402, %v2406
      %vm2408 = vweird.f32 %v2296
      %vm2409 = vweird.f32 %v2402
      %vm2410 = vmor %vm2408, %vm2409
      %v2411 = vsel %vm2410, %v2402, %v2407
      %v2412 = vrsqrt.pop %v2297
      %v2413 = vmul.f32 %v2412, %v2297
      %v2414 = vmul.f32 %v2413, %v2412
      %v2415 = vmul.f32 0.5, %v2414
      %v2416 = vsub.f32 1.5, %v2415
      %v2417 = vmul.f32 %v2412, %v2416
      %vm2418 = vweird.f32 %v2297
      %vm2419 = vweird.f32 %v2412
      %vm2420 = vmor %vm2418, %vm2419
      %v2421 = vsel %vm2420, %v2412, %v2417
      %v2422 = vrsqrt.pop %v2298
      %v2423 = vmul.f32 %v2422, %v2298
      %v2424 = vmul.f32 %v2423, %v2422
      %v2425 = vmul.f32 0.5, %v2424
      %v2426 = vsub.f32 1.5, %v2425
      %v2427 = vmul.f32 %v2422, %v2426
      %vm2428 = vweird.f32 %v2298
      %vm2429 = vweird.f32 %v2422
      %vm2430 = vmor %vm2428, %vm2429
      %v2431 = vsel %vm2430, %v2422, %v2427
      %v2432 = vrsqrt.pop %v2299
      %v2433 = vmul.f32 %v2432, %v2299
      %v2434 = vmul.f32 %v2433, %v2432
      %v2435 = vmul.f32 0.5, %v2434
      %v2436 = vsub.f32 1.5, %v2435
      %v2437 = vmul.f32 %v2432, %v2436
      %vm2438 = vweird.f32 %v2299
      %vm2439 = vweird.f32 %v2432
      %vm2440 = vmor %vm2438, %vm2439
      %v2441 = vsel %vm2440, %v2432, %v2437
      %v2442 = vrsqrt.pop %v2300
      %v2443 = vmul.f32 %v2442, %v2300
      %v2444 = vmul.f32 %v2443, %v2442
      %v2445 = vmul.f32 0.5, %v2444
      %v2446 = vsub.f32 1.5, %v2445
      %v2447 = vmul.f32 %v2442, %v2446
      %vm2448 = vweird.f32 %v2300
      %vm2449 = vweird.f32 %v2442
      %vm2450 = vmor %vm2448, %vm2449
      %v2451 = vsel %vm2450, %v2442, %v2447
      %v2452 = vrsqrt.pop %v2301
      %v2453 = vmul.f32 %v2452, %v2301
      %v2454 = vmul.f32 %v2453, %v2452
      %v2455 = vmul.f32 0.5, %v2454
      %v2456 = vsub.f32 1.5, %v2455
      %v2457 = vmul.f32 %v2452, %v2456
      %vm2458 = vweird.f32 %v2301
      %vm2459 = vweird.f32 %v2452
      %vm2460 = vmor %vm2458, %vm2459
      %v2461 = vsel %vm2460, %v2452, %v2457
      %v2462 = vmul.f32 %v2190, %v2311
      %v2463 = vmul.f32 %v2191, %v2321
      %v2464 = vmul.f32 %v2192, %v2331
      %v2465 = vmul.f32 %v2193, %v2341
      %v2466 = vmul.f32 %v2194, %v2351
      %v2467 = vmul.f32 %v2195, %v2361
      %v2468 = vmul.f32 %v2196, %v2371
      %v2469 = vmul.f32 %v2197, %v2381
      %v2470 = vmul.f32 %v2198, %v2391
      %v2471 = vmul.f32 %v2199, %v2401
      %v2472 = vmul.f32 %v2200, %v2411
      %v2473 = vmul.f32 %v2201, %v2421
      %v2474 = vmul.f32 %v2202, %v2431
      %v2475 = vmul.f32 %v2203, %v2441
      %v2476 = vmul.f32 %v2204, %v2451
      %v2477 = vmul.f32 %v2205, %v2461
      %v2479 = vperm.slane %v2116, 0
      %v2481 = vmul.f32 %v2462, %v2479
      %v2482 = vmul.f32 %v2463, %v2479
      %v2483 = vmul.f32 %v2464, %v2479
      %v2484 = vmul.f32 %v2465, %v2479
      %v2485 = vmul.f32 %v2466, %v2479
      %v2486 = vmul.f32 %v2467, %v2479
      %v2487 = vmul.f32 %v2468, %v2479
      %v2488 = vmul.f32 %v2469, %v2479
      %v2489 = vmul.f32 %v2470, %v2479
      %v2490 = vmul.f32 %v2471, %v2479
      %v2491 = vmul.f32 %v2472, %v2479
      %v2492 = vmul.f32 %v2473, %v2479
      %v2493 = vmul.f32 %v2474, %v2479
      %v2494 = vmul.f32 %v2475, %v2479
      %v2495 = vmul.f32 %v2476, %v2479
      %v2496 = vmul.f32 %v2477, %v2479
      %v2498 = vperm.slane %v2117, 0
      %v2500 = vadd.f32 %v2481, %v2498
      %v2501 = vadd.f32 %v2482, %v2498
      %v2502 = vadd.f32 %v2483, %v2498
      %v2503 = vadd.f32 %v2484, %v2498
      %v2504 = vadd.f32 %v2485, %v2498
      %v2505 = vadd.f32 %v2486, %v2498
      %v2506 = vadd.f32 %v2487, %v2498
      %v2507 = vadd.f32 %v2488, %v2498
      %v2508 = vadd.f32 %v2489, %v2498
      %v2509 = vadd.f32 %v2490, %v2498
      %v2510 = vadd.f32 %v2491, %v2498
      %v2511 = vadd.f32 %v2492, %v2498
      %v2512 = vadd.f32 %v2493, %v2498
      %v2513 = vadd.f32 %v2494, %v2498
      %v2514 = vadd.f32 %v2495, %v2498
      %v2515 = vadd.f32 %v2496, %v2498
      %v2516 = vmax.f32 %v2500, 0.0
      %v2517 = vmax.f32 %v2501, 0.0
      %v2518 = vmax.f32 %v2502, 0.0
      %v2519 = vmax.f32 %v2503, 0.0
      %v2520 = vmax.f32 %v2504, 0.0
      %v2521 = vmax.f32 %v2505, 0.0
      %v2522 = vmax.f32 %v2506, 0.0
      %v2523 = vmax.f32 %v2507, 0.0
      %v2524 = vmax.f32 %v2508, 0.0
      %v2525 = vmax.f32 %v2509, 0.0
      %v2526 = vmax.f32 %v2510, 0.0
      %v2527 = vmax.f32 %v2511, 0.0
      %v2528 = vmax.f32 %v2512, 0.0
      %v2529 = vmax.f32 %v2513, 0.0
      %v2530 = vmax.f32 %v2514, 0.0
      %v2531 = vmax.f32 %v2515, 0.0
      %2548 = vrot.lane.b32.xlu0 %v2516, 16
      %v2549 = vpop.permute.xlu0 %2548
      %2550 = vrot.lane.b32.xlu0 %v2517, 16
      %v2551 = vpop.permute.xlu0 %2550
      %2552 = vrot.lane.b32.xlu0 %v2518, 16
      %v2553 = vpop.permute.xlu0 %2552
      %2554 = vrot.lane.b32.xlu0 %v2519, 16
      %v2555 = vpop.permute.xlu0 %2554
      %2556 = vrot.lane.b32.xlu0 %v2520, 16
      %v2557 = vpop.permute.xlu0 %2556
      %2558 = vrot.lane.b32.xlu0 %v2521, 16
      %v2559 = vpop.permute.xlu0 %2558
      %2560 = vrot.lane.b32.xlu0 %v2522, 16
      %v2561 = vpop.permute.xlu0 %2560
      %2562 = vrot.lane.b32.xlu0 %v2523, 16
      %v2563 = vpop.permute.xlu0 %2562
      %2564 = vrot.lane.b32.xlu0 %v2524, 16
      %v2565 = vpop.permute.xlu0 %2564
      %2566 = vrot.lane.b32.xlu0 %v2525, 16
      %v2567 = vpop.permute.xlu0 %2566
      %2568 = vrot.lane.b32.xlu0 %v2526, 16
      %v2569 = vpop.permute.xlu0 %2568
      %2570 = vrot.lane.b32.xlu0 %v2527, 16
      %v2571 = vpop.permute.xlu0 %2570
      %2572 = vrot.lane.b32.xlu0 %v2528, 16
      %v2573 = vpop.permute.xlu0 %2572
      %2574 = vrot.lane.b32.xlu0 %v2529, 16
      %v2575 = vpop.permute.xlu0 %2574
      %2576 = vrot.lane.b32.xlu0 %v2530, 16
      %v2577 = vpop.permute.xlu0 %2576
      %2578 = vrot.lane.b32.xlu0 %v2531, 16
      %v2579 = vpop.permute.xlu0 %2578
      %2596 = vrot.lane.b32.xlu0 %v2516, 32
      %v2597 = vpop.permute.xlu0 %2596
      %2598 = vrot.lane.b32.xlu0 %v2517, 32
      %v2599 = vpop.permute.xlu0 %2598
      %2600 = vrot.lane.b32.xlu0 %v2518, 32
      %v2601 = vpop.permute.xlu0 %2600
      %2602 = vrot.lane.b32.xlu0 %v2519, 32
      %v2603 = vpop.permute.xlu0 %2602
      %2604 = vrot.lane.b32.xlu0 %v2520, 32
      %v2605 = vpop.permute.xlu0 %2604
      %2606 = vrot.lane.b32.xlu0 %v2521, 32
      %v2607 = vpop.permute.xlu0 %2606
      %2608 = vrot.lane.b32.xlu0 %v2522, 32
      %v2609 = vpop.permute.xlu0 %2608
      %2610 = vrot.lane.b32.xlu0 %v2523, 32
      %v2611 = vpop.permute.xlu0 %2610
      %2612 = vrot.lane.b32.xlu0 %v2524, 32
      %v2613 = vpop.permute.xlu0 %2612
      %2614 = vrot.lane.b32.xlu0 %v2525, 32
      %v2615 = vpop.permute.xlu0 %2614
      %2616 = vrot.lane.b32.xlu0 %v2526, 32
      %v2617 = vpop.permute.xlu0 %2616
      %2618 = vrot.lane.b32.xlu0 %v2527, 32
      %v2619 = vpop.permute.xlu0 %2618
      %2620 = vrot.lane.b32.xlu0 %v2528, 32
      %v2621 = vpop.permute.xlu0 %2620
      %2622 = vrot.lane.b32.xlu0 %v2529, 32
      %v2623 = vpop.permute.xlu0 %2622
      %2624 = vrot.lane.b32.xlu0 %v2530, 32
      %v2625 = vpop.permute.xlu0 %2624
      %2626 = vrot.lane.b32.xlu0 %v2531, 32
      %v2627 = vpop.permute.xlu0 %2626
      %2644 = vrot.lane.b32.xlu0 %v2516, 48
      %v2645 = vpop.permute.xlu0 %2644
      %2646 = vrot.lane.b32.xlu0 %v2517, 48
      %v2647 = vpop.permute.xlu0 %2646
      %2648 = vrot.lane.b32.xlu0 %v2518, 48
      %v2649 = vpop.permute.xlu0 %2648
      %2650 = vrot.lane.b32.xlu0 %v2519, 48
      %v2651 = vpop.permute.xlu0 %2650
      %2652 = vrot.lane.b32.xlu0 %v2520, 48
      %v2653 = vpop.permute.xlu0 %2652
      %2654 = vrot.lane.b32.xlu0 %v2521, 48
      %v2655 = vpop.permute.xlu0 %2654
      %2656 = vrot.lane.b32.xlu0 %v2522, 48
      %v2657 = vpop.permute.xlu0 %2656
      %2658 = vrot.lane.b32.xlu0 %v2523, 48
      %v2659 = vpop.permute.xlu0 %2658
      %2660 = vrot.lane.b32.xlu0 %v2524, 48
      %v2661 = vpop.permute.xlu0 %2660
      %2662 = vrot.lane.b32.xlu0 %v2525, 48
      %v2663 = vpop.permute.xlu0 %2662
      %2664 = vrot.lane.b32.xlu0 %v2526, 48
      %v2665 = vpop.permute.xlu0 %2664
      %2666 = vrot.lane.b32.xlu0 %v2527, 48
      %v2667 = vpop.permute.xlu0 %2666
      %2668 = vrot.lane.b32.xlu0 %v2528, 48
      %v2669 = vpop.permute.xlu0 %2668
      %2670 = vrot.lane.b32.xlu0 %v2529, 48
      %v2671 = vpop.permute.xlu0 %2670
      %2672 = vrot.lane.b32.xlu0 %v2530, 48
      %v2673 = vpop.permute.xlu0 %2672
      %2674 = vrot.lane.b32.xlu0 %v2531, 48
      %v2675 = vpop.permute.xlu0 %2674
      %2692 = vrot.lane.b32.xlu0 %v2516, 64
      %v2693 = vpop.permute.xlu0 %2692
      %2694 = vrot.lane.b32.xlu0 %v2517, 64
      %v2695 = vpop.permute.xlu0 %2694
      %2696 = vrot.lane.b32.xlu0 %v2518, 64
      %v2697 = vpop.permute.xlu0 %2696
      %2698 = vrot.lane.b32.xlu0 %v2519, 64
      %v2699 = vpop.permute.xlu0 %2698
      %2700 = vrot.lane.b32.xlu0 %v2520, 64
      %v2701 = vpop.permute.xlu0 %2700
      %2702 = vrot.lane.b32.xlu0 %v2521, 64
      %v2703 = vpop.permute.xlu0 %2702
      %2704 = vrot.lane.b32.xlu0 %v2522, 64
      %v2705 = vpop.permute.xlu0 %2704
      %2706 = vrot.lane.b32.xlu0 %v2523, 64
      %v2707 = vpop.permute.xlu0 %2706
      %2708 = vrot.lane.b32.xlu0 %v2524, 64
      %v2709 = vpop.permute.xlu0 %2708
      %2710 = vrot.lane.b32.xlu0 %v2525, 64
      %v2711 = vpop.permute.xlu0 %2710
      %2712 = vrot.lane.b32.xlu0 %v2526, 64
      %v2713 = vpop.permute.xlu0 %2712
      %2714 = vrot.lane.b32.xlu0 %v2527, 64
      %v2715 = vpop.permute.xlu0 %2714
      %2716 = vrot.lane.b32.xlu0 %v2528, 64
      %v2717 = vpop.permute.xlu0 %2716
      %2718 = vrot.lane.b32.xlu0 %v2529, 64
      %v2719 = vpop.permute.xlu0 %2718
      %2720 = vrot.lane.b32.xlu0 %v2530, 64
      %v2721 = vpop.permute.xlu0 %2720
      %2722 = vrot.lane.b32.xlu0 %v2531, 64
      %v2723 = vpop.permute.xlu0 %2722
      %2740 = vrot.lane.b32.xlu0 %v2516, 80
      %v2741 = vpop.permute.xlu0 %2740
      %2742 = vrot.lane.b32.xlu0 %v2517, 80
      %v2743 = vpop.permute.xlu0 %2742
      %2744 = vrot.lane.b32.xlu0 %v2518, 80
      %v2745 = vpop.permute.xlu0 %2744
      %2746 = vrot.lane.b32.xlu0 %v2519, 80
      %v2747 = vpop.permute.xlu0 %2746
      %2748 = vrot.lane.b32.xlu0 %v2520, 80
      %v2749 = vpop.permute.xlu0 %2748
      %2750 = vrot.lane.b32.xlu0 %v2521, 80
      %v2751 = vpop.permute.xlu0 %2750
      %2752 = vrot.lane.b32.xlu0 %v2522, 80
      %v2753 = vpop.permute.xlu0 %2752
      %2754 = vrot.lane.b32.xlu0 %v2523, 80
      %v2755 = vpop.permute.xlu0 %2754
      %2756 = vrot.lane.b32.xlu0 %v2524, 80
      %v2757 = vpop.permute.xlu0 %2756
      %2758 = vrot.lane.b32.xlu0 %v2525, 80
      %v2759 = vpop.permute.xlu0 %2758
      %2760 = vrot.lane.b32.xlu0 %v2526, 80
      %v2761 = vpop.permute.xlu0 %2760
      %2762 = vrot.lane.b32.xlu0 %v2527, 80
      %v2763 = vpop.permute.xlu0 %2762
      %2764 = vrot.lane.b32.xlu0 %v2528, 80
      %v2765 = vpop.permute.xlu0 %2764
      %2766 = vrot.lane.b32.xlu0 %v2529, 80
      %v2767 = vpop.permute.xlu0 %2766
      %2768 = vrot.lane.b32.xlu0 %v2530, 80
      %v2769 = vpop.permute.xlu0 %2768
      %2770 = vrot.lane.b32.xlu0 %v2531, 80
      %v2771 = vpop.permute.xlu0 %2770
      %2788 = vrot.lane.b32.xlu0 %v2516, 96
      %v2789 = vpop.permute.xlu0 %2788
      %2790 = vrot.lane.b32.xlu0 %v2517, 96
      %v2791 = vpop.permute.xlu0 %2790
      %2792 = vrot.lane.b32.xlu0 %v2518, 96
      %v2793 = vpop.permute.xlu0 %2792
      %2794 = vrot.lane.b32.xlu0 %v2519, 96
      %v2795 = vpop.permute.xlu0 %2794
      %2796 = vrot.lane.b32.xlu0 %v2520, 96
      %v2797 = vpop.permute.xlu0 %2796
      %2798 = vrot.lane.b32.xlu0 %v2521, 96
      %v2799 = vpop.permute.xlu0 %2798
      %2800 = vrot.lane.b32.xlu0 %v2522, 96
      %v2801 = vpop.permute.xlu0 %2800
      %2802 = vrot.lane.b32.xlu0 %v2523, 96
      %v2803 = vpop.permute.xlu0 %2802
      %2804 = vrot.lane.b32.xlu0 %v2524, 96
      %v2805 = vpop.permute.xlu0 %2804
      %2806 = vrot.lane.b32.xlu0 %v2525, 96
      %v2807 = vpop.permute.xlu0 %2806
      %2808 = vrot.lane.b32.xlu0 %v2526, 96
      %v2809 = vpop.permute.xlu0 %2808
      %2810 = vrot.lane.b32.xlu0 %v2527, 96
      %v2811 = vpop.permute.xlu0 %2810
      %2812 = vrot.lane.b32.xlu0 %v2528, 96
      %v2813 = vpop.permute.xlu0 %2812
      %2814 = vrot.lane.b32.xlu0 %v2529, 96
      %v2815 = vpop.permute.xlu0 %2814
      %2816 = vrot.lane.b32.xlu0 %v2530, 96
      %v2817 = vpop.permute.xlu0 %2816
      %2818 = vrot.lane.b32.xlu0 %v2531, 96
      %v2819 = vpop.permute.xlu0 %2818
      %2836 = vrot.lane.b32.xlu0 %v2516, 112
      %v2837 = vpop.permute.xlu0 %2836
      %2838 = vrot.lane.b32.xlu0 %v2517, 112
      %v2839 = vpop.permute.xlu0 %2838
      %2840 = vrot.lane.b32.xlu0 %v2518, 112
      %v2841 = vpop.permute.xlu0 %2840
      %2842 = vrot.lane.b32.xlu0 %v2519, 112
      %v2843 = vpop.permute.xlu0 %2842
      %2844 = vrot.lane.b32.xlu0 %v2520, 112
      %v2845 = vpop.permute.xlu0 %2844
      %2846 = vrot.lane.b32.xlu0 %v2521, 112
      %v2847 = vpop.permute.xlu0 %2846
      %2848 = vrot.lane.b32.xlu0 %v2522, 112
      %v2849 = vpop.permute.xlu0 %2848
      %2850 = vrot.lane.b32.xlu0 %v2523, 112
      %v2851 = vpop.permute.xlu0 %2850
      %2852 = vrot.lane.b32.xlu0 %v2524, 112
      %v2853 = vpop.permute.xlu0 %2852
      %2854 = vrot.lane.b32.xlu0 %v2525, 112
      %v2855 = vpop.permute.xlu0 %2854
      %2856 = vrot.lane.b32.xlu0 %v2526, 112
      %v2857 = vpop.permute.xlu0 %2856
      %2858 = vrot.lane.b32.xlu0 %v2527, 112
      %v2859 = vpop.permute.xlu0 %2858
      %2860 = vrot.lane.b32.xlu0 %v2528, 112
      %v2861 = vpop.permute.xlu0 %2860
      %2862 = vrot.lane.b32.xlu0 %v2529, 112
      %v2863 = vpop.permute.xlu0 %2862
      %2864 = vrot.lane.b32.xlu0 %v2530, 112
      %v2865 = vpop.permute.xlu0 %2864
      %2866 = vrot.lane.b32.xlu0 %v2531, 112
      %v2867 = vpop.permute.xlu0 %2866
      %v2884 = vsel %vm2118, %v2516, %v2549
      %v2885 = vsel %vm2118, %v2517, %v2551
      %v2886 = vsel %vm2118, %v2518, %v2553
      %v2887 = vsel %vm2118, %v2519, %v2555
      %v2888 = vsel %vm2118, %v2520, %v2557
      %v2889 = vsel %vm2118, %v2521, %v2559
      %v2890 = vsel %vm2118, %v2522, %v2561
      %v2891 = vsel %vm2118, %v2523, %v2563
      %v2892 = vsel %vm2118, %v2524, %v2565
      %v2893 = vsel %vm2118, %v2525, %v2567
      %v2894 = vsel %vm2118, %v2526, %v2569
      %v2895 = vsel %vm2118, %v2527, %v2571
      %v2896 = vsel %vm2118, %v2528, %v2573
      %v2897 = vsel %vm2118, %v2529, %v2575
      %v2898 = vsel %vm2118, %v2530, %v2577
      %v2899 = vsel %vm2118, %v2531, %v2579
      %v2900 = vsel %vm414, %v2884, %v2597
      %v2901 = vsel %vm414, %v2885, %v2599
      %v2902 = vsel %vm414, %v2886, %v2601
      %v2903 = vsel %vm414, %v2887, %v2603
      %v2904 = vsel %vm414, %v2888, %v2605
      %v2905 = vsel %vm414, %v2889, %v2607
      %v2906 = vsel %vm414, %v2890, %v2609
      %v2907 = vsel %vm414, %v2891, %v2611
      %v2908 = vsel %vm414, %v2892, %v2613
      %v2909 = vsel %vm414, %v2893, %v2615
      %v2910 = vsel %vm414, %v2894, %v2617
      %v2911 = vsel %vm414, %v2895, %v2619
      %v2912 = vsel %vm414, %v2896, %v2621
      %v2913 = vsel %vm414, %v2897, %v2623
      %v2914 = vsel %vm414, %v2898, %v2625
      %v2915 = vsel %vm414, %v2899, %v2627
      %vm2916 = vcmask 392192
      %v2917 = vsel %vm2916, %v2900, %v2645
      %v2918 = vsel %vm2916, %v2901, %v2647
      %v2919 = vsel %vm2916, %v2902, %v2649
      %v2920 = vsel %vm2916, %v2903, %v2651
      %v2921 = vsel %vm2916, %v2904, %v2653
      %v2922 = vsel %vm2916, %v2905, %v2655
      %v2923 = vsel %vm2916, %v2906, %v2657
      %v2924 = vsel %vm2916, %v2907, %v2659
      %v2925 = vsel %vm2916, %v2908, %v2661
      %v2926 = vsel %vm2916, %v2909, %v2663
      %v2927 = vsel %vm2916, %v2910, %v2665
      %v2928 = vsel %vm2916, %v2911, %v2667
      %v2929 = vsel %vm2916, %v2912, %v2669
      %v2930 = vsel %vm2916, %v2913, %v2671
      %v2931 = vsel %vm2916, %v2914, %v2673
      %v2932 = vsel %vm2916, %v2915, %v2675
      %v2933 = vsel %vm1079, %v2917, %v2693
      %v2934 = vsel %vm1079, %v2918, %v2695
      %v2935 = vsel %vm1079, %v2919, %v2697
      %v2936 = vsel %vm1079, %v2920, %v2699
      %v2937 = vsel %vm1079, %v2921, %v2701
      %v2938 = vsel %vm1079, %v2922, %v2703
      %v2939 = vsel %vm1079, %v2923, %v2705
      %v2940 = vsel %vm1079, %v2924, %v2707
      %v2941 = vsel %vm1079, %v2925, %v2709
      %v2942 = vsel %vm1079, %v2926, %v2711
      %v2943 = vsel %vm1079, %v2927, %v2713
      %v2944 = vsel %vm1079, %v2928, %v2715
      %v2945 = vsel %vm1079, %v2929, %v2717
      %v2946 = vsel %vm1079, %v2930, %v2719
      %v2947 = vsel %vm1079, %v2931, %v2721
      %v2948 = vsel %vm1079, %v2932, %v2723
      %vm2949 = vcmask 654336
      %v2950 = vsel %vm2949, %v2933, %v2741
      %v2951 = vsel %vm2949, %v2934, %v2743
      %v2952 = vsel %vm2949, %v2935, %v2745
      %v2953 = vsel %vm2949, %v2936, %v2747
      %v2954 = vsel %vm2949, %v2937, %v2749
      %v2955 = vsel %vm2949, %v2938, %v2751
      %v2956 = vsel %vm2949, %v2939, %v2753
      %v2957 = vsel %vm2949, %v2940, %v2755
      %v2958 = vsel %vm2949, %v2941, %v2757
      %v2959 = vsel %vm2949, %v2942, %v2759
      %v2960 = vsel %vm2949, %v2943, %v2761
      %v2961 = vsel %vm2949, %v2944, %v2763
      %v2962 = vsel %vm2949, %v2945, %v2765
      %v2963 = vsel %vm2949, %v2946, %v2767
      %v2964 = vsel %vm2949, %v2947, %v2769
      %v2965 = vsel %vm2949, %v2948, %v2771
      %v2966 = vsel %vm1711, %v2950, %v2789
      %v2967 = vsel %vm1711, %v2951, %v2791
      %v2968 = vsel %vm1711, %v2952, %v2793
      %v2969 = vsel %vm1711, %v2953, %v2795
      %v2970 = vsel %vm1711, %v2954, %v2797
      %v2971 = vsel %vm1711, %v2955, %v2799
      %v2972 = vsel %vm1711, %v2956, %v2801
      %v2973 = vsel %vm1711, %v2957, %v2803
      %v2974 = vsel %vm1711, %v2958, %v2805
      %v2975 = vsel %vm1711, %v2959, %v2807
      %v2976 = vsel %vm1711, %v2960, %v2809
      %v2977 = vsel %vm1711, %v2961, %v2811
      %v2978 = vsel %vm1711, %v2962, %v2813
      %v2979 = vsel %vm1711, %v2963, %v2815
      %v2980 = vsel %vm1711, %v2964, %v2817
      %v2981 = vsel %vm1711, %v2965, %v2819
      %vm2982 = vcmask 916480
      %v2983 = vsel %vm2982, %v2966, %v2837
      %v2984 = vsel %vm2982, %v2967, %v2839
      %v2985 = vsel %vm2982, %v2968, %v2841
      %v2986 = vsel %vm2982, %v2969, %v2843
      %v2987 = vsel %vm2982, %v2970, %v2845
      %v2988 = vsel %vm2982, %v2971, %v2847
      %v2989 = vsel %vm2982, %v2972, %v2849
      %v2990 = vsel %vm2982, %v2973, %v2851
      %v2991 = vsel %vm2982, %v2974, %v2853
      %v2992 = vsel %vm2982, %v2975, %v2855
      %v2993 = vsel %vm2982, %v2976, %v2857
      %v2994 = vsel %vm2982, %v2977, %v2859
      %v2995 = vsel %vm2982, %v2978, %v2861
      %v2996 = vsel %vm2982, %v2979, %v2863
      %v2997 = vsel %vm2982, %v2980, %v2865
      %v2998 = vsel %vm2982, %v2981, %v2867
      %v2999 = vmul.f32 %v1406, %v2983
      %v3000 = vmul.f32 %v1471, %v2983
      %v3001 = vmul.f32 %v1409, %v2984
      %v3002 = vmul.f32 %v1474, %v2984
      %v3003 = vmul.f32 %v1412, %v2985
      %v3004 = vmul.f32 %v1477, %v2985
      %v3005 = vmul.f32 %v1415, %v2986
      %v3006 = vmul.f32 %v1480, %v2986
      %v3007 = vmul.f32 %v1418, %v2987
      %v3008 = vmul.f32 %v1483, %v2987
      %v3009 = vmul.f32 %v1421, %v2988
      %v3010 = vmul.f32 %v1486, %v2988
      %v3011 = vmul.f32 %v1424, %v2989
      %v3012 = vmul.f32 %v1489, %v2989
      %v3013 = vmul.f32 %v1427, %v2990
      %v3014 = vmul.f32 %v1492, %v2990
      %v3015 = vmul.f32 %v1430, %v2991
      %v3016 = vmul.f32 %v1495, %v2991
      %v3017 = vmul.f32 %v1433, %v2992
      %v3018 = vmul.f32 %v1498, %v2992
      %v3019 = vmul.f32 %v1436, %v2993
      %v3020 = vmul.f32 %v1501, %v2993
      %v3021 = vmul.f32 %v1439, %v2994
      %v3022 = vmul.f32 %v1504, %v2994
      %v3023 = vmul.f32 %v1442, %v2995
      %v3024 = vmul.f32 %v1507, %v2995
      %v3025 = vmul.f32 %v1445, %v2996
      %v3026 = vmul.f32 %v1510, %v2996
      %v3027 = vmul.f32 %v1448, %v2997
      %v3028 = vmul.f32 %v1513, %v2997
      %v3029 = vmul.f32 %v1451, %v2998
      %v3030 = vmul.f32 %v1516, %v2998
      %v3031 = vld [vmem:[%s10] sm:$0xff]
      %v3032 = vld [vmem:[%s10 + $0x8] sm:$0xff]
      %v3033 = vld [vmem:[%s10 + $0x10] sm:$0xff]
      %v3034 = vld [vmem:[%s10 + $0x18] sm:$0xff]
      %v3035 = vld [vmem:[%s10 + $0x20] sm:$0xff]
      %v3036 = vld [vmem:[%s10 + $0x28] sm:$0xff]
      %v3037 = vld [vmem:[%s10 + $0x30] sm:$0xff]
      %v3038 = vld [vmem:[%s10 + $0x38] sm:$0xff]
      %v3039 = vld [vmem:[%s10 + $0x40] sm:$0xff]
      %v3040 = vld [vmem:[%s10 + $0x48] sm:$0xff]
      %v3041 = vld [vmem:[%s10 + $0x50] sm:$0xff]
      %v3042 = vld [vmem:[%s10 + $0x58] sm:$0xff]
      %v3043 = vld [vmem:[%s10 + $0x60] sm:$0xff]
      %v3044 = vld [vmem:[%s10 + $0x68] sm:$0xff]
      %v3045 = vld [vmem:[%s10 + $0x70] sm:$0xff]
      %v3046 = vld [vmem:[%s10 + $0x78] sm:$0xff]
      %v3047 = vld [vmem:[%s10 + $0x80] sm:$0xff]
      %v3048 = vld [vmem:[%s10 + $0x88] sm:$0xff]
      %v3049 = vld [vmem:[%s10 + $0x90] sm:$0xff]
      %v3050 = vld [vmem:[%s10 + $0x98] sm:$0xff]
      %v3051 = vld [vmem:[%s10 + $0xa0] sm:$0xff]
      %v3052 = vld [vmem:[%s10 + $0xa8] sm:$0xff]
      %v3053 = vld [vmem:[%s10 + $0xb0] sm:$0xff]
      %v3054 = vld [vmem:[%s10 + $0xb8] sm:$0xff]
      %v3055 = vld [vmem:[%s10 + $0xc0] sm:$0xff]
      %v3056 = vld [vmem:[%s10 + $0xc8] sm:$0xff]
      %v3057 = vld [vmem:[%s10 + $0xd0] sm:$0xff]
      %v3058 = vld [vmem:[%s10 + $0xd8] sm:$0xff]
      %v3059 = vld [vmem:[%s10 + $0xe0] sm:$0xff]
      %v3060 = vld [vmem:[%s10 + $0xe8] sm:$0xff]
      %v3061 = vld [vmem:[%s10 + $0xf0] sm:$0xff]
      %v3062 = vld [vmem:[%s10 + $0xf8] sm:$0xff]
      %3079 = vrot.lane.b32.xlu0 %v1536, 112
      %v3080 = vpop.permute.xlu0 %3079
      %3081 = vrot.lane.b32.xlu0 %v1539, 112
      %v3082 = vpop.permute.xlu0 %3081
      %3083 = vrot.lane.b32.xlu0 %v1542, 112
      %v3084 = vpop.permute.xlu0 %3083
      %3085 = vrot.lane.b32.xlu0 %v1545, 112
      %v3086 = vpop.permute.xlu0 %3085
      %3087 = vrot.lane.b32.xlu0 %v1548, 112
      %v3088 = vpop.permute.xlu0 %3087
      %3089 = vrot.lane.b32.xlu0 %v1551, 112
      %v3090 = vpop.permute.xlu0 %3089
      %3091 = vrot.lane.b32.xlu0 %v1554, 112
      %v3092 = vpop.permute.xlu0 %3091
      %3093 = vrot.lane.b32.xlu0 %v1557, 112
      %v3094 = vpop.permute.xlu0 %3093
      %3095 = vrot.lane.b32.xlu0 %v1560, 112
      %v3096 = vpop.permute.xlu0 %3095
      %3097 = vrot.lane.b32.xlu0 %v1563, 112
      %v3098 = vpop.permute.xlu0 %3097
      %3099 = vrot.lane.b32.xlu0 %v1566, 112
      %v3100 = vpop.permute.xlu0 %3099
      %3101 = vrot.lane.b32.xlu0 %v1569, 112
      %v3102 = vpop.permute.xlu0 %3101
      %3103 = vrot.lane.b32.xlu0 %v1572, 112
      %v3104 = vpop.permute.xlu0 %3103
      %3105 = vrot.lane.b32.xlu0 %v1575, 112
      %v3106 = vpop.permute.xlu0 %3105
      %3107 = vrot.lane.b32.xlu0 %v1578, 112
      %v3108 = vpop.permute.xlu0 %3107
      %3109 = vrot.lane.b32.xlu0 %v1581, 112
      %v3110 = vpop.permute.xlu0 %3109
      %3127 = vmatpush.msra.mxu0 %v3046
      %3128 = vmatpush.msra.mxu0 %v3045
      %3129 = vmatpush.msra.mxu0 %v3044
      %3130 = vmatpush.msra.mxu0 %v3043
      %3131 = vmatpush.msra.mxu0 %v3042
      %3132 = vmatpush.msra.mxu0 %v3041
      %3133 = vmatpush.msra.mxu0 %v3040
      %3134 = vmatpush.msra.mxu0 %v3039
      %3135 = vmatpush.msra.mxu0 %v3038
      %3136 = vmatpush.msra.mxu0 %v3037
      %3137 = vmatpush.msra.mxu0 %v3036
      %3138 = vmatpush.msra.mxu0 %v3035
      %3139 = vmatpush.msra.mxu0 %v3034
      %3140 = vmatpush.msra.mxu0 %v3033
      %3141 = vmatpush.msra.mxu0 %v3032
      %3142 = vmatpush.msra.mxu0 %v3031
      %3143 = vmatmul.f32.gmra.mxu0 %v2999
      %v3144 = vpop.f32.mrf.mxu0
      %v3145 = vadd.f32 %v3080, %v3144
      %3146 = vmatmul.f32.gmra.mxu0 %v3001
      %v3147 = vpop.f32.mrf.mxu0
      %v3148 = vadd.f32 %v3082, %v3147
      %3149 = vmatmul.f32.gmra.mxu0 %v3003
      %v3150 = vpop.f32.mrf.mxu0
      %v3151 = vadd.f32 %v3084, %v3150
      %3152 = vmatmul.f32.gmra.mxu0 %v3005
      %v3153 = vpop.f32.mrf.mxu0
      %v3154 = vadd.f32 %v3086, %v3153
      %3155 = vmatmul.f32.gmra.mxu0 %v3007
      %v3156 = vpop.f32.mrf.mxu0
      %v3157 = vadd.f32 %v3088, %v3156
      %3158 = vmatmul.f32.gmra.mxu0 %v3009
      %v3159 = vpop.f32.mrf.mxu0
      %v3160 = vadd.f32 %v3090, %v3159
      %3161 = vmatmul.f32.gmra.mxu0 %v3011
      %v3162 = vpop.f32.mrf.mxu0
      %v3163 = vadd.f32 %v3092, %v3162
      %3164 = vmatmul.f32.gmra.mxu0 %v3013
      %v3165 = vpop.f32.mrf.mxu0
      %v3166 = vadd.f32 %v3094, %v3165
      %3167 = vmatmul.f32.gmra.mxu0 %v3015
      %v3168 = vpop.f32.mrf.mxu0
      %v3169 = vadd.f32 %v3096, %v3168
      %3170 = vmatmul.f32.gmra.mxu0 %v3017
      %v3171 = vpop.f32.mrf.mxu0
      %v3172 = vadd.f32 %v3098, %v3171
      %3173 = vmatmul.f32.gmra.mxu0 %v3019
      %v3174 = vpop.f32.mrf.mxu0
      %v3175 = vadd.f32 %v3100, %v3174
      %3176 = vmatmul.f32.gmra.mxu0 %v3021
      %v3177 = vpop.f32.mrf.mxu0
      %v3178 = vadd.f32 %v3102, %v3177
      %3179 = vmatmul.f32.gmra.mxu0 %v3023
      %v3180 = vpop.f32.mrf.mxu0
      %v3181 = vadd.f32 %v3104, %v3180
      %3182 = vmatmul.f32.gmra.mxu0 %v3025
      %v3183 = vpop.f32.mrf.mxu0
      %v3184 = vadd.f32 %v3106, %v3183
      %3185 = vmatmul.f32.gmra.mxu0 %v3027
      %v3186 = vpop.f32.mrf.mxu0
      %v3187 = vadd.f32 %v3108, %v3186
      %3188 = vmatmul.f32.gmra.mxu0 %v3029
      %v3189 = vpop.f32.mrf.mxu0
      %v3190 = vadd.f32 %v3110, %v3189
      %3191 = vdwg.mxu0
      %3192 = vmatpush.msra.mxu0 %v3062
      %3193 = vmatpush.msra.mxu0 %v3061
      %3194 = vmatpush.msra.mxu0 %v3060
      %3195 = vmatpush.msra.mxu0 %v3059
      %3196 = vmatpush.msra.mxu0 %v3058
      %3197 = vmatpush.msra.mxu0 %v3057
      %3198 = vmatpush.msra.mxu0 %v3056
      %3199 = vmatpush.msra.mxu0 %v3055
      %3200 = vmatpush.msra.mxu0 %v3054
      %3201 = vmatpush.msra.mxu0 %v3053
      %3202 = vmatpush.msra.mxu0 %v3052
      %3203 = vmatpush.msra.mxu0 %v3051
      %3204 = vmatpush.msra.mxu0 %v3050
      %3205 = vmatpush.msra.mxu0 %v3049
      %3206 = vmatpush.msra.mxu0 %v3048
      %3207 = vmatpush.msra.mxu0 %v3047
      %3208 = vmatmul.f32.gmra.mxu0 %v3000
      %v3209 = vpop.f32.mrf.mxu0
      %v3210 = vadd.f32 %v3145, %v3209
      %3211 = vmatmul.f32.gmra.mxu0 %v3002
      %v3212 = vpop.f32.mrf.mxu0
      %v3213 = vadd.f32 %v3148, %v3212
      %3214 = vmatmul.f32.gmra.mxu0 %v3004
      %v3215 = vpop.f32.mrf.mxu0
      %v3216 = vadd.f32 %v3151, %v3215
      %3217 = vmatmul.f32.gmra.mxu0 %v3006
      %v3218 = vpop.f32.mrf.mxu0
      %v3219 = vadd.f32 %v3154, %v3218
      %3220 = vmatmul.f32.gmra.mxu0 %v3008
      %v3221 = vpop.f32.mrf.mxu0
      %v3222 = vadd.f32 %v3157, %v3221
      %3223 = vmatmul.f32.gmra.mxu0 %v3010
      %v3224 = vpop.f32.mrf.mxu0
      %v3225 = vadd.f32 %v3160, %v3224
      %3226 = vmatmul.f32.gmra.mxu0 %v3012
      %v3227 = vpop.f32.mrf.mxu0
      %v3228 = vadd.f32 %v3163, %v3227
      %3229 = vmatmul.f32.gmra.mxu0 %v3014
      %v3230 = vpop.f32.mrf.mxu0
      %v3231 = vadd.f32 %v3166, %v3230
      %3232 = vmatmul.f32.gmra.mxu0 %v3016
      %v3233 = vpop.f32.mrf.mxu0
      %v3234 = vadd.f32 %v3169, %v3233
      %3235 = vmatmul.f32.gmra.mxu0 %v3018
      %v3236 = vpop.f32.mrf.mxu0
      %v3237 = vadd.f32 %v3172, %v3236
      %3238 = vmatmul.f32.gmra.mxu0 %v3020
      %v3239 = vpop.f32.mrf.mxu0
      %v3240 = vadd.f32 %v3175, %v3239
      %3241 = vmatmul.f32.gmra.mxu0 %v3022
      %v3242 = vpop.f32.mrf.mxu0
      %v3243 = vadd.f32 %v3178, %v3242
      %3244 = vmatmul.f32.gmra.mxu0 %v3024
      %v3245 = vpop.f32.mrf.mxu0
      %v3246 = vadd.f32 %v3181, %v3245
      %3247 = vmatmul.f32.gmra.mxu0 %v3026
      %v3248 = vpop.f32.mrf.mxu0
      %v3249 = vadd.f32 %v3184, %v3248
      %3250 = vmatmul.f32.gmra.mxu0 %v3028
      %v3251 = vpop.f32.mrf.mxu0
      %v3252 = vadd.f32 %v3187, %v3251
      %3253 = vmatmul.f32.gmra.mxu0 %v3030
      %v3254 = vpop.f32.mrf.mxu0
      %v3255 = vadd.f32 %v3190, %v3254
      %3256 = vdwg.mxu0
      %3257 = vst.msk [vmem:[%s388] sm:$0xff] %vm2118, %v3210
      %3258 = vst.msk [vmem:[%s388 + $0x8] sm:$0xff] %vm2118, %v3213
      %3259 = vst.msk [vmem:[%s388 + $0x10] sm:$0xff] %vm2118, %v3216
      %3260 = vst.msk [vmem:[%s388 + $0x18] sm:$0xff] %vm2118, %v3219
      %3261 = vst.msk [vmem:[%s388 + $0x20] sm:$0xff] %vm2118, %v3222
      %3262 = vst.msk [vmem:[%s388 + $0x28] sm:$0xff] %vm2118, %v3225
      %3263 = vst.msk [vmem:[%s388 + $0x30] sm:$0xff] %vm2118, %v3228
      %3264 = vst.msk [vmem:[%s388 + $0x38] sm:$0xff] %vm2118, %v3231
      %3265 = vst.msk [vmem:[%s388 + $0x40] sm:$0xff] %vm2118, %v3234
      %3266 = vst.msk [vmem:[%s388 + $0x48] sm:$0xff] %vm2118, %v3237
      %3267 = vst.msk [vmem:[%s388 + $0x50] sm:$0xff] %vm2118, %v3240
      %3268 = vst.msk [vmem:[%s388 + $0x58] sm:$0xff] %vm2118, %v3243
      %3269 = vst.msk [vmem:[%s388 + $0x60] sm:$0xff] %vm2118, %v3246
      %3270 = vst.msk [vmem:[%s388 + $0x68] sm:$0xff] %vm2118, %v3249
      %3271 = vst.msk [vmem:[%s388 + $0x70] sm:$0xff] %vm2118, %v3252
      %3272 = vst.msk [vmem:[%s388 + $0x78] sm:$0xff] %vm2118, %v3255
      %s3273 = smul.u32 16, %s22
      %p3274 = scmp.lt.s32.totalorder %s3273, 63
      %s3275 = scalar_select %p3274, %s3273, 63
      %s3276 = smul.addr %s3275, 8
      %s3277 = scalar_lea.vmem %s11, %s3276
      // Predicated region
      $region65: #{tpu_custom_call.1} parent=63 // pred_check
        %p3278 = pneg %p276
      $region66: #{tpu_custom_call.1} parent=63 // pred_check_branch
        %3280 = sbr.rel (%p3278) target = $region68
      $region67: #{tpu_custom_call.1} parent=63 // pred_region
        %s3281 = smul.u32 16, %s22
      $region68: #{tpu_custom_call.1} parent=63 // pred_fallthru
        _
    $region64: #{tpu_custom_call.1} parent=5 // pred_fallthru
      _
    %p3282 = scmp.le.s32.totalorder 2, %s17
    // Predicated region
    $region69: #{tpu_custom_call.1} parent=5 // pred_check
      %p3283 = pneg %p3282
    $region70: #{tpu_custom_call.1} parent=5 // pred_check_branch
      %3285 = sbr.rel (%p3283) target = $region72
    $region71: #{tpu_custom_call.1} parent=5 // pred_region
      %s3286 = ssub.s32 %s17, 2
      // Predicated region
      $region73: #{tpu_custom_call.1} parent=71 // pred_check
        %p3287 = pneg %p282
      $region74: #{tpu_custom_call.1} parent=71 // pred_check_branch
        %3289 = sbr.rel (%p3287) target = $region76
      $region75: #{tpu_custom_call.1} parent=71 // pred_region
        %s3290 = smul.u32 16, %s23
        %p3291 = scmp.lt.s32.totalorder %s3290, 63
        %s3292 = scalar_select %p3291, %s3290, 63
        %s3293 = smul.addr %s3292, 8
        %s3294 = scalar_lea.vmem %s11, %s3293
      $region76: #{tpu_custom_call.1} parent=71 // pred_fallthru
        _
    $region72: #{tpu_custom_call.1} parent=5 // pred_fallthru
      _
  $region6: #{tpu_custom_call.1} parent=0 // loop_footer
    %s21 = sadd.s32 1, %s17
  $region7: #{tpu_custom_call.1} parent=0 // loop_footer_branch
    %16 = sbr.rel target = $region3
  $region8: #{tpu_custom_call.1} parent=0 // loop_exit
    _

</llo_original>
